<compile_context>
chip_gen: v7x
topology: tpu7x:2x2x1
jax: 0.10.0
libtpu: 0.0.40
codegen_flags: <defaults>
</compile_context>

<pallas_src>
import math
from functools import partial

import jax
import jax.numpy as jnp
from jax import lax
from jax.experimental import pallas as pl
from jax.experimental.pallas import tpu as pltpu


# ------------------------------- kernel ------------------------------------

def fused_turn_lstm_kernel(*refs, hidden, seq_len, num_layers):
    """Entire TurnLevelLSTM forward for one sequence (batch == 1).

    refs = [x,
            (wih, whh_blockdiag, bias) * num_layers,
            w_lin, b_lin,                 # inputs
            out,                          # output
            xg_scratch, y_scratch]        # VMEM scratch
    """
    H = hidden
    T = seq_len

    x_ref = refs[0]
    nlw = 3 * num_layers
    layer_refs = refs[1:1 + nlw]
    wlin_ref = refs[1 + nlw]
    blin_ref = refs[2 + nlw]
    out_ref = refs[3 + nlw]
    xg_ref = refs[4 + nlw]      # (T, 8H) f32: fused input->gate projections
    y_ref = refs[5 + nlw]       # (T, 2H) f32: [fwd | bwd] hidden sequence of a layer

    # Within every 2H-wide gate block the first H lanes are the forward direction
    # (gate inputs come from xg row t), the last H are backward (row T-1-t).
    lane = lax.broadcasted_iota(jnp.int32, (1, 8 * H), 1)
    fwd_mask = (lane % (2 * H)) < H

    unroll = True if T <= 16 else 4   # unrolling can't break the serial dependence

    def run_layer(src_ref, wih_ref, whh_ref, bias_ref):
        # Input->gate projection for BOTH directions and ALL timesteps in one MXU
        # matmul (bf16 operands, f32 accumulation).  For layers >= 1 src_ref is the
        # y scratch: it is fully consumed here before the recurrence overwrites it,
        # so a single scratch buffer is safe.
        xg_ref[...] = (
            jnp.dot(src_ref[...].astype(jnp.bfloat16), wih_ref[...],
                    preferred_element_type=jnp.float32)
            + bias_ref[...])

        whh = whh_ref[...]          # (2H, 8H) block-diagonal, bf16

        def body(t, carry):
            h, c = carry            # each (1, 2H) f32 = [fwd | bwd]
            tb = T - 1 - t
            # Assemble fused gate inputs: fwd lanes from row t, bwd lanes from row tb.
            gx = jnp.where(fwd_mask,
                           xg_ref[pl.ds(t, 1), :],
                           xg_ref[pl.ds(tb, 1), :])
            # One recurrent MXU push for both directions.
            gates = gx + jnp.dot(h.astype(jnp.bfloat16), whh,
                                 preferred_element_type=jnp.float32)
            # Two full-vector nonlinearity passes; each gate is a contiguous slice.
            sig = jax.nn.sigmoid(gates)
            tnh = jnp.tanh(gates)
            i = sig[:, 0:2 * H]
            f = sig[:, 2 * H:4 * H]
            g = tnh[:, 4 * H:6 * H]
            o = sig[:, 6 * H:8 * H]
            c = f * c + i * g
            h = o * jnp.tanh(c)
            # Write fwd half to row t, bwd half to row T-1-t (this IS the dir concat).
            y_ref[pl.ds(t, 1), 0:H] = h[:, 0:H]
            y_ref[pl.ds(tb, 1), H:2 * H] = h[:, H:2 * H]
            return h, c

        zeros = jnp.zeros((1, 2 * H), jnp.float32)
        lax.fori_loop(0, T, body, (zeros, zeros), unroll=unroll)

    # layer 0 reads x; later layers read the y scratch directly (no concat, no HBM).
    run_layer(x_ref, layer_refs[0], layer_refs[1], layer_refs[2])
    for l in range(1, num_layers):
        run_layer(y_ref, layer_refs[3 * l], layer_refs[3 * l + 1], layer_refs[3 * l + 2])

    # Final 2H -> H projection while y is still resident in VMEM.
    # (nn.Dropout is identity in eval; lstm_out[0].squeeze(0) handled in the wrapper.)
    out_ref[...] = (
        jnp.dot(y_ref[...].astype(jnp.bfloat16), wlin_ref[...],
                preferred_element_type=jnp.float32)
        + blin_ref[...]).astype(out_ref.dtype)


# ------------------------------- wrapper ------------------------------------

_VMEM = pl.BlockSpec(memory_space=pltpu.MemorySpace.VMEM)


def turn_level_lstm_pallas(inputs, params):
    """Forward of TurnLevelLSTM.

    inputs: (T, B, H) seq-first (nn.LSTM batch_first=False); B must be 1.
    returns (T, B, H) if T > 1 else (B, H), mirroring lstm_out[0].squeeze(0) + Linear.
    """
    T, B, H = inputs.shape
    assert B == 1, "turn-level LSTM is used with batch size 1"
    x = inputs.reshape(T, H).astype(jnp.float32)

    layers = params["layers"]
    num_layers = len(layers)

    operands = [x]
    for lp in layers:
        operands += [lp["wih"], lp["whh"], lp["bias"]]
    operands += [params["w_lin"], params["b_lin"]]

    scratch = [pltpu.VMEM((T, 8 * H), jnp.float32),   # fused input->gate projections
               pltpu.VMEM((T, 2 * H), jnp.float32)]   # per-layer [fwd|bwd] hidden seq

    # Size the VMEM limit from the actual buffers (single-buffered, no grid) + margin.
    tot = sum(int(op.size) * jnp.dtype(op.dtype).itemsize for op in operands)
    tot += T * H * 4                       # output
    tot += T * 8 * H * 4 + T * 2 * H * 4   # scratch
    vmem_limit = int(min(100 << 20, max(8 << 20, 2 * tot)))

    kernel = partial(fused_turn_lstm_kernel, hidden=H, seq_len=T,
                     num_layers=num_layers)
    out2d = pl.pallas_call(
        kernel,
        out_shape=jax.ShapeDtypeStruct((T, H), jnp.float32),
        in_specs=[_VMEM] * len(operands),
        out_specs=_VMEM,
        scratch_shapes=scratch,
        compiler_params=pltpu.CompilerParams(vmem_limit_bytes=vmem_limit),
    )(*operands)

    if T == 1:
        return out2d                 # squeezed case: (B, H)
    return out2d.reshape(T, B, H)


# --------------------------- parameter packing -------------------------------

def _uniform(key, shape, k):
    return jax.random.uniform(key, shape, jnp.float32, -k, k)


def _interleave_gates(w_f, w_b, H):
    """(in, 4H) fwd + (in, 4H) bwd (PyTorch gate order i,f,g,o along columns)
    -> (in, 8H) with columns [i_f i_b | f_f f_b | g_f g_b | o_f o_b]."""
    in_size = w_f.shape[0]
    wf = w_f.reshape(in_size, 4, H)
    wb = w_b.reshape(in_size, 4, H)
    return jnp.stack([wf, wb], axis=2).reshape(in_size, 8 * H)


def _blockdiag_hh(whh_f_t, whh_b_t, H):
    """(H,4H) fwd + (H,4H) bwd recurrent weights -> block-diagonal (2H, 8H) so that
    [h_f | h_b] @ W produces fwd gates in fwd columns and bwd gates in bwd columns."""
    top = _interleave_gates(whh_f_t, jnp.zeros_like(whh_f_t), H)
    bot = _interleave_gates(jnp.zeros_like(whh_b_t), whh_b_t, H)
    return jnp.concatenate([top, bot], axis=0)


def init_raw_params(key, hidden, num_layers):
    """nn.LSTM / nn.Linear-equivalent params in PyTorch layout, f32."""
    H = hidden
    k = 1.0 / math.sqrt(H)
    raw_layers = []
    for l in range(num_layers):
        in_size = H if l == 0 else 2 * H
        key, *ks = jax.random.split(key, 9)
        raw_layers.append({
            "wih_f": _uniform(ks[0], (4 * H, in_size), k),
            "whh_f": _uniform(ks[1], (4 * H, H), k),
            "bih_f": _uniform(ks[2], (4 * H,), k),
            "bhh_f": _uniform(ks[3], (4 * H,), k),
            "wih_b": _uniform(ks[4], (4 * H, in_size), k),
            "whh_b": _uniform(ks[5], (4 * H, H), k),
            "bih_b": _uniform(ks[6], (4 * H,), k),
            "bhh_b": _uniform(ks[7], (4 * H,), k),
        })
    key, kw, kb = jax.random.split(key, 3)
    kl = 1.0 / math.sqrt(2 * H)
    raw_lin = {"w": _uniform(kw, (H, 2 * H), kl), "b": _uniform(kb, (H,), kl)}
    return raw_layers, raw_lin


def pack_params(raw_layers, raw_lin, H):
    """Pack PyTorch-layout params into the fused kernel layout (bf16 MXU weights)."""
    layers = []
    for raw in raw_layers:
        wih = _interleave_gates(raw["wih_f"].T, raw["wih_b"].T, H).astype(jnp.bfloat16)
        whh = _blockdiag_hh(raw["whh_f"].T, raw["whh_b"].T, H).astype(jnp.bfloat16)
        bias = _interleave_gates((raw["bih_f"] + raw["bhh_f"]).reshape(1, 4 * H),
                                 (raw["bih_b"] + raw["bhh_b"]).reshape(1, 4 * H), H)
        layers.append({"wih": wih, "whh": whh, "bias": bias})
    return {
        "layers": layers,
        "w_lin": raw_lin["w"].T.astype(jnp.bfloat16),   # (2H, H): consumes [fwd|bwd]
        "b_lin": raw_lin["b"].reshape(1, H),
    }


# --------------------------- pure-JAX reference -------------------------------
# Mirrors the kernel numerics (bf16 operands at MXU boundaries, f32 accumulation),
# but computed direction-by-direction straight from the PyTorch-layout weights.

def turn_level_lstm_ref(inputs, raw_layers, raw_lin):
    T, B, H = inputs.shape
    x = inputs.reshape(T, H).astype(jnp.float32)

    def run_dir(x, w_ih, w_hh, b_ih, b_hh, reverse):
        wih_t = w_ih.T.astype(jnp.bfloat16)
        whh_t = w_hh.T.astype(jnp.bfloat16)
        bias = (b_ih + b_hh).reshape(1, 4 * H)
        xg = jnp.dot(x.astype(jnp.bfloat16), wih_t,
                     preferred_element_type=jnp.float32) + bias
        h = c = jnp.zeros((1, H), jnp.float32)
        outs = [None] * T
        order = range(T - 1, -1, -1) if reverse else range(T)
        for t in order:
            gates = xg[t:t + 1] + jnp.dot(h.astype(jnp.bfloat16), whh_t,
                                          preferred_element_type=jnp.float32)
            i = jax.nn.sigmoid(gates[:, 0 * H:1 * H])
            f = jax.nn.sigmoid(gates[:, 1 * H:2 * H])
            g = jnp.tanh(gates[:, 2 * H:3 * H])
            o = jax.nn.sigmoid(gates[:, 3 * H:4 * H])
            c = f * c + i * g
            h = o * jnp.tanh(c)
            outs[t] = h
        return jnp.concatenate(outs, axis=0)

    for raw in raw_layers:
        yf = run_dir(x, raw["wih_f"], raw["whh_f"], raw["bih_f"], raw["bhh_f"], False)
        yb = run_dir(x, raw["wih_b"], raw["whh_b"], raw["bih_b"], raw["bhh_b"], True)
        x = jnp.concatenate([yf, yb], axis=-1)          # (T, 2H)

    out = (jnp.dot(x.astype(jnp.bfloat16), raw_lin["w"].T.astype(jnp.bfloat16),
                   preferred_element_type=jnp.float32)
           + raw_lin["b"].reshape(1, H))
    if T == 1:
        return out
    return out.reshape(T, B, H)


# --------------------------------- main ---------------------------------------

if __name__ == "__main__":
    # small synthetic config: 8 turns, batch 1, hidden 32, 2 bidirectional layers
    T, B, H = 8, 1, 32
    num_layers = 2

    key = jax.random.PRNGKey(0)
    k_in, k_p = jax.random.split(key)
    inputs = jax.random.normal(k_in, (T, B, H), jnp.float32)
    raw_layers, raw_lin = init_raw_params(k_p, H, num_layers)
    params = pack_params(raw_layers, raw_lin, H)

    out = turn_level_lstm_pallas(inputs, params)
    out = jax.block_until_ready(out)

    ref = turn_level_lstm_ref(inputs, raw_layers, raw_lin)
    assert out.shape == ref.shape, (out.shape, ref.shape)
    max_diff = float(jnp.max(jnp.abs(out - ref)))
    assert jnp.allclose(out, ref, atol=2e-3, rtol=2e-3), f"mismatch vs reference: {max_diff}"

    print("KERNEL_OK")
</pallas_src>

<mosaic_0001>
module attributes {stable_mosaic.version = 11 : i64} {
  func.func @fused_turn_lstm_kernel(%arg0: memref<8x32xf32, #tpu.memory_space<vmem>>, %arg1: memref<32x256xbf16, #tpu.memory_space<vmem>>, %arg2: memref<64x256xbf16, #tpu.memory_space<vmem>>, %arg3: memref<1x256xf32, #tpu.memory_space<vmem>>, %arg4: memref<64x256xbf16, #tpu.memory_space<vmem>>, %arg5: memref<64x256xbf16, #tpu.memory_space<vmem>>, %arg6: memref<1x256xf32, #tpu.memory_space<vmem>>, %arg7: memref<64x32xbf16, #tpu.memory_space<vmem>>, %arg8: memref<1x32xf32, #tpu.memory_space<vmem>>, %arg9: memref<8x32xf32, #tpu.memory_space<vmem>>, %arg10: memref<8x256xf32, #tpu.memory_space<vmem>>, %arg11: memref<8x64xf32, #tpu.memory_space<vmem>>) attributes {dimension_semantics = [], scalar_prefetch = 0 : i64, scratch_operands = 2 : i64, tpu.core_type = #tpu.core_type<tc>} {
    %0 = tpu.iota {dimensions = array<i32: 1>} : vector<1x256xi32>
    %c64_i32 = arith.constant 64 : i32
    %c0_i32 = arith.constant 0 : i32
    %1 = arith.cmpi eq, %c64_i32, %c0_i32 : i32
    %c1_i32 = arith.constant 1 : i32
    %2 = arith.select %1, %c1_i32, %c64_i32 : i32
    %3 = vector.broadcast %2 : i32 to vector<1x256xi32>
    %4 = arith.remsi %0, %3 : vector<1x256xi32>
    %c0_i32_0 = arith.constant 0 : i32
    %5 = vector.broadcast %c0_i32_0 : i32 to vector<1x256xi32>
    %6 = arith.cmpi ne, %4, %5 : vector<1x256xi32>
    %c0_i32_1 = arith.constant 0 : i32
    %7 = vector.broadcast %c0_i32_1 : i32 to vector<1x256xi32>
    %8 = arith.cmpi slt, %4, %7 : vector<1x256xi32>
    %c0_i32_2 = arith.constant 0 : i32
    %9 = arith.cmpi slt, %2, %c0_i32_2 : i32
    %10 = vector.broadcast %9 : i1 to vector<1x256xi1>
    %11 = vector.broadcast %10 : vector<1x256xi1> to vector<1x256xi1>
    %12 = arith.xori %8, %11 : vector<1x256xi1>
    %13 = arith.andi %12, %6 : vector<1x256xi1>
    %14 = vector.broadcast %2 : i32 to vector<1x256xi32>
    %15 = arith.addi %4, %14 : vector<1x256xi32>
    %16 = arith.select %13, %15, %4 : vector<1x256xi1>, vector<1x256xi32>
    %c32_i32 = arith.constant 32 : i32
    %17 = vector.broadcast %c32_i32 : i32 to vector<1x256xi32>
    %18 = arith.cmpi slt, %16, %17 : vector<1x256xi32>
    %c0 = arith.constant 0 : index
    %c0_3 = arith.constant 0 : index
    %19 = vector.load %arg0[%c0, %c0_3] : memref<8x32xf32, #tpu.memory_space<vmem>>, vector<8x32xf32>
    %20 = arith.truncf %19 : vector<8x32xf32> to vector<8x32xbf16>
    %c0_4 = arith.constant 0 : index
    %c0_5 = arith.constant 0 : index
    %21 = vector.load %arg1[%c0_4, %c0_5] : memref<32x256xbf16, #tpu.memory_space<vmem>>, vector<32x256xbf16>
    %cst = arith.constant dense<0.000000e+00> : vector<8x256xf32>
    %22 = tpu.matmul %20, %21, %cst {dimension_numbers = #tpu.dot_dimension_numbers<[1], [0], [0], [1], [0, 0, 1, 1], [], []>} : vector<8x32xbf16>, vector<32x256xbf16>, vector<8x256xf32> -> vector<8x256xf32>
    %c0_6 = arith.constant 0 : index
    %c0_7 = arith.constant 0 : index
    %23 = vector.load %arg3[%c0_6, %c0_7] : memref<1x256xf32, #tpu.memory_space<vmem>>, vector<1x256xf32>
    %24 = vector.broadcast %23 : vector<1x256xf32> to vector<8x256xf32>
    %25 = arith.addf %22, %24 : vector<8x256xf32>
    %c0_8 = arith.constant 0 : index
    %c0_9 = arith.constant 0 : index
    %26 = vector.load %arg10[%c0_8, %c0_9] : memref<8x256xf32, #tpu.memory_space<vmem>>, vector<8x256xf32>
    tpu.vector_store %arg10[%c0_8, %c0_9], %25 {strides = array<i32>} : memref<8x256xf32, #tpu.memory_space<vmem>>, vector<8x256xf32>,
    %c0_10 = arith.constant 0 : index
    %c0_11 = arith.constant 0 : index
    %27 = vector.load %arg2[%c0_10, %c0_11] : memref<64x256xbf16, #tpu.memory_space<vmem>>, vector<64x256xbf16>
    %cst_12 = arith.constant 0.000000e+00 : f32
    %28 = vector.broadcast %cst_12 : f32 to vector<1x64xf32>
    %c0_i32_13 = arith.constant 0 : i32
    %c7_i32 = arith.constant 7 : i32
    %29 = arith.subi %c7_i32, %c0_i32_13 : i32
    %30 = arith.index_cast %c0_i32_13 : i32 to index
    %c0_14 = arith.constant 0 : index
    %31 = vector.load %arg10[%30, %c0_14] : memref<8x256xf32, #tpu.memory_space<vmem>>, vector<1x256xf32>
    %32 = arith.index_cast %29 : i32 to index
    %c0_15 = arith.constant 0 : index
    %33 = vector.load %arg10[%32, %c0_15] : memref<8x256xf32, #tpu.memory_space<vmem>>, vector<1x256xf32>
    %34 = arith.select %18, %31, %33 : vector<1x256xi1>, vector<1x256xf32>
    %35 = arith.truncf %28 : vector<1x64xf32> to vector<1x64xbf16>
    %cst_16 = arith.constant dense<0.000000e+00> : vector<1x256xf32>
    %36 = tpu.matmul %35, %27, %cst_16 {dimension_numbers = #tpu.dot_dimension_numbers<[1], [0], [0], [1], [0, 0, 1, 1], [], []>} : vector<1x64xbf16>, vector<64x256xbf16>, vector<1x256xf32> -> vector<1x256xf32>
    %37 = arith.addf %34, %36 : vector<1x256xf32>
    %38 = arith.negf %37 : vector<1x256xf32>
    %39 = math.exp %38 : vector<1x256xf32>
    %cst_17 = arith.constant 1.000000e+00 : f32
    %40 = vector.broadcast %cst_17 : f32 to vector<1x256xf32>
    %41 = arith.addf %40, %39 : vector<1x256xf32>
    %42 = arith.divf %40, %41 : vector<1x256xf32>
    %43 = math.tanh %37 : vector<1x256xf32>
    %44 = vector.extract_strided_slice %42 {offsets = [0, 0], sizes = [1, 64], strides = [1, 1]} : vector<1x256xf32> to vector<1x64xf32>
    %45 = vector.extract_strided_slice %42 {offsets = [0, 64], sizes = [1, 64], strides = [1, 1]} : vector<1x256xf32> to vector<1x64xf32>
    %46 = vector.extract_strided_slice %43 {offsets = [0, 128], sizes = [1, 64], strides = [1, 1]} : vector<1x256xf32> to vector<1x64xf32>
    %47 = vector.extract_strided_slice %42 {offsets = [0, 192], sizes = [1, 64], strides = [1, 1]} : vector<1x256xf32> to vector<1x64xf32>
    %48 = arith.mulf %45, %28 : vector<1x64xf32>
    %49 = arith.mulf %44, %46 : vector<1x64xf32>
    %50 = arith.addf %48, %49 : vector<1x64xf32>
    %51 = math.tanh %50 : vector<1x64xf32>
    %52 = arith.mulf %47, %51 : vector<1x64xf32>
    %53 = vector.extract_strided_slice %52 {offsets = [0, 0], sizes = [1, 32], strides = [1, 1]} : vector<1x64xf32> to vector<1x32xf32>
    %54 = arith.index_cast %c0_i32_13 : i32 to index
    %c0_18 = arith.constant 0 : index
    %55 = vector.load %arg11[%54, %c0_18] : memref<8x64xf32, #tpu.memory_space<vmem>>, vector<1x32xf32>
    tpu.vector_store %arg11[%54, %c0_18], %53 {strides = array<i32>} : memref<8x64xf32, #tpu.memory_space<vmem>>, vector<1x32xf32>,
    %56 = vector.extract_strided_slice %52 {offsets = [0, 32], sizes = [1, 32], strides = [1, 1]} : vector<1x64xf32> to vector<1x32xf32>
    %57 = arith.index_cast %29 : i32 to index
    %c32 = arith.constant 32 : index
    %58 = vector.load %arg11[%57, %c32] : memref<8x64xf32, #tpu.memory_space<vmem>>, vector<1x32xf32>
    tpu.vector_store %arg11[%57, %c32], %56 {strides = array<i32>} : memref<8x64xf32, #tpu.memory_space<vmem>>, vector<1x32xf32>,
    %c1_i32_19 = arith.constant 1 : i32
    %c7_i32_20 = arith.constant 7 : i32
    %59 = arith.subi %c7_i32_20, %c1_i32_19 : i32
    %60 = arith.index_cast %c1_i32_19 : i32 to index
    %c0_21 = arith.constant 0 : index
    %61 = vector.load %arg10[%60, %c0_21] : memref<8x256xf32, #tpu.memory_space<vmem>>, vector<1x256xf32>
    %62 = arith.index_cast %59 : i32 to index
    %c0_22 = arith.constant 0 : index
    %63 = vector.load %arg10[%62, %c0_22] : memref<8x256xf32, #tpu.memory_space<vmem>>, vector<1x256xf32>
    %64 = arith.select %18, %61, %63 : vector<1x256xi1>, vector<1x256xf32>
    %65 = arith.truncf %52 : vector<1x64xf32> to vector<1x64xbf16>
    %cst_23 = arith.constant dense<0.000000e+00> : vector<1x256xf32>
    %66 = tpu.matmul %65, %27, %cst_23 {dimension_numbers = #tpu.dot_dimension_numbers<[1], [0], [0], [1], [0, 0, 1, 1], [], []>} : vector<1x64xbf16>, vector<64x256xbf16>, vector<1x256xf32> -> vector<1x256xf32>
    %67 = arith.addf %64, %66 : vector<1x256xf32>
    %68 = arith.negf %67 : vector<1x256xf32>
    %69 = math.exp %68 : vector<1x256xf32>
    %cst_24 = arith.constant 1.000000e+00 : f32
    %70 = vector.broadcast %cst_24 : f32 to vector<1x256xf32>
    %71 = arith.addf %70, %69 : vector<1x256xf32>
    %72 = arith.divf %70, %71 : vector<1x256xf32>
    %73 = math.tanh %67 : vector<1x256xf32>
    %74 = vector.extract_strided_slice %72 {offsets = [0, 0], sizes = [1, 64], strides = [1, 1]} : vector<1x256xf32> to vector<1x64xf32>
    %75 = vector.extract_strided_slice %72 {offsets = [0, 64], sizes = [1, 64], strides = [1, 1]} : vector<1x256xf32> to vector<1x64xf32>
    %76 = vector.extract_strided_slice %73 {offsets = [0, 128], sizes = [1, 64], strides = [1, 1]} : vector<1x256xf32> to vector<1x64xf32>
    %77 = vector.extract_strided_slice %72 {offsets = [0, 192], sizes = [1, 64], strides = [1, 1]} : vector<1x256xf32> to vector<1x64xf32>
    %78 = arith.mulf %75, %50 : vector<1x64xf32>
    %79 = arith.mulf %74, %76 : vector<1x64xf32>
    %80 = arith.addf %78, %79 : vector<1x64xf32>
    %81 = math.tanh %80 : vector<1x64xf32>
    %82 = arith.mulf %77, %81 : vector<1x64xf32>
    %83 = vector.extract_strided_slice %82 {offsets = [0, 0], sizes = [1, 32], strides = [1, 1]} : vector<1x64xf32> to vector<1x32xf32>
    %84 = arith.index_cast %c1_i32_19 : i32 to index
    %c0_25 = arith.constant 0 : index
    %85 = vector.load %arg11[%84, %c0_25] : memref<8x64xf32, #tpu.memory_space<vmem>>, vector<1x32xf32>
    tpu.vector_store %arg11[%84, %c0_25], %83 {strides = array<i32>} : memref<8x64xf32, #tpu.memory_space<vmem>>, vector<1x32xf32>,
    %86 = vector.extract_strided_slice %82 {offsets = [0, 32], sizes = [1, 32], strides = [1, 1]} : vector<1x64xf32> to vector<1x32xf32>
    %87 = arith.index_cast %59 : i32 to index
    %c32_26 = arith.constant 32 : index
    %88 = vector.load %arg11[%87, %c32_26] : memref<8x64xf32, #tpu.memory_space<vmem>>, vector<1x32xf32>
    tpu.vector_store %arg11[%87, %c32_26], %86 {strides = array<i32>} : memref<8x64xf32, #tpu.memory_space<vmem>>, vector<1x32xf32>,
    %c2_i32 = arith.constant 2 : i32
    %c7_i32_27 = arith.constant 7 : i32
    %89 = arith.subi %c7_i32_27, %c2_i32 : i32
    %90 = arith.index_cast %c2_i32 : i32 to index
    %c0_28 = arith.constant 0 : index
    %91 = vector.load %arg10[%90, %c0_28] : memref<8x256xf32, #tpu.memory_space<vmem>>, vector<1x256xf32>
    %92 = arith.index_cast %89 : i32 to index
    %c0_29 = arith.constant 0 : index
    %93 = vector.load %arg10[%92, %c0_29] : memref<8x256xf32, #tpu.memory_space<vmem>>, vector<1x256xf32>
    %94 = arith.select %18, %91, %93 : vector<1x256xi1>, vector<1x256xf32>
    %95 = arith.truncf %82 : vector<1x64xf32> to vector<1x64xbf16>
    %cst_30 = arith.constant dense<0.000000e+00> : vector<1x256xf32>
    %96 = tpu.matmul %95, %27, %cst_30 {dimension_numbers = #tpu.dot_dimension_numbers<[1], [0], [0], [1], [0, 0, 1, 1], [], []>} : vector<1x64xbf16>, vector<64x256xbf16>, vector<1x256xf32> -> vector<1x256xf32>
    %97 = arith.addf %94, %96 : vector<1x256xf32>
    %98 = arith.negf %97 : vector<1x256xf32>
    %99 = math.exp %98 : vector<1x256xf32>
    %cst_31 = arith.constant 1.000000e+00 : f32
    %100 = vector.broadcast %cst_31 : f32 to vector<1x256xf32>
    %101 = arith.addf %100, %99 : vector<1x256xf32>
    %102 = arith.divf %100, %101 : vector<1x256xf32>
    %103 = math.tanh %97 : vector<1x256xf32>
    %104 = vector.extract_strided_slice %102 {offsets = [0, 0], sizes = [1, 64], strides = [1, 1]} : vector<1x256xf32> to vector<1x64xf32>
    %105 = vector.extract_strided_slice %102 {offsets = [0, 64], sizes = [1, 64], strides = [1, 1]} : vector<1x256xf32> to vector<1x64xf32>
    %106 = vector.extract_strided_slice %103 {offsets = [0, 128], sizes = [1, 64], strides = [1, 1]} : vector<1x256xf32> to vector<1x64xf32>
    %107 = vector.extract_strided_slice %102 {offsets = [0, 192], sizes = [1, 64], strides = [1, 1]} : vector<1x256xf32> to vector<1x64xf32>
    %108 = arith.mulf %105, %80 : vector<1x64xf32>
    %109 = arith.mulf %104, %106 : vector<1x64xf32>
    %110 = arith.addf %108, %109 : vector<1x64xf32>
    %111 = math.tanh %110 : vector<1x64xf32>
    %112 = arith.mulf %107, %111 : vector<1x64xf32>
    %113 = vector.extract_strided_slice %112 {offsets = [0, 0], sizes = [1, 32], strides = [1, 1]} : vector<1x64xf32> to vector<1x32xf32>
    %114 = arith.index_cast %c2_i32 : i32 to index
    %c0_32 = arith.constant 0 : index
    %115 = vector.load %arg11[%114, %c0_32] : memref<8x64xf32, #tpu.memory_space<vmem>>, vector<1x32xf32>
    tpu.vector_store %arg11[%114, %c0_32], %113 {strides = array<i32>} : memref<8x64xf32, #tpu.memory_space<vmem>>, vector<1x32xf32>,
    %116 = vector.extract_strided_slice %112 {offsets = [0, 32], sizes = [1, 32], strides = [1, 1]} : vector<1x64xf32> to vector<1x32xf32>
    %117 = arith.index_cast %89 : i32 to index
    %c32_33 = arith.constant 32 : index
    %118 = vector.load %arg11[%117, %c32_33] : memref<8x64xf32, #tpu.memory_space<vmem>>, vector<1x32xf32>
    tpu.vector_store %arg11[%117, %c32_33], %116 {strides = array<i32>} : memref<8x64xf32, #tpu.memory_space<vmem>>, vector<1x32xf32>,
    %c3_i32 = arith.constant 3 : i32
    %c7_i32_34 = arith.constant 7 : i32
    %119 = arith.subi %c7_i32_34, %c3_i32 : i32
    %120 = arith.index_cast %c3_i32 : i32 to index
    %c0_35 = arith.constant 0 : index
    %121 = vector.load %arg10[%120, %c0_35] : memref<8x256xf32, #tpu.memory_space<vmem>>, vector<1x256xf32>
    %122 = arith.index_cast %119 : i32 to index
    %c0_36 = arith.constant 0 : index
    %123 = vector.load %arg10[%122, %c0_36] : memref<8x256xf32, #tpu.memory_space<vmem>>, vector<1x256xf32>
    %124 = arith.select %18, %121, %123 : vector<1x256xi1>, vector<1x256xf32>
    %125 = arith.truncf %112 : vector<1x64xf32> to vector<1x64xbf16>
    %cst_37 = arith.constant dense<0.000000e+00> : vector<1x256xf32>
    %126 = tpu.matmul %125, %27, %cst_37 {dimension_numbers = #tpu.dot_dimension_numbers<[1], [0], [0], [1], [0, 0, 1, 1], [], []>} : vector<1x64xbf16>, vector<64x256xbf16>, vector<1x256xf32> -> vector<1x256xf32>
    %127 = arith.addf %124, %126 : vector<1x256xf32>
    %128 = arith.negf %127 : vector<1x256xf32>
    %129 = math.exp %128 : vector<1x256xf32>
    %cst_38 = arith.constant 1.000000e+00 : f32
    %130 = vector.broadcast %cst_38 : f32 to vector<1x256xf32>
    %131 = arith.addf %130, %129 : vector<1x256xf32>
    %132 = arith.divf %130, %131 : vector<1x256xf32>
    %133 = math.tanh %127 : vector<1x256xf32>
    %134 = vector.extract_strided_slice %132 {offsets = [0, 0], sizes = [1, 64], strides = [1, 1]} : vector<1x256xf32> to vector<1x64xf32>
    %135 = vector.extract_strided_slice %132 {offsets = [0, 64], sizes = [1, 64], strides = [1, 1]} : vector<1x256xf32> to vector<1x64xf32>
    %136 = vector.extract_strided_slice %133 {offsets = [0, 128], sizes = [1, 64], strides = [1, 1]} : vector<1x256xf32> to vector<1x64xf32>
    %137 = vector.extract_strided_slice %132 {offsets = [0, 192], sizes = [1, 64], strides = [1, 1]} : vector<1x256xf32> to vector<1x64xf32>
    %138 = arith.mulf %135, %110 : vector<1x64xf32>
    %139 = arith.mulf %134, %136 : vector<1x64xf32>
    %140 = arith.addf %138, %139 : vector<1x64xf32>
    %141 = math.tanh %140 : vector<1x64xf32>
    %142 = arith.mulf %137, %141 : vector<1x64xf32>
    %143 = vector.extract_strided_slice %142 {offsets = [0, 0], sizes = [1, 32], strides = [1, 1]} : vector<1x64xf32> to vector<1x32xf32>
    %144 = arith.index_cast %c3_i32 : i32 to index
    %c0_39 = arith.constant 0 : index
    %145 = vector.load %arg11[%144, %c0_39] : memref<8x64xf32, #tpu.memory_space<vmem>>, vector<1x32xf32>
    tpu.vector_store %arg11[%144, %c0_39], %143 {strides = array<i32>} : memref<8x64xf32, #tpu.memory_space<vmem>>, vector<1x32xf32>,
    %146 = vector.extract_strided_slice %142 {offsets = [0, 32], sizes = [1, 32], strides = [1, 1]} : vector<1x64xf32> to vector<1x32xf32>
    %147 = arith.index_cast %119 : i32 to index
    %c32_40 = arith.constant 32 : index
    %148 = vector.load %arg11[%147, %c32_40] : memref<8x64xf32, #tpu.memory_space<vmem>>, vector<1x32xf32>
    tpu.vector_store %arg11[%147, %c32_40], %146 {strides = array<i32>} : memref<8x64xf32, #tpu.memory_space<vmem>>, vector<1x32xf32>,
    %c4_i32 = arith.constant 4 : i32
    %c7_i32_41 = arith.constant 7 : i32
    %149 = arith.subi %c7_i32_41, %c4_i32 : i32
    %150 = arith.index_cast %c4_i32 : i32 to index
    %c0_42 = arith.constant 0 : index
    %151 = vector.load %arg10[%150, %c0_42] : memref<8x256xf32, #tpu.memory_space<vmem>>, vector<1x256xf32>
    %152 = arith.index_cast %149 : i32 to index
    %c0_43 = arith.constant 0 : index
    %153 = vector.load %arg10[%152, %c0_43] : memref<8x256xf32, #tpu.memory_space<vmem>>, vector<1x256xf32>
    %154 = arith.select %18, %151, %153 : vector<1x256xi1>, vector<1x256xf32>
    %155 = arith.truncf %142 : vector<1x64xf32> to vector<1x64xbf16>
    %cst_44 = arith.constant dense<0.000000e+00> : vector<1x256xf32>
    %156 = tpu.matmul %155, %27, %cst_44 {dimension_numbers = #tpu.dot_dimension_numbers<[1], [0], [0], [1], [0, 0, 1, 1], [], []>} : vector<1x64xbf16>, vector<64x256xbf16>, vector<1x256xf32> -> vector<1x256xf32>
    %157 = arith.addf %154, %156 : vector<1x256xf32>
    %158 = arith.negf %157 : vector<1x256xf32>
    %159 = math.exp %158 : vector<1x256xf32>
    %cst_45 = arith.constant 1.000000e+00 : f32
    %160 = vector.broadcast %cst_45 : f32 to vector<1x256xf32>
    %161 = arith.addf %160, %159 : vector<1x256xf32>
    %162 = arith.divf %160, %161 : vector<1x256xf32>
    %163 = math.tanh %157 : vector<1x256xf32>
    %164 = vector.extract_strided_slice %162 {offsets = [0, 0], sizes = [1, 64], strides = [1, 1]} : vector<1x256xf32> to vector<1x64xf32>
    %165 = vector.extract_strided_slice %162 {offsets = [0, 64], sizes = [1, 64], strides = [1, 1]} : vector<1x256xf32> to vector<1x64xf32>
    %166 = vector.extract_strided_slice %163 {offsets = [0, 128], sizes = [1, 64], strides = [1, 1]} : vector<1x256xf32> to vector<1x64xf32>
    %167 = vector.extract_strided_slice %162 {offsets = [0, 192], sizes = [1, 64], strides = [1, 1]} : vector<1x256xf32> to vector<1x64xf32>
    %168 = arith.mulf %165, %140 : vector<1x64xf32>
    %169 = arith.mulf %164, %166 : vector<1x64xf32>
    %170 = arith.addf %168, %169 : vector<1x64xf32>
    %171 = math.tanh %170 : vector<1x64xf32>
    %172 = arith.mulf %167, %171 : vector<1x64xf32>
    %173 = vector.extract_strided_slice %172 {offsets = [0, 0], sizes = [1, 32], strides = [1, 1]} : vector<1x64xf32> to vector<1x32xf32>
    %174 = arith.index_cast %c4_i32 : i32 to index
    %c0_46 = arith.constant 0 : index
    %175 = vector.load %arg11[%174, %c0_46] : memref<8x64xf32, #tpu.memory_space<vmem>>, vector<1x32xf32>
    tpu.vector_store %arg11[%174, %c0_46], %173 {strides = array<i32>} : memref<8x64xf32, #tpu.memory_space<vmem>>, vector<1x32xf32>,
    %176 = vector.extract_strided_slice %172 {offsets = [0, 32], sizes = [1, 32], strides = [1, 1]} : vector<1x64xf32> to vector<1x32xf32>
    %177 = arith.index_cast %149 : i32 to index
    %c32_47 = arith.constant 32 : index
    %178 = vector.load %arg11[%177, %c32_47] : memref<8x64xf32, #tpu.memory_space<vmem>>, vector<1x32xf32>
    tpu.vector_store %arg11[%177, %c32_47], %176 {strides = array<i32>} : memref<8x64xf32, #tpu.memory_space<vmem>>, vector<1x32xf32>,
    %c5_i32 = arith.constant 5 : i32
    %c7_i32_48 = arith.constant 7 : i32
    %179 = arith.subi %c7_i32_48, %c5_i32 : i32
    %180 = arith.index_cast %c5_i32 : i32 to index
    %c0_49 = arith.constant 0 : index
    %181 = vector.load %arg10[%180, %c0_49] : memref<8x256xf32, #tpu.memory_space<vmem>>, vector<1x256xf32>
    %182 = arith.index_cast %179 : i32 to index
    %c0_50 = arith.constant 0 : index
    %183 = vector.load %arg10[%182, %c0_50] : memref<8x256xf32, #tpu.memory_space<vmem>>, vector<1x256xf32>
    %184 = arith.select %18, %181, %183 : vector<1x256xi1>, vector<1x256xf32>
    %185 = arith.truncf %172 : vector<1x64xf32> to vector<1x64xbf16>
    %cst_51 = arith.constant dense<0.000000e+00> : vector<1x256xf32>
    %186 = tpu.matmul %185, %27, %cst_51 {dimension_numbers = #tpu.dot_dimension_numbers<[1], [0], [0], [1], [0, 0, 1, 1], [], []>} : vector<1x64xbf16>, vector<64x256xbf16>, vector<1x256xf32> -> vector<1x256xf32>
    %187 = arith.addf %184, %186 : vector<1x256xf32>
    %188 = arith.negf %187 : vector<1x256xf32>
    %189 = math.exp %188 : vector<1x256xf32>
    %cst_52 = arith.constant 1.000000e+00 : f32
    %190 = vector.broadcast %cst_52 : f32 to vector<1x256xf32>
    %191 = arith.addf %190, %189 : vector<1x256xf32>
    %192 = arith.divf %190, %191 : vector<1x256xf32>
    %193 = math.tanh %187 : vector<1x256xf32>
    %194 = vector.extract_strided_slice %192 {offsets = [0, 0], sizes = [1, 64], strides = [1, 1]} : vector<1x256xf32> to vector<1x64xf32>
    %195 = vector.extract_strided_slice %192 {offsets = [0, 64], sizes = [1, 64], strides = [1, 1]} : vector<1x256xf32> to vector<1x64xf32>
    %196 = vector.extract_strided_slice %193 {offsets = [0, 128], sizes = [1, 64], strides = [1, 1]} : vector<1x256xf32> to vector<1x64xf32>
    %197 = vector.extract_strided_slice %192 {offsets = [0, 192], sizes = [1, 64], strides = [1, 1]} : vector<1x256xf32> to vector<1x64xf32>
    %198 = arith.mulf %195, %170 : vector<1x64xf32>
    %199 = arith.mulf %194, %196 : vector<1x64xf32>
    %200 = arith.addf %198, %199 : vector<1x64xf32>
    %201 = math.tanh %200 : vector<1x64xf32>
    %202 = arith.mulf %197, %201 : vector<1x64xf32>
    %203 = vector.extract_strided_slice %202 {offsets = [0, 0], sizes = [1, 32], strides = [1, 1]} : vector<1x64xf32> to vector<1x32xf32>
    %204 = arith.index_cast %c5_i32 : i32 to index
    %c0_53 = arith.constant 0 : index
    %205 = vector.load %arg11[%204, %c0_53] : memref<8x64xf32, #tpu.memory_space<vmem>>, vector<1x32xf32>
    tpu.vector_store %arg11[%204, %c0_53], %203 {strides = array<i32>} : memref<8x64xf32, #tpu.memory_space<vmem>>, vector<1x32xf32>,
    %206 = vector.extract_strided_slice %202 {offsets = [0, 32], sizes = [1, 32], strides = [1, 1]} : vector<1x64xf32> to vector<1x32xf32>
    %207 = arith.index_cast %179 : i32 to index
    %c32_54 = arith.constant 32 : index
    %208 = vector.load %arg11[%207, %c32_54] : memref<8x64xf32, #tpu.memory_space<vmem>>, vector<1x32xf32>
    tpu.vector_store %arg11[%207, %c32_54], %206 {strides = array<i32>} : memref<8x64xf32, #tpu.memory_space<vmem>>, vector<1x32xf32>,
    %c6_i32 = arith.constant 6 : i32
    %c7_i32_55 = arith.constant 7 : i32
    %209 = arith.subi %c7_i32_55, %c6_i32 : i32
    %210 = arith.index_cast %c6_i32 : i32 to index
    %c0_56 = arith.constant 0 : index
    %211 = vector.load %arg10[%210, %c0_56] : memref<8x256xf32, #tpu.memory_space<vmem>>, vector<1x256xf32>
    %212 = arith.index_cast %209 : i32 to index
    %c0_57 = arith.constant 0 : index
    %213 = vector.load %arg10[%212, %c0_57] : memref<8x256xf32, #tpu.memory_space<vmem>>, vector<1x256xf32>
    %214 = arith.select %18, %211, %213 : vector<1x256xi1>, vector<1x256xf32>
    %215 = arith.truncf %202 : vector<1x64xf32> to vector<1x64xbf16>
    %cst_58 = arith.constant dense<0.000000e+00> : vector<1x256xf32>
    %216 = tpu.matmul %215, %27, %cst_58 {dimension_numbers = #tpu.dot_dimension_numbers<[1], [0], [0], [1], [0, 0, 1, 1], [], []>} : vector<1x64xbf16>, vector<64x256xbf16>, vector<1x256xf32> -> vector<1x256xf32>
    %217 = arith.addf %214, %216 : vector<1x256xf32>
    %218 = arith.negf %217 : vector<1x256xf32>
    %219 = math.exp %218 : vector<1x256xf32>
    %cst_59 = arith.constant 1.000000e+00 : f32
    %220 = vector.broadcast %cst_59 : f32 to vector<1x256xf32>
    %221 = arith.addf %220, %219 : vector<1x256xf32>
    %222 = arith.divf %220, %221 : vector<1x256xf32>
    %223 = math.tanh %217 : vector<1x256xf32>
    %224 = vector.extract_strided_slice %222 {offsets = [0, 0], sizes = [1, 64], strides = [1, 1]} : vector<1x256xf32> to vector<1x64xf32>
    %225 = vector.extract_strided_slice %222 {offsets = [0, 64], sizes = [1, 64], strides = [1, 1]} : vector<1x256xf32> to vector<1x64xf32>
    %226 = vector.extract_strided_slice %223 {offsets = [0, 128], sizes = [1, 64], strides = [1, 1]} : vector<1x256xf32> to vector<1x64xf32>
    %227 = vector.extract_strided_slice %222 {offsets = [0, 192], sizes = [1, 64], strides = [1, 1]} : vector<1x256xf32> to vector<1x64xf32>
    %228 = arith.mulf %225, %200 : vector<1x64xf32>
    %229 = arith.mulf %224, %226 : vector<1x64xf32>
    %230 = arith.addf %228, %229 : vector<1x64xf32>
    %231 = math.tanh %230 : vector<1x64xf32>
    %232 = arith.mulf %227, %231 : vector<1x64xf32>
    %233 = vector.extract_strided_slice %232 {offsets = [0, 0], sizes = [1, 32], strides = [1, 1]} : vector<1x64xf32> to vector<1x32xf32>
    %234 = arith.index_cast %c6_i32 : i32 to index
    %c0_60 = arith.constant 0 : index
    %235 = vector.load %arg11[%234, %c0_60] : memref<8x64xf32, #tpu.memory_space<vmem>>, vector<1x32xf32>
    tpu.vector_store %arg11[%234, %c0_60], %233 {strides = array<i32>} : memref<8x64xf32, #tpu.memory_space<vmem>>, vector<1x32xf32>,
    %236 = vector.extract_strided_slice %232 {offsets = [0, 32], sizes = [1, 32], strides = [1, 1]} : vector<1x64xf32> to vector<1x32xf32>
    %237 = arith.index_cast %209 : i32 to index
    %c32_61 = arith.constant 32 : index
    %238 = vector.load %arg11[%237, %c32_61] : memref<8x64xf32, #tpu.memory_space<vmem>>, vector<1x32xf32>
    tpu.vector_store %arg11[%237, %c32_61], %236 {strides = array<i32>} : memref<8x64xf32, #tpu.memory_space<vmem>>, vector<1x32xf32>,
    %c7_i32_62 = arith.constant 7 : i32
    %c7_i32_63 = arith.constant 7 : i32
    %239 = arith.subi %c7_i32_63, %c7_i32_62 : i32
    %240 = arith.index_cast %c7_i32_62 : i32 to index
    %c0_64 = arith.constant 0 : index
    %241 = vector.load %arg10[%240, %c0_64] : memref<8x256xf32, #tpu.memory_space<vmem>>, vector<1x256xf32>
    %242 = arith.index_cast %239 : i32 to index
    %c0_65 = arith.constant 0 : index
    %243 = vector.load %arg10[%242, %c0_65] : memref<8x256xf32, #tpu.memory_space<vmem>>, vector<1x256xf32>
    %244 = arith.select %18, %241, %243 : vector<1x256xi1>, vector<1x256xf32>
    %245 = arith.truncf %232 : vector<1x64xf32> to vector<1x64xbf16>
    %cst_66 = arith.constant dense<0.000000e+00> : vector<1x256xf32>
    %246 = tpu.matmul %245, %27, %cst_66 {dimension_numbers = #tpu.dot_dimension_numbers<[1], [0], [0], [1], [0, 0, 1, 1], [], []>} : vector<1x64xbf16>, vector<64x256xbf16>, vector<1x256xf32> -> vector<1x256xf32>
    %247 = arith.addf %244, %246 : vector<1x256xf32>
    %248 = arith.negf %247 : vector<1x256xf32>
    %249 = math.exp %248 : vector<1x256xf32>
    %cst_67 = arith.constant 1.000000e+00 : f32
    %250 = vector.broadcast %cst_67 : f32 to vector<1x256xf32>
    %251 = arith.addf %250, %249 : vector<1x256xf32>
    %252 = arith.divf %250, %251 : vector<1x256xf32>
    %253 = math.tanh %247 : vector<1x256xf32>
    %254 = vector.extract_strided_slice %252 {offsets = [0, 0], sizes = [1, 64], strides = [1, 1]} : vector<1x256xf32> to vector<1x64xf32>
    %255 = vector.extract_strided_slice %252 {offsets = [0, 64], sizes = [1, 64], strides = [1, 1]} : vector<1x256xf32> to vector<1x64xf32>
    %256 = vector.extract_strided_slice %253 {offsets = [0, 128], sizes = [1, 64], strides = [1, 1]} : vector<1x256xf32> to vector<1x64xf32>
    %257 = vector.extract_strided_slice %252 {offsets = [0, 192], sizes = [1, 64], strides = [1, 1]} : vector<1x256xf32> to vector<1x64xf32>
    %258 = arith.mulf %255, %230 : vector<1x64xf32>
    %259 = arith.mulf %254, %256 : vector<1x64xf32>
    %260 = arith.addf %258, %259 : vector<1x64xf32>
    %261 = math.tanh %260 : vector<1x64xf32>
    %262 = arith.mulf %257, %261 : vector<1x64xf32>
    %263 = vector.extract_strided_slice %262 {offsets = [0, 0], sizes = [1, 32], strides = [1, 1]} : vector<1x64xf32> to vector<1x32xf32>
    %264 = arith.index_cast %c7_i32_62 : i32 to index
    %c0_68 = arith.constant 0 : index
    %265 = vector.load %arg11[%264, %c0_68] : memref<8x64xf32, #tpu.memory_space<vmem>>, vector<1x32xf32>
    tpu.vector_store %arg11[%264, %c0_68], %263 {strides = array<i32>} : memref<8x64xf32, #tpu.memory_space<vmem>>, vector<1x32xf32>,
    %266 = vector.extract_strided_slice %262 {offsets = [0, 32], sizes = [1, 32], strides = [1, 1]} : vector<1x64xf32> to vector<1x32xf32>
    %267 = arith.index_cast %239 : i32 to index
    %c32_69 = arith.constant 32 : index
    %268 = vector.load %arg11[%267, %c32_69] : memref<8x64xf32, #tpu.memory_space<vmem>>, vector<1x32xf32>
    tpu.vector_store %arg11[%267, %c32_69], %266 {strides = array<i32>} : memref<8x64xf32, #tpu.memory_space<vmem>>, vector<1x32xf32>,
    %c8_i32 = arith.constant 8 : i32
    %c0_70 = arith.constant 0 : index
    %c0_71 = arith.constant 0 : index
    %269 = vector.load %arg11[%c0_70, %c0_71] : memref<8x64xf32, #tpu.memory_space<vmem>>, vector<8x64xf32>
    %270 = arith.truncf %269 : vector<8x64xf32> to vector<8x64xbf16>
    %c0_72 = arith.constant 0 : index
    %c0_73 = arith.constant 0 : index
    %271 = vector.load %arg4[%c0_72, %c0_73] : memref<64x256xbf16, #tpu.memory_space<vmem>>, vector<64x256xbf16>
    %cst_74 = arith.constant dense<0.000000e+00> : vector<8x256xf32>
    %272 = tpu.matmul %270, %271, %cst_74 {dimension_numbers = #tpu.dot_dimension_numbers<[1], [0], [0], [1], [0, 0, 1, 1], [], []>} : vector<8x64xbf16>, vector<64x256xbf16>, vector<8x256xf32> -> vector<8x256xf32>
    %c0_75 = arith.constant 0 : index
    %c0_76 = arith.constant 0 : index
    %273 = vector.load %arg6[%c0_75, %c0_76] : memref<1x256xf32, #tpu.memory_space<vmem>>, vector<1x256xf32>
    %274 = vector.broadcast %273 : vector<1x256xf32> to vector<8x256xf32>
    %275 = arith.addf %272, %274 : vector<8x256xf32>
    %c0_77 = arith.constant 0 : index
    %c0_78 = arith.constant 0 : index
    %276 = vector.load %arg10[%c0_77, %c0_78] : memref<8x256xf32, #tpu.memory_space<vmem>>, vector<8x256xf32>
    tpu.vector_store %arg10[%c0_77, %c0_78], %275 {strides = array<i32>} : memref<8x256xf32, #tpu.memory_space<vmem>>, vector<8x256xf32>,
    %c0_79 = arith.constant 0 : index
    %c0_80 = arith.constant 0 : index
    %277 = vector.load %arg5[%c0_79, %c0_80] : memref<64x256xbf16, #tpu.memory_space<vmem>>, vector<64x256xbf16>
    %cst_81 = arith.constant 0.000000e+00 : f32
    %278 = vector.broadcast %cst_81 : f32 to vector<1x64xf32>
    %c0_i32_82 = arith.constant 0 : i32
    %c7_i32_83 = arith.constant 7 : i32
    %279 = arith.subi %c7_i32_83, %c0_i32_82 : i32
    %280 = arith.index_cast %c0_i32_82 : i32 to index
    %c0_84 = arith.constant 0 : index
    %281 = vector.load %arg10[%280, %c0_84] : memref<8x256xf32, #tpu.memory_space<vmem>>, vector<1x256xf32>
    %282 = arith.index_cast %279 : i32 to index
    %c0_85 = arith.constant 0 : index
    %283 = vector.load %arg10[%282, %c0_85] : memref<8x256xf32, #tpu.memory_space<vmem>>, vector<1x256xf32>
    %284 = arith.select %18, %281, %283 : vector<1x256xi1>, vector<1x256xf32>
    %285 = arith.truncf %278 : vector<1x64xf32> to vector<1x64xbf16>
    %cst_86 = arith.constant dense<0.000000e+00> : vector<1x256xf32>
    %286 = tpu.matmul %285, %277, %cst_86 {dimension_numbers = #tpu.dot_dimension_numbers<[1], [0], [0], [1], [0, 0, 1, 1], [], []>} : vector<1x64xbf16>, vector<64x256xbf16>, vector<1x256xf32> -> vector<1x256xf32>
    %287 = arith.addf %284, %286 : vector<1x256xf32>
    %288 = arith.negf %287 : vector<1x256xf32>
    %289 = math.exp %288 : vector<1x256xf32>
    %cst_87 = arith.constant 1.000000e+00 : f32
    %290 = vector.broadcast %cst_87 : f32 to vector<1x256xf32>
    %291 = arith.addf %290, %289 : vector<1x256xf32>
    %292 = arith.divf %290, %291 : vector<1x256xf32>
    %293 = math.tanh %287 : vector<1x256xf32>
    %294 = vector.extract_strided_slice %292 {offsets = [0, 0], sizes = [1, 64], strides = [1, 1]} : vector<1x256xf32> to vector<1x64xf32>
    %295 = vector.extract_strided_slice %292 {offsets = [0, 64], sizes = [1, 64], strides = [1, 1]} : vector<1x256xf32> to vector<1x64xf32>
    %296 = vector.extract_strided_slice %293 {offsets = [0, 128], sizes = [1, 64], strides = [1, 1]} : vector<1x256xf32> to vector<1x64xf32>
    %297 = vector.extract_strided_slice %292 {offsets = [0, 192], sizes = [1, 64], strides = [1, 1]} : vector<1x256xf32> to vector<1x64xf32>
    %298 = arith.mulf %295, %278 : vector<1x64xf32>
    %299 = arith.mulf %294, %296 : vector<1x64xf32>
    %300 = arith.addf %298, %299 : vector<1x64xf32>
    %301 = math.tanh %300 : vector<1x64xf32>
    %302 = arith.mulf %297, %301 : vector<1x64xf32>
    %303 = vector.extract_strided_slice %302 {offsets = [0, 0], sizes = [1, 32], strides = [1, 1]} : vector<1x64xf32> to vector<1x32xf32>
    %304 = arith.index_cast %c0_i32_82 : i32 to index
    %c0_88 = arith.constant 0 : index
    %305 = vector.load %arg11[%304, %c0_88] : memref<8x64xf32, #tpu.memory_space<vmem>>, vector<1x32xf32>
    tpu.vector_store %arg11[%304, %c0_88], %303 {strides = array<i32>} : memref<8x64xf32, #tpu.memory_space<vmem>>, vector<1x32xf32>,
    %306 = vector.extract_strided_slice %302 {offsets = [0, 32], sizes = [1, 32], strides = [1, 1]} : vector<1x64xf32> to vector<1x32xf32>
    %307 = arith.index_cast %279 : i32 to index
    %c32_89 = arith.constant 32 : index
    %308 = vector.load %arg11[%307, %c32_89] : memref<8x64xf32, #tpu.memory_space<vmem>>, vector<1x32xf32>
    tpu.vector_store %arg11[%307, %c32_89], %306 {strides = array<i32>} : memref<8x64xf32, #tpu.memory_space<vmem>>, vector<1x32xf32>,
    %c1_i32_90 = arith.constant 1 : i32
    %c7_i32_91 = arith.constant 7 : i32
    %309 = arith.subi %c7_i32_91, %c1_i32_90 : i32
    %310 = arith.index_cast %c1_i32_90 : i32 to index
    %c0_92 = arith.constant 0 : index
    %311 = vector.load %arg10[%310, %c0_92] : memref<8x256xf32, #tpu.memory_space<vmem>>, vector<1x256xf32>
    %312 = arith.index_cast %309 : i32 to index
    %c0_93 = arith.constant 0 : index
    %313 = vector.load %arg10[%312, %c0_93] : memref<8x256xf32, #tpu.memory_space<vmem>>, vector<1x256xf32>
    %314 = arith.select %18, %311, %313 : vector<1x256xi1>, vector<1x256xf32>
    %315 = arith.truncf %302 : vector<1x64xf32> to vector<1x64xbf16>
    %cst_94 = arith.constant dense<0.000000e+00> : vector<1x256xf32>
    %316 = tpu.matmul %315, %277, %cst_94 {dimension_numbers = #tpu.dot_dimension_numbers<[1], [0], [0], [1], [0, 0, 1, 1], [], []>} : vector<1x64xbf16>, vector<64x256xbf16>, vector<1x256xf32> -> vector<1x256xf32>
    %317 = arith.addf %314, %316 : vector<1x256xf32>
    %318 = arith.negf %317 : vector<1x256xf32>
    %319 = math.exp %318 : vector<1x256xf32>
    %cst_95 = arith.constant 1.000000e+00 : f32
    %320 = vector.broadcast %cst_95 : f32 to vector<1x256xf32>
    %321 = arith.addf %320, %319 : vector<1x256xf32>
    %322 = arith.divf %320, %321 : vector<1x256xf32>
    %323 = math.tanh %317 : vector<1x256xf32>
    %324 = vector.extract_strided_slice %322 {offsets = [0, 0], sizes = [1, 64], strides = [1, 1]} : vector<1x256xf32> to vector<1x64xf32>
    %325 = vector.extract_strided_slice %322 {offsets = [0, 64], sizes = [1, 64], strides = [1, 1]} : vector<1x256xf32> to vector<1x64xf32>
    %326 = vector.extract_strided_slice %323 {offsets = [0, 128], sizes = [1, 64], strides = [1, 1]} : vector<1x256xf32> to vector<1x64xf32>
    %327 = vector.extract_strided_slice %322 {offsets = [0, 192], sizes = [1, 64], strides = [1, 1]} : vector<1x256xf32> to vector<1x64xf32>
    %328 = arith.mulf %325, %300 : vector<1x64xf32>
    %329 = arith.mulf %324, %326 : vector<1x64xf32>
    %330 = arith.addf %328, %329 : vector<1x64xf32>
    %331 = math.tanh %330 : vector<1x64xf32>
    %332 = arith.mulf %327, %331 : vector<1x64xf32>
    %333 = vector.extract_strided_slice %332 {offsets = [0, 0], sizes = [1, 32], strides = [1, 1]} : vector<1x64xf32> to vector<1x32xf32>
    %334 = arith.index_cast %c1_i32_90 : i32 to index
    %c0_96 = arith.constant 0 : index
    %335 = vector.load %arg11[%334, %c0_96] : memref<8x64xf32, #tpu.memory_space<vmem>>, vector<1x32xf32>
    tpu.vector_store %arg11[%334, %c0_96], %333 {strides = array<i32>} : memref<8x64xf32, #tpu.memory_space<vmem>>, vector<1x32xf32>,
    %336 = vector.extract_strided_slice %332 {offsets = [0, 32], sizes = [1, 32], strides = [1, 1]} : vector<1x64xf32> to vector<1x32xf32>
    %337 = arith.index_cast %309 : i32 to index
    %c32_97 = arith.constant 32 : index
    %338 = vector.load %arg11[%337, %c32_97] : memref<8x64xf32, #tpu.memory_space<vmem>>, vector<1x32xf32>
    tpu.vector_store %arg11[%337, %c32_97], %336 {strides = array<i32>} : memref<8x64xf32, #tpu.memory_space<vmem>>, vector<1x32xf32>,
    %c2_i32_98 = arith.constant 2 : i32
    %c7_i32_99 = arith.constant 7 : i32
    %339 = arith.subi %c7_i32_99, %c2_i32_98 : i32
    %340 = arith.index_cast %c2_i32_98 : i32 to index
    %c0_100 = arith.constant 0 : index
    %341 = vector.load %arg10[%340, %c0_100] : memref<8x256xf32, #tpu.memory_space<vmem>>, vector<1x256xf32>
    %342 = arith.index_cast %339 : i32 to index
    %c0_101 = arith.constant 0 : index
    %343 = vector.load %arg10[%342, %c0_101] : memref<8x256xf32, #tpu.memory_space<vmem>>, vector<1x256xf32>
    %344 = arith.select %18, %341, %343 : vector<1x256xi1>, vector<1x256xf32>
    %345 = arith.truncf %332 : vector<1x64xf32> to vector<1x64xbf16>
    %cst_102 = arith.constant dense<0.000000e+00> : vector<1x256xf32>
    %346 = tpu.matmul %345, %277, %cst_102 {dimension_numbers = #tpu.dot_dimension_numbers<[1], [0], [0], [1], [0, 0, 1, 1], [], []>} : vector<1x64xbf16>, vector<64x256xbf16>, vector<1x256xf32> -> vector<1x256xf32>
    %347 = arith.addf %344, %346 : vector<1x256xf32>
    %348 = arith.negf %347 : vector<1x256xf32>
    %349 = math.exp %348 : vector<1x256xf32>
    %cst_103 = arith.constant 1.000000e+00 : f32
    %350 = vector.broadcast %cst_103 : f32 to vector<1x256xf32>
    %351 = arith.addf %350, %349 : vector<1x256xf32>
    %352 = arith.divf %350, %351 : vector<1x256xf32>
    %353 = math.tanh %347 : vector<1x256xf32>
    %354 = vector.extract_strided_slice %352 {offsets = [0, 0], sizes = [1, 64], strides = [1, 1]} : vector<1x256xf32> to vector<1x64xf32>
    %355 = vector.extract_strided_slice %352 {offsets = [0, 64], sizes = [1, 64], strides = [1, 1]} : vector<1x256xf32> to vector<1x64xf32>
    %356 = vector.extract_strided_slice %353 {offsets = [0, 128], sizes = [1, 64], strides = [1, 1]} : vector<1x256xf32> to vector<1x64xf32>
    %357 = vector.extract_strided_slice %352 {offsets = [0, 192], sizes = [1, 64], strides = [1, 1]} : vector<1x256xf32> to vector<1x64xf32>
    %358 = arith.mulf %355, %330 : vector<1x64xf32>
    %359 = arith.mulf %354, %356 : vector<1x64xf32>
    %360 = arith.addf %358, %359 : vector<1x64xf32>
    %361 = math.tanh %360 : vector<1x64xf32>
    %362 = arith.mulf %357, %361 : vector<1x64xf32>
    %363 = vector.extract_strided_slice %362 {offsets = [0, 0], sizes = [1, 32], strides = [1, 1]} : vector<1x64xf32> to vector<1x32xf32>
    %364 = arith.index_cast %c2_i32_98 : i32 to index
    %c0_104 = arith.constant 0 : index
    %365 = vector.load %arg11[%364, %c0_104] : memref<8x64xf32, #tpu.memory_space<vmem>>, vector<1x32xf32>
    tpu.vector_store %arg11[%364, %c0_104], %363 {strides = array<i32>} : memref<8x64xf32, #tpu.memory_space<vmem>>, vector<1x32xf32>,
    %366 = vector.extract_strided_slice %362 {offsets = [0, 32], sizes = [1, 32], strides = [1, 1]} : vector<1x64xf32> to vector<1x32xf32>
    %367 = arith.index_cast %339 : i32 to index
    %c32_105 = arith.constant 32 : index
    %368 = vector.load %arg11[%367, %c32_105] : memref<8x64xf32, #tpu.memory_space<vmem>>, vector<1x32xf32>
    tpu.vector_store %arg11[%367, %c32_105], %366 {strides = array<i32>} : memref<8x64xf32, #tpu.memory_space<vmem>>, vector<1x32xf32>,
    %c3_i32_106 = arith.constant 3 : i32
    %c7_i32_107 = arith.constant 7 : i32
    %369 = arith.subi %c7_i32_107, %c3_i32_106 : i32
    %370 = arith.index_cast %c3_i32_106 : i32 to index
    %c0_108 = arith.constant 0 : index
    %371 = vector.load %arg10[%370, %c0_108] : memref<8x256xf32, #tpu.memory_space<vmem>>, vector<1x256xf32>
    %372 = arith.index_cast %369 : i32 to index
    %c0_109 = arith.constant 0 : index
    %373 = vector.load %arg10[%372, %c0_109] : memref<8x256xf32, #tpu.memory_space<vmem>>, vector<1x256xf32>
    %374 = arith.select %18, %371, %373 : vector<1x256xi1>, vector<1x256xf32>
    %375 = arith.truncf %362 : vector<1x64xf32> to vector<1x64xbf16>
    %cst_110 = arith.constant dense<0.000000e+00> : vector<1x256xf32>
    %376 = tpu.matmul %375, %277, %cst_110 {dimension_numbers = #tpu.dot_dimension_numbers<[1], [0], [0], [1], [0, 0, 1, 1], [], []>} : vector<1x64xbf16>, vector<64x256xbf16>, vector<1x256xf32> -> vector<1x256xf32>
    %377 = arith.addf %374, %376 : vector<1x256xf32>
    %378 = arith.negf %377 : vector<1x256xf32>
    %379 = math.exp %378 : vector<1x256xf32>
    %cst_111 = arith.constant 1.000000e+00 : f32
    %380 = vector.broadcast %cst_111 : f32 to vector<1x256xf32>
    %381 = arith.addf %380, %379 : vector<1x256xf32>
    %382 = arith.divf %380, %381 : vector<1x256xf32>
    %383 = math.tanh %377 : vector<1x256xf32>
    %384 = vector.extract_strided_slice %382 {offsets = [0, 0], sizes = [1, 64], strides = [1, 1]} : vector<1x256xf32> to vector<1x64xf32>
    %385 = vector.extract_strided_slice %382 {offsets = [0, 64], sizes = [1, 64], strides = [1, 1]} : vector<1x256xf32> to vector<1x64xf32>
    %386 = vector.extract_strided_slice %383 {offsets = [0, 128], sizes = [1, 64], strides = [1, 1]} : vector<1x256xf32> to vector<1x64xf32>
    %387 = vector.extract_strided_slice %382 {offsets = [0, 192], sizes = [1, 64], strides = [1, 1]} : vector<1x256xf32> to vector<1x64xf32>
    %388 = arith.mulf %385, %360 : vector<1x64xf32>
    %389 = arith.mulf %384, %386 : vector<1x64xf32>
    %390 = arith.addf %388, %389 : vector<1x64xf32>
    %391 = math.tanh %390 : vector<1x64xf32>
    %392 = arith.mulf %387, %391 : vector<1x64xf32>
    %393 = vector.extract_strided_slice %392 {offsets = [0, 0], sizes = [1, 32], strides = [1, 1]} : vector<1x64xf32> to vector<1x32xf32>
    %394 = arith.index_cast %c3_i32_106 : i32 to index
    %c0_112 = arith.constant 0 : index
    %395 = vector.load %arg11[%394, %c0_112] : memref<8x64xf32, #tpu.memory_space<vmem>>, vector<1x32xf32>
    tpu.vector_store %arg11[%394, %c0_112], %393 {strides = array<i32>} : memref<8x64xf32, #tpu.memory_space<vmem>>, vector<1x32xf32>,
    %396 = vector.extract_strided_slice %392 {offsets = [0, 32], sizes = [1, 32], strides = [1, 1]} : vector<1x64xf32> to vector<1x32xf32>
    %397 = arith.index_cast %369 : i32 to index
    %c32_113 = arith.constant 32 : index
    %398 = vector.load %arg11[%397, %c32_113] : memref<8x64xf32, #tpu.memory_space<vmem>>, vector<1x32xf32>
    tpu.vector_store %arg11[%397, %c32_113], %396 {strides = array<i32>} : memref<8x64xf32, #tpu.memory_space<vmem>>, vector<1x32xf32>,
    %c4_i32_114 = arith.constant 4 : i32
    %c7_i32_115 = arith.constant 7 : i32
    %399 = arith.subi %c7_i32_115, %c4_i32_114 : i32
    %400 = arith.index_cast %c4_i32_114 : i32 to index
    %c0_116 = arith.constant 0 : index
    %401 = vector.load %arg10[%400, %c0_116] : memref<8x256xf32, #tpu.memory_space<vmem>>, vector<1x256xf32>
    %402 = arith.index_cast %399 : i32 to index
    %c0_117 = arith.constant 0 : index
    %403 = vector.load %arg10[%402, %c0_117] : memref<8x256xf32, #tpu.memory_space<vmem>>, vector<1x256xf32>
    %404 = arith.select %18, %401, %403 : vector<1x256xi1>, vector<1x256xf32>
    %405 = arith.truncf %392 : vector<1x64xf32> to vector<1x64xbf16>
    %cst_118 = arith.constant dense<0.000000e+00> : vector<1x256xf32>
    %406 = tpu.matmul %405, %277, %cst_118 {dimension_numbers = #tpu.dot_dimension_numbers<[1], [0], [0], [1], [0, 0, 1, 1], [], []>} : vector<1x64xbf16>, vector<64x256xbf16>, vector<1x256xf32> -> vector<1x256xf32>
    %407 = arith.addf %404, %406 : vector<1x256xf32>
    %408 = arith.negf %407 : vector<1x256xf32>
    %409 = math.exp %408 : vector<1x256xf32>
    %cst_119 = arith.constant 1.000000e+00 : f32
    %410 = vector.broadcast %cst_119 : f32 to vector<1x256xf32>
    %411 = arith.addf %410, %409 : vector<1x256xf32>
    %412 = arith.divf %410, %411 : vector<1x256xf32>
    %413 = math.tanh %407 : vector<1x256xf32>
    %414 = vector.extract_strided_slice %412 {offsets = [0, 0], sizes = [1, 64], strides = [1, 1]} : vector<1x256xf32> to vector<1x64xf32>
    %415 = vector.extract_strided_slice %412 {offsets = [0, 64], sizes = [1, 64], strides = [1, 1]} : vector<1x256xf32> to vector<1x64xf32>
    %416 = vector.extract_strided_slice %413 {offsets = [0, 128], sizes = [1, 64], strides = [1, 1]} : vector<1x256xf32> to vector<1x64xf32>
    %417 = vector.extract_strided_slice %412 {offsets = [0, 192], sizes = [1, 64], strides = [1, 1]} : vector<1x256xf32> to vector<1x64xf32>
    %418 = arith.mulf %415, %390 : vector<1x64xf32>
    %419 = arith.mulf %414, %416 : vector<1x64xf32>
    %420 = arith.addf %418, %419 : vector<1x64xf32>
    %421 = math.tanh %420 : vector<1x64xf32>
    %422 = arith.mulf %417, %421 : vector<1x64xf32>
    %423 = vector.extract_strided_slice %422 {offsets = [0, 0], sizes = [1, 32], strides = [1, 1]} : vector<1x64xf32> to vector<1x32xf32>
    %424 = arith.index_cast %c4_i32_114 : i32 to index
    %c0_120 = arith.constant 0 : index
    %425 = vector.load %arg11[%424, %c0_120] : memref<8x64xf32, #tpu.memory_space<vmem>>, vector<1x32xf32>
    tpu.vector_store %arg11[%424, %c0_120], %423 {strides = array<i32>} : memref<8x64xf32, #tpu.memory_space<vmem>>, vector<1x32xf32>,
    %426 = vector.extract_strided_slice %422 {offsets = [0, 32], sizes = [1, 32], strides = [1, 1]} : vector<1x64xf32> to vector<1x32xf32>
    %427 = arith.index_cast %399 : i32 to index
    %c32_121 = arith.constant 32 : index
    %428 = vector.load %arg11[%427, %c32_121] : memref<8x64xf32, #tpu.memory_space<vmem>>, vector<1x32xf32>
    tpu.vector_store %arg11[%427, %c32_121], %426 {strides = array<i32>} : memref<8x64xf32, #tpu.memory_space<vmem>>, vector<1x32xf32>,
    %c5_i32_122 = arith.constant 5 : i32
    %c7_i32_123 = arith.constant 7 : i32
    %429 = arith.subi %c7_i32_123, %c5_i32_122 : i32
    %430 = arith.index_cast %c5_i32_122 : i32 to index
    %c0_124 = arith.constant 0 : index
    %431 = vector.load %arg10[%430, %c0_124] : memref<8x256xf32, #tpu.memory_space<vmem>>, vector<1x256xf32>
    %432 = arith.index_cast %429 : i32 to index
    %c0_125 = arith.constant 0 : index
    %433 = vector.load %arg10[%432, %c0_125] : memref<8x256xf32, #tpu.memory_space<vmem>>, vector<1x256xf32>
    %434 = arith.select %18, %431, %433 : vector<1x256xi1>, vector<1x256xf32>
    %435 = arith.truncf %422 : vector<1x64xf32> to vector<1x64xbf16>
    %cst_126 = arith.constant dense<0.000000e+00> : vector<1x256xf32>
    %436 = tpu.matmul %435, %277, %cst_126 {dimension_numbers = #tpu.dot_dimension_numbers<[1], [0], [0], [1], [0, 0, 1, 1], [], []>} : vector<1x64xbf16>, vector<64x256xbf16>, vector<1x256xf32> -> vector<1x256xf32>
    %437 = arith.addf %434, %436 : vector<1x256xf32>
    %438 = arith.negf %437 : vector<1x256xf32>
    %439 = math.exp %438 : vector<1x256xf32>
    %cst_127 = arith.constant 1.000000e+00 : f32
    %440 = vector.broadcast %cst_127 : f32 to vector<1x256xf32>
    %441 = arith.addf %440, %439 : vector<1x256xf32>
    %442 = arith.divf %440, %441 : vector<1x256xf32>
    %443 = math.tanh %437 : vector<1x256xf32>
    %444 = vector.extract_strided_slice %442 {offsets = [0, 0], sizes = [1, 64], strides = [1, 1]} : vector<1x256xf32> to vector<1x64xf32>
    %445 = vector.extract_strided_slice %442 {offsets = [0, 64], sizes = [1, 64], strides = [1, 1]} : vector<1x256xf32> to vector<1x64xf32>
    %446 = vector.extract_strided_slice %443 {offsets = [0, 128], sizes = [1, 64], strides = [1, 1]} : vector<1x256xf32> to vector<1x64xf32>
    %447 = vector.extract_strided_slice %442 {offsets = [0, 192], sizes = [1, 64], strides = [1, 1]} : vector<1x256xf32> to vector<1x64xf32>
    %448 = arith.mulf %445, %420 : vector<1x64xf32>
    %449 = arith.mulf %444, %446 : vector<1x64xf32>
    %450 = arith.addf %448, %449 : vector<1x64xf32>
    %451 = math.tanh %450 : vector<1x64xf32>
    %452 = arith.mulf %447, %451 : vector<1x64xf32>
    %453 = vector.extract_strided_slice %452 {offsets = [0, 0], sizes = [1, 32], strides = [1, 1]} : vector<1x64xf32> to vector<1x32xf32>
    %454 = arith.index_cast %c5_i32_122 : i32 to index
    %c0_128 = arith.constant 0 : index
    %455 = vector.load %arg11[%454, %c0_128] : memref<8x64xf32, #tpu.memory_space<vmem>>, vector<1x32xf32>
    tpu.vector_store %arg11[%454, %c0_128], %453 {strides = array<i32>} : memref<8x64xf32, #tpu.memory_space<vmem>>, vector<1x32xf32>,
    %456 = vector.extract_strided_slice %452 {offsets = [0, 32], sizes = [1, 32], strides = [1, 1]} : vector<1x64xf32> to vector<1x32xf32>
    %457 = arith.index_cast %429 : i32 to index
    %c32_129 = arith.constant 32 : index
    %458 = vector.load %arg11[%457, %c32_129] : memref<8x64xf32, #tpu.memory_space<vmem>>, vector<1x32xf32>
    tpu.vector_store %arg11[%457, %c32_129], %456 {strides = array<i32>} : memref<8x64xf32, #tpu.memory_space<vmem>>, vector<1x32xf32>,
    %c6_i32_130 = arith.constant 6 : i32
    %c7_i32_131 = arith.constant 7 : i32
    %459 = arith.subi %c7_i32_131, %c6_i32_130 : i32
    %460 = arith.index_cast %c6_i32_130 : i32 to index
    %c0_132 = arith.constant 0 : index
    %461 = vector.load %arg10[%460, %c0_132] : memref<8x256xf32, #tpu.memory_space<vmem>>, vector<1x256xf32>
    %462 = arith.index_cast %459 : i32 to index
    %c0_133 = arith.constant 0 : index
    %463 = vector.load %arg10[%462, %c0_133] : memref<8x256xf32, #tpu.memory_space<vmem>>, vector<1x256xf32>
    %464 = arith.select %18, %461, %463 : vector<1x256xi1>, vector<1x256xf32>
    %465 = arith.truncf %452 : vector<1x64xf32> to vector<1x64xbf16>
    %cst_134 = arith.constant dense<0.000000e+00> : vector<1x256xf32>
    %466 = tpu.matmul %465, %277, %cst_134 {dimension_numbers = #tpu.dot_dimension_numbers<[1], [0], [0], [1], [0, 0, 1, 1], [], []>} : vector<1x64xbf16>, vector<64x256xbf16>, vector<1x256xf32> -> vector<1x256xf32>
    %467 = arith.addf %464, %466 : vector<1x256xf32>
    %468 = arith.negf %467 : vector<1x256xf32>
    %469 = math.exp %468 : vector<1x256xf32>
    %cst_135 = arith.constant 1.000000e+00 : f32
    %470 = vector.broadcast %cst_135 : f32 to vector<1x256xf32>
    %471 = arith.addf %470, %469 : vector<1x256xf32>
    %472 = arith.divf %470, %471 : vector<1x256xf32>
    %473 = math.tanh %467 : vector<1x256xf32>
    %474 = vector.extract_strided_slice %472 {offsets = [0, 0], sizes = [1, 64], strides = [1, 1]} : vector<1x256xf32> to vector<1x64xf32>
    %475 = vector.extract_strided_slice %472 {offsets = [0, 64], sizes = [1, 64], strides = [1, 1]} : vector<1x256xf32> to vector<1x64xf32>
    %476 = vector.extract_strided_slice %473 {offsets = [0, 128], sizes = [1, 64], strides = [1, 1]} : vector<1x256xf32> to vector<1x64xf32>
    %477 = vector.extract_strided_slice %472 {offsets = [0, 192], sizes = [1, 64], strides = [1, 1]} : vector<1x256xf32> to vector<1x64xf32>
    %478 = arith.mulf %475, %450 : vector<1x64xf32>
    %479 = arith.mulf %474, %476 : vector<1x64xf32>
    %480 = arith.addf %478, %479 : vector<1x64xf32>
    %481 = math.tanh %480 : vector<1x64xf32>
    %482 = arith.mulf %477, %481 : vector<1x64xf32>
    %483 = vector.extract_strided_slice %482 {offsets = [0, 0], sizes = [1, 32], strides = [1, 1]} : vector<1x64xf32> to vector<1x32xf32>
    %484 = arith.index_cast %c6_i32_130 : i32 to index
    %c0_136 = arith.constant 0 : index
    %485 = vector.load %arg11[%484, %c0_136] : memref<8x64xf32, #tpu.memory_space<vmem>>, vector<1x32xf32>
    tpu.vector_store %arg11[%484, %c0_136], %483 {strides = array<i32>} : memref<8x64xf32, #tpu.memory_space<vmem>>, vector<1x32xf32>,
    %486 = vector.extract_strided_slice %482 {offsets = [0, 32], sizes = [1, 32], strides = [1, 1]} : vector<1x64xf32> to vector<1x32xf32>
    %487 = arith.index_cast %459 : i32 to index
    %c32_137 = arith.constant 32 : index
    %488 = vector.load %arg11[%487, %c32_137] : memref<8x64xf32, #tpu.memory_space<vmem>>, vector<1x32xf32>
    tpu.vector_store %arg11[%487, %c32_137], %486 {strides = array<i32>} : memref<8x64xf32, #tpu.memory_space<vmem>>, vector<1x32xf32>,
    %c7_i32_138 = arith.constant 7 : i32
    %c7_i32_139 = arith.constant 7 : i32
    %489 = arith.subi %c7_i32_139, %c7_i32_138 : i32
    %490 = arith.index_cast %c7_i32_138 : i32 to index
    %c0_140 = arith.constant 0 : index
    %491 = vector.load %arg10[%490, %c0_140] : memref<8x256xf32, #tpu.memory_space<vmem>>, vector<1x256xf32>
    %492 = arith.index_cast %489 : i32 to index
    %c0_141 = arith.constant 0 : index
    %493 = vector.load %arg10[%492, %c0_141] : memref<8x256xf32, #tpu.memory_space<vmem>>, vector<1x256xf32>
    %494 = arith.select %18, %491, %493 : vector<1x256xi1>, vector<1x256xf32>
    %495 = arith.truncf %482 : vector<1x64xf32> to vector<1x64xbf16>
    %cst_142 = arith.constant dense<0.000000e+00> : vector<1x256xf32>
    %496 = tpu.matmul %495, %277, %cst_142 {dimension_numbers = #tpu.dot_dimension_numbers<[1], [0], [0], [1], [0, 0, 1, 1], [], []>} : vector<1x64xbf16>, vector<64x256xbf16>, vector<1x256xf32> -> vector<1x256xf32>
    %497 = arith.addf %494, %496 : vector<1x256xf32>
    %498 = arith.negf %497 : vector<1x256xf32>
    %499 = math.exp %498 : vector<1x256xf32>
    %cst_143 = arith.constant 1.000000e+00 : f32
    %500 = vector.broadcast %cst_143 : f32 to vector<1x256xf32>
    %501 = arith.addf %500, %499 : vector<1x256xf32>
    %502 = arith.divf %500, %501 : vector<1x256xf32>
    %503 = math.tanh %497 : vector<1x256xf32>
    %504 = vector.extract_strided_slice %502 {offsets = [0, 0], sizes = [1, 64], strides = [1, 1]} : vector<1x256xf32> to vector<1x64xf32>
    %505 = vector.extract_strided_slice %502 {offsets = [0, 64], sizes = [1, 64], strides = [1, 1]} : vector<1x256xf32> to vector<1x64xf32>
    %506 = vector.extract_strided_slice %503 {offsets = [0, 128], sizes = [1, 64], strides = [1, 1]} : vector<1x256xf32> to vector<1x64xf32>
    %507 = vector.extract_strided_slice %502 {offsets = [0, 192], sizes = [1, 64], strides = [1, 1]} : vector<1x256xf32> to vector<1x64xf32>
    %508 = arith.mulf %505, %480 : vector<1x64xf32>
    %509 = arith.mulf %504, %506 : vector<1x64xf32>
    %510 = arith.addf %508, %509 : vector<1x64xf32>
    %511 = math.tanh %510 : vector<1x64xf32>
    %512 = arith.mulf %507, %511 : vector<1x64xf32>
    %513 = vector.extract_strided_slice %512 {offsets = [0, 0], sizes = [1, 32], strides = [1, 1]} : vector<1x64xf32> to vector<1x32xf32>
    %514 = arith.index_cast %c7_i32_138 : i32 to index
    %c0_144 = arith.constant 0 : index
    %515 = vector.load %arg11[%514, %c0_144] : memref<8x64xf32, #tpu.memory_space<vmem>>, vector<1x32xf32>
    tpu.vector_store %arg11[%514, %c0_144], %513 {strides = array<i32>} : memref<8x64xf32, #tpu.memory_space<vmem>>, vector<1x32xf32>,
    %516 = vector.extract_strided_slice %512 {offsets = [0, 32], sizes = [1, 32], strides = [1, 1]} : vector<1x64xf32> to vector<1x32xf32>
    %517 = arith.index_cast %489 : i32 to index
    %c32_145 = arith.constant 32 : index
    %518 = vector.load %arg11[%517, %c32_145] : memref<8x64xf32, #tpu.memory_space<vmem>>, vector<1x32xf32>
    tpu.vector_store %arg11[%517, %c32_145], %516 {strides = array<i32>} : memref<8x64xf32, #tpu.memory_space<vmem>>, vector<1x32xf32>,
    %c8_i32_146 = arith.constant 8 : i32
    %c0_147 = arith.constant 0 : index
    %c0_148 = arith.constant 0 : index
    %519 = vector.load %arg11[%c0_147, %c0_148] : memref<8x64xf32, #tpu.memory_space<vmem>>, vector<8x64xf32>
    %520 = arith.truncf %519 : vector<8x64xf32> to vector<8x64xbf16>
    %c0_149 = arith.constant 0 : index
    %c0_150 = arith.constant 0 : index
    %521 = vector.load %arg7[%c0_149, %c0_150] : memref<64x32xbf16, #tpu.memory_space<vmem>>, vector<64x32xbf16>
    %cst_151 = arith.constant dense<0.000000e+00> : vector<8x32xf32>
    %522 = tpu.matmul %520, %521, %cst_151 {dimension_numbers = #tpu.dot_dimension_numbers<[1], [0], [0], [1], [0, 0, 1, 1], [], []>} : vector<8x64xbf16>, vector<64x32xbf16>, vector<8x32xf32> -> vector<8x32xf32>
    %c0_152 = arith.constant 0 : index
    %c0_153 = arith.constant 0 : index
    %523 = vector.load %arg8[%c0_152, %c0_153] : memref<1x32xf32, #tpu.memory_space<vmem>>, vector<1x32xf32>
    %524 = vector.broadcast %523 : vector<1x32xf32> to vector<8x32xf32>
    %525 = arith.addf %522, %524 : vector<8x32xf32>
    %c0_154 = arith.constant 0 : index
    %c0_155 = arith.constant 0 : index
    %526 = vector.load %arg9[%c0_154, %c0_155] : memref<8x32xf32, #tpu.memory_space<vmem>>, vector<8x32xf32>
    tpu.vector_store %arg9[%c0_154, %c0_155], %525 {strides = array<i32>} : memref<8x32xf32, #tpu.memory_space<vmem>>, vector<8x32xf32>,
    return
  }
}

</mosaic_0001>

<llo_original>
// kernel: tpu_custom_call.1
$region0: #{tpu_custom_call.1}
  #allocation0 [shape = 'u32[]', space=smem, size = 0x4, offset = 0x4, fixed_abs, tag = 'smem constant byte address 0x4 - core index']
  #allocation1 [shape = 'u32[144,128]{1,0:T(1,128)}', space=vmem, size = 0x12000, scoped, tag = 'internal scratch']
  #allocation2 [shape = 'f32[8,256]{1,0:T(8,128)}', space=vmem, size = 0x2000, scoped, tag = 'scratch operand']
  #allocation3 [shape = 'f32[8,64]{1,0:T(8,128)}', space=vmem, size = 0x1000, scoped, tag = 'scratch operand']
  %s0 = inlined_call_operand.hbm [shape: f32[8,32], index: 0, kind: input, shape index: {}]
  %s1 = inlined_call_operand.hbm [shape: bf16[32,256], index: 1, kind: input, shape index: {}]
  %s2 = inlined_call_operand.hbm [shape: bf16[64,256], index: 2, kind: input, shape index: {}]
  %s3 = inlined_call_operand.vmem [shape: f32[1,256], index: 3, kind: input, shape index: {}]
  %s4 = inlined_call_operand.hbm [shape: bf16[64,256], index: 4, kind: input, shape index: {}]
  %s5 = inlined_call_operand.vmem [shape: bf16[64,256], index: 5, kind: input, shape index: {}]
  %s6 = inlined_call_operand.vmem [shape: f32[1,256], index: 6, kind: input, shape index: {}]
  %s7 = inlined_call_operand.vmem [shape: bf16[64,32], index: 7, kind: input, shape index: {}]
  %s8 = inlined_call_operand.vmem [shape: f32[1,32], index: 8, kind: input, shape index: {}]
  %s9 = inlined_call_operand.hbm [shape: f32[8,32], index: 9, kind: output, shape index: {}]
  %s10 = sld [smem:[#allocation0]]
  $region62: #{tpu_custom_call.1} parent=0
    _
  %s12 = ssub.s32 1, %s10
  %s13 = scalar_select 0, %s12, %s10
  $region1: #{tpu_custom_call.1} parent=0
    #allocation4 [shape = 'u8[4096]{0}', space=vmem, size = 0x1000, scoped, tag = 'input window, operand 0, single buffered']
    #allocation5 [shape = 's32[1]{0}', space=sflag, size = 0x4, scoped, tag = 'scoped memory for tpu_custom_call.1']
    #allocation6 [shape = 's32[1]{0}', space=sflag, size = 0x4, scoped, tag = 'scoped memory for tpu_custom_call.1']
    #allocation7 [shape = 'u8[16384]{0}', space=vmem, size = 0x4000, scoped, tag = 'input window, operand 1, single buffered']
    #allocation8 [shape = 's32[1]{0}', space=sflag, size = 0x4, scoped, tag = 'scoped memory for tpu_custom_call.1']
    #allocation9 [shape = 'u8[32768]{0}', space=vmem, size = 0x8000, scoped, tag = 'input window, operand 2, single buffered']
    #allocation10 [shape = 'u8[32768]{0}', space=vmem, size = 0x8000, scoped, tag = 'input window, operand 4, single buffered']
    #allocation11 [shape = 's32[1]{0}', space=sflag, size = 0x4, scoped, tag = 'scoped memory for tpu_custom_call.1']
    #allocation12 [shape = 'u8[4096]{0}', space=vmem, size = 0x1000, scoped, tag = 'output window, operand 0, single buffered']
    %14 = vsyncpa [#allocation5], 0
    %15 = vsyncpa [#allocation8], 0
    %16 = vsyncpa [#allocation11], 0
    %17 = vsyncpa [#allocation6], 0
    // Predicated region
    $region2: #{tpu_custom_call.1} parent=1 // pred_check
      _
    $region3: #{tpu_custom_call.1} parent=1 // pred_check_branch
      %19 = sbr.rel (0) target = $region5
    $region4: #{tpu_custom_call.1} parent=1 // pred_region
      %s21 = ssub.s32 128, 128
      %22 = vsyncadd [#allocation5], %s21
      %s24 = sshll.u32 [#allocation4], 4
      %s25 = int_to_ptr.vmem [resolvable:$true] %s24
      %27 = dma.hbm_to_vmem [thread:$0]  %s0, 128, %s25, [#allocation5]
    $region5: #{tpu_custom_call.1} parent=1 // pred_fallthru
      _
    // Predicated region
    $region6: #{tpu_custom_call.1} parent=1 // pred_check
      _
    $region7: #{tpu_custom_call.1} parent=1 // pred_check_branch
      %29 = sbr.rel (0) target = $region9
    $region8: #{tpu_custom_call.1} parent=1 // pred_region
      %s31 = ssub.s32 512, 512
      %32 = vsyncadd [#allocation8], %s31
      %s33 = sshll.u32 [#allocation7], 4
      %s34 = int_to_ptr.vmem [resolvable:$true] %s33
      %39 = dma.hbm_to_vmem [thread:$0]  %s1, 512, %s34, [#allocation8], 128, 128, 8
    $region9: #{tpu_custom_call.1} parent=1 // pred_fallthru
      _
    // Predicated region
    $region10: #{tpu_custom_call.1} parent=1 // pred_check
      _
    $region11: #{tpu_custom_call.1} parent=1 // pred_check_branch
      %41 = sbr.rel (0) target = $region13
    $region12: #{tpu_custom_call.1} parent=1 // pred_region
      %s43 = ssub.s32 1024, 1024
      %44 = vsyncadd [#allocation8], %s43
      %s45 = sshll.u32 [#allocation9], 4
      %s46 = int_to_ptr.vmem [resolvable:$true] %s45
      %51 = dma.hbm_to_vmem [thread:$0]  %s2, 1024, %s46, [#allocation8], 128, 128, 8
    $region13: #{tpu_custom_call.1} parent=1 // pred_fallthru
      _
    // Predicated region
    $region14: #{tpu_custom_call.1} parent=1 // pred_check
      _
    $region15: #{tpu_custom_call.1} parent=1 // pred_check_branch
      %53 = sbr.rel (0) target = $region17
    $region16: #{tpu_custom_call.1} parent=1 // pred_region
      _
    $region17: #{tpu_custom_call.1} parent=1 // pred_fallthru
      _
    // Predicated region
    $region18: #{tpu_custom_call.1} parent=1 // pred_check
      _
    $region19: #{tpu_custom_call.1} parent=1 // pred_check_branch
      %55 = sbr.rel (0) target = $region21
    $region20: #{tpu_custom_call.1} parent=1 // pred_region
      %s57 = ssub.s32 1024, 1024
      %58 = vsyncadd [#allocation11], %s57
      %s59 = sshll.u32 [#allocation10], 4
      %s60 = int_to_ptr.vmem [resolvable:$true] %s59
      %65 = dma.hbm_to_vmem [thread:$0]  %s4, 1024, %s60, [#allocation11], 128, 128, 8
    $region21: #{tpu_custom_call.1} parent=1 // pred_fallthru
      _
    // Predicated region
    $region22: #{tpu_custom_call.1} parent=1 // pred_check
      _
    $region23: #{tpu_custom_call.1} parent=1 // pred_check_branch
      %67 = sbr.rel (0) target = $region25
    $region24: #{tpu_custom_call.1} parent=1 // pred_region
      _
    $region25: #{tpu_custom_call.1} parent=1 // pred_fallthru
      _
    // Predicated region
    $region26: #{tpu_custom_call.1} parent=1 // pred_check
      _
    $region27: #{tpu_custom_call.1} parent=1 // pred_check_branch
      %69 = sbr.rel (0) target = $region29
    $region28: #{tpu_custom_call.1} parent=1 // pred_region
      _
    $region29: #{tpu_custom_call.1} parent=1 // pred_fallthru
      _
    // Predicated region
    $region30: #{tpu_custom_call.1} parent=1 // pred_check
      _
    $region31: #{tpu_custom_call.1} parent=1 // pred_check_branch
      %71 = sbr.rel (0) target = $region33
    $region32: #{tpu_custom_call.1} parent=1 // pred_region
      _
    $region33: #{tpu_custom_call.1} parent=1 // pred_fallthru
      _
    // Predicated region
    $region34: #{tpu_custom_call.1} parent=1 // pred_check
      _
    $region35: #{tpu_custom_call.1} parent=1 // pred_check_branch
      %73 = sbr.rel (0) target = $region37
    $region36: #{tpu_custom_call.1} parent=1 // pred_region
      _
    $region37: #{tpu_custom_call.1} parent=1 // pred_fallthru
      _
    // Predicated region
    $region38: #{tpu_custom_call.1} parent=1 // pred_check
      _
    $region39: #{tpu_custom_call.1} parent=1 // pred_check_branch
      %75 = sbr.rel (0) target = $region41
    $region40: #{tpu_custom_call.1} parent=1 // pred_region
      %76 = dma.done [#allocation5], 128
    $region41: #{tpu_custom_call.1} parent=1 // pred_fallthru
      _
    // Predicated region
    $region42: #{tpu_custom_call.1} parent=1 // pred_check
      _
    $region43: #{tpu_custom_call.1} parent=1 // pred_check_branch
      %78 = sbr.rel (0) target = $region45
    $region44: #{tpu_custom_call.1} parent=1 // pred_region
      %79 = dma.done [#allocation8], 512
    $region45: #{tpu_custom_call.1} parent=1 // pred_fallthru
      _
    // Predicated region
    $region46: #{tpu_custom_call.1} parent=1 // pred_check
      _
    $region47: #{tpu_custom_call.1} parent=1 // pred_check_branch
      %81 = sbr.rel (0) target = $region49
    $region48: #{tpu_custom_call.1} parent=1 // pred_region
      %82 = dma.done [#allocation8], 1024
    $region49: #{tpu_custom_call.1} parent=1 // pred_fallthru
      _
    // Predicated region
    $region50: #{tpu_custom_call.1} parent=1 // pred_check
      _
    $region51: #{tpu_custom_call.1} parent=1 // pred_check_branch
      %84 = sbr.rel (0) target = $region53
    $region52: #{tpu_custom_call.1} parent=1 // pred_region
      %85 = dma.done [#allocation11], 1024
    $region53: #{tpu_custom_call.1} parent=1 // pred_fallthru
      _
    %v87 = vlaneseq
    %v88 = vand.u32 %v87, 127
    %v89 = vadd.s32 %v88, 128
    %vm90 = vcmp.lt.s32.totalorder %v88, 0
    %v91 = vsub.s32 0, %v88
    %v92 = vsel %vm90, %v91, %v88
    %v93 = vshrl.u32 %v92, 6
    %v94 = vand.u32 %v92, 63
    %v95 = vsub.s32 0, %v94
    %v96 = vsel %vm90, %v95, %v94
    %vm97 = vcmp.lt.s32.totalorder %v89, 0
    %v98 = vsub.s32 0, %v89
    %v99 = vsel %vm97, %v98, %v89
    %v100 = vshrl.u32 %v99, 6
    %v101 = vand.u32 %v99, 63
    %v102 = vsub.s32 0, %v101
    %v103 = vsel %vm97, %v102, %v101
    %vm104 = vcmp.ne.s32.totalorder %v96, 0
    %vm105 = vcmp.ne.s32.totalorder %v103, 0
    %vm106 = vcmp.lt.s32.totalorder %v96, 0
    %vm107 = vcmp.lt.s32.totalorder %v103, 0
    %vm108 = vmand %vm106, %vm104
    %vm109 = vmand %vm107, %vm105
    %v110 = vadd.s32 %v96, 64
    %v111 = vadd.s32 %v103, 64
    %v112 = vsel %vm108, %v110, %v96
    %v113 = vsel %vm109, %v111, %v103
    %vm114 = vcmp.lt.s32.totalorder %v112, 32
    %vm115 = vcmp.lt.s32.totalorder %v113, 32
    %v116 = vld [vmem:[#allocation4] sm:$0xff]
    %v117 = vpack.c.bf16 %v116, %v116
    %v118 = vld [vmem:[#allocation7] sm:$0xff]
    %v119 = vld [vmem:[#allocation7 + $0x8] sm:$0xff]
    %v120 = vld [vmem:[#allocation7 + $0x10] sm:$0xff]
    %v121 = vld [vmem:[#allocation7 + $0x18] sm:$0xff]
    %v122 = vld [vmem:[%s3] sm:$0x3]
    %v124 = vlaneseq
    %v125 = vshrl.u32 %v124, 7
    %v126 = vsub.s32 0, %v125
    %v127 = vrot.slane %v122, %v126
    %v128 = vlaneseq
    %v129 = vshrl.u32 %v128, 7
    %v130 = vsub.s32 1, %v129
    %v131 = vrot.slane %v122, %v130
    %v138 = vunpack.c.l.b16 %v118
    %v139 = vunpack.c.h.b16 %v118
    %v140 = vunpack.c.l.b16 %v119
    %v141 = vunpack.c.h.b16 %v119
    %v142 = vunpack.c.l.b16 %v120
    %v143 = vunpack.c.h.b16 %v120
    %v144 = vunpack.c.l.b16 %v121
    %v145 = vunpack.c.h.b16 %v121
    %v146 = vpack.c.b16 %v140, %v138
    %v147 = vpack.c.b16 %v141, %v139
    %v148 = vpack.c.b16 %v144, %v142
    %v149 = vpack.c.b16 %v145, %v143
    %vm154 = vcmask 261120
    %v156 = vsel %vm154, %v117, 0
    %158 = vmatprep.subr.bf16.mxu0 %v147
    %159 = vmatpush1.bf16.msra.mxu0 %v146
    %160 = vmatprep.subr.bf16.mxu0 %v149
    %161 = vmatpush1.bf16.msra.mxu0 %v148
    %162 = vmatprep.subr.bf16.mxu0 0
    %163 = vmatpush1.bf16.msra.mxu0 0
    %164 = vmatprep.subr.bf16.mxu0 0
    %165 = vmatpush1.bf16.msra.mxu0 0
    %166 = vmatprep.subr.bf16.mxu0 0
    %167 = vmatpush1.bf16.msra.mxu0 0
    %168 = vmatprep.subr.bf16.mxu0 0
    %169 = vmatpush1.bf16.msra.mxu0 0
    %170 = vmatprep.subr.bf16.mxu0 0
    %171 = vmatpush1.bf16.msra.mxu0 0
    %172 = vmatprep.subr.bf16.mxu0 0
    %173 = vmatpush1.bf16.msra.mxu0 0
    %174 = vmatprep.subr.bf16.mxu0 0
    %175 = vmatpush1.bf16.msra.mxu0 0
    %176 = vmatprep.subr.bf16.mxu0 0
    %177 = vmatpush1.bf16.msra.mxu0 0
    %178 = vmatprep.subr.bf16.mxu0 0
    %179 = vmatpush1.bf16.msra.mxu0 0
    %180 = vmatprep.subr.bf16.mxu0 0
    %181 = vmatpush1.bf16.msra.mxu0 0
    %182 = vmatprep.subr.bf16.mxu0 0
    %183 = vmatpush1.bf16.msra.mxu0 0
    %184 = vmatprep.subr.bf16.mxu0 0
    %185 = vmatpush1.bf16.msra.mxu0 0
    %186 = vmatprep.subr.bf16.mxu0 0
    %187 = vmatpush1.bf16.msra.mxu0 0
    %188 = vmatprep.subr.bf16.mxu0 0
    %189 = vmatpush1.bf16.msra.mxu0 0
    %190 = vmatprep.mubr.bf16.mxu0 0
    %191 = vmatmul.mubr.bf16.gmra.mrb[0].mxu0 %v156
    %v192 = vpop.f32.mrb[0].mxu0
    %v193 = vadd.f32 %v127, %v192
    %v194 = vpop.f32.mrb[0].mxu0
    %v195 = vadd.f32 %v131, %v194
    %v196 = vpop.f32.mrb[0].mxu0
    %v197 = vpop.f32.mrb[0].mxu0
    %198 = vdwg.mxu0
    %199 = vst [vmem:[#allocation2] sm:$0xff] %v193
    %200 = vst [vmem:[#allocation2 + $0x8] sm:$0xff] %v195
    %v201 = vld [vmem:[#allocation9] sm:$0xff]
    %v202 = vld [vmem:[#allocation9 + $0x8] sm:$0xff]
    %v203 = vld [vmem:[#allocation9 + $0x10] sm:$0xff]
    %v204 = vld [vmem:[#allocation9 + $0x18] sm:$0xff]
    %v205 = vld [vmem:[#allocation9 + $0x20] sm:$0xff]
    %v206 = vld [vmem:[#allocation9 + $0x28] sm:$0xff]
    %v207 = vld [vmem:[#allocation9 + $0x30] sm:$0xff]
    %v208 = vld [vmem:[#allocation9 + $0x38] sm:$0xff]
    %v209 = vld [vmem:[#allocation2] ss:$8 sm:$0x3]
    %s210 = scalar_lea.vmem [#allocation2], 7
    %v211 = vld [vmem:[%s210] ss:$8 sm:$0x3]
    %v213 = vlaneseq
    %v214 = vshrl.u32 %v213, 7
    %v215 = vsub.s32 0, %v214
    %v216 = vrot.slane %v209, %v215
    %v217 = vlaneseq
    %v218 = vshrl.u32 %v217, 7
    %v219 = vsub.s32 1, %v218
    %v220 = vrot.slane %v209, %v219
    %v224 = vlaneseq
    %v225 = vshrl.u32 %v224, 7
    %v226 = vsub.s32 0, %v225
    %v227 = vrot.slane %v211, %v226
    %v228 = vlaneseq
    %v229 = vshrl.u32 %v228, 7
    %v230 = vsub.s32 1, %v229
    %v231 = vrot.slane %v211, %v230
    %v234 = vsel %vm114, %v216, %v227
    %v235 = vsel %vm115, %v220, %v231
    %v244 = vunpack.c.l.b16 %v201
    %v245 = vunpack.c.h.b16 %v201
    %v246 = vunpack.c.l.b16 %v202
    %v247 = vunpack.c.h.b16 %v202
    %v248 = vunpack.c.l.b16 %v203
    %v249 = vunpack.c.h.b16 %v203
    %v250 = vunpack.c.l.b16 %v204
    %v251 = vunpack.c.h.b16 %v204
    %v252 = vunpack.c.l.b16 %v205
    %v253 = vunpack.c.h.b16 %v205
    %v254 = vunpack.c.l.b16 %v206
    %v255 = vunpack.c.h.b16 %v206
    %v256 = vunpack.c.l.b16 %v207
    %v257 = vunpack.c.h.b16 %v207
    %v258 = vunpack.c.l.b16 %v208
    %v259 = vunpack.c.h.b16 %v208
    %v260 = vpack.c.b16 %v246, %v244
    %v261 = vpack.c.b16 %v247, %v245
    %v262 = vpack.c.b16 %v250, %v248
    %v263 = vpack.c.b16 %v251, %v249
    %v264 = vpack.c.b16 %v254, %v252
    %v265 = vpack.c.b16 %v255, %v253
    %v266 = vpack.c.b16 %v258, %v256
    %v267 = vpack.c.b16 %v259, %v257
    %vm276 = vcmask 523264
    %v278 = vsel %vm276, 0, 0
    %280 = vmatprep.subr.bf16.mxu0 %v261
    %281 = vmatpush1.bf16.msra.mxu0 %v260
    %282 = vmatprep.subr.bf16.mxu0 %v263
    %283 = vmatpush1.bf16.msra.mxu0 %v262
    %284 = vmatprep.subr.bf16.mxu0 %v265
    %285 = vmatpush1.bf16.msra.mxu0 %v264
    %286 = vmatprep.subr.bf16.mxu0 %v267
    %287 = vmatpush1.bf16.msra.mxu0 %v266
    %288 = vmatprep.subr.bf16.mxu0 0
    %289 = vmatpush1.bf16.msra.mxu0 0
    %290 = vmatprep.subr.bf16.mxu0 0
    %291 = vmatpush1.bf16.msra.mxu0 0
    %292 = vmatprep.subr.bf16.mxu0 0
    %293 = vmatpush1.bf16.msra.mxu0 0
    %294 = vmatprep.subr.bf16.mxu0 0
    %295 = vmatpush1.bf16.msra.mxu0 0
    %296 = vmatprep.subr.bf16.mxu0 0
    %297 = vmatpush1.bf16.msra.mxu0 0
    %298 = vmatprep.subr.bf16.mxu0 0
    %299 = vmatpush1.bf16.msra.mxu0 0
    %300 = vmatprep.subr.bf16.mxu0 0
    %301 = vmatpush1.bf16.msra.mxu0 0
    %302 = vmatprep.subr.bf16.mxu0 0
    %303 = vmatpush1.bf16.msra.mxu0 0
    %304 = vmatprep.subr.bf16.mxu0 0
    %305 = vmatpush1.bf16.msra.mxu0 0
    %306 = vmatprep.subr.bf16.mxu0 0
    %307 = vmatpush1.bf16.msra.mxu0 0
    %308 = vmatprep.subr.bf16.mxu0 0
    %309 = vmatpush1.bf16.msra.mxu0 0
    %310 = vmatprep.subr.bf16.mxu0 0
    %311 = vmatpush1.bf16.msra.mxu0 0
    %312 = vmatprep.mubr.bf16.mxu0 0
    %313 = vmatmul.mubr.bf16.gmra.mrb[0].mxu0 %v278
    %v314 = vpop.f32.mrb[0].mxu0
    %v315 = vadd.f32 0.0, %v314
    %v316 = vpop.f32.mrb[0].mxu0
    %v317 = vadd.f32 0.0, %v316
    %v318 = vpop.f32.mrb[0].mxu0
    %v319 = vpop.f32.mrb[0].mxu0
    %320 = vdwg.mxu0
    %v321 = vadd.f32 %v234, %v315
    %v322 = vadd.f32 %v235, %v317
    %v323 = vxor.u32 %v321, 2147483648
    %v324 = vxor.u32 %v322, 2147483648
    %v325 = vmul.f32 %v323, 1.442695
    %v326 = vpow.pop %v325
    %v327 = vmul.f32 %v324, 1.442695
    %v328 = vpow.pop %v327
    %v329 = vadd.f32 %v326, 1.0
    %v330 = vadd.f32 %v328, 1.0
    %v331 = vrcp.pop %v329
    %v332 = vmul.f32 1.0, %v331
    %v333 = vrcp.pop %v330
    %v334 = vmul.f32 1.0, %v333
    %v335 = vtanh.pop %v322
    %v336 = vmul.f32 %v332, 0.0
    %v337 = vmul.f32 %v332, %v335
    %339 = vrot.lane.b32.xlu0 %v337, 64
    %v340 = vpop.permute.xlu0 %339
    %v342 = vadd.f32 %v336, %v340
    %v343 = vtanh.pop %v342
    %v344 = vmul.f32 %v334, %v343
    %346 = vrot.lane.b32.xlu0 %v344, 64
    %v347 = vpop.permute.xlu0 %346
    %vm349 = vcmask 253952
    %350 = vst.msk [vmem:[#allocation3] sm:$0x1] %vm349, %v347
    %vm351 = vcmask 516352
    %352 = vst.msk [vmem:[#allocation3 + $0x7] sm:$0x1] %vm351, %v347
    %s353 = scalar_lea.vmem [#allocation2], 1
    %v354 = vld [vmem:[%s353] ss:$8 sm:$0x3]
    %s355 = scalar_lea.vmem [#allocation2], 6
    %v356 = vld [vmem:[%s355] ss:$8 sm:$0x3]
    %v358 = vlaneseq
    %v359 = vshrl.u32 %v358, 7
    %v360 = vsub.s32 0, %v359
    %v361 = vrot.slane %v354, %v360
    %v362 = vlaneseq
    %v363 = vshrl.u32 %v362, 7
    %v364 = vsub.s32 1, %v363
    %v365 = vrot.slane %v354, %v364
    %v369 = vlaneseq
    %v370 = vshrl.u32 %v369, 7
    %v371 = vsub.s32 0, %v370
    %v372 = vrot.slane %v356, %v371
    %v373 = vlaneseq
    %v374 = vshrl.u32 %v373, 7
    %v375 = vsub.s32 1, %v374
    %v376 = vrot.slane %v356, %v375
    %v379 = vsel %vm114, %v361, %v372
    %v380 = vsel %vm115, %v365, %v376
    %v381 = vpack.c.bf16 %v344, %v344
    %383 = vrot.lane.b32.xlu0 %v381, 64
    %v384 = vpop.permute.xlu0 %383
    %v386 = vsel %vm276, %v384, 0
    %388 = vmatprep.subr.bf16.mxu0 %v261
    %389 = vmatpush1.bf16.msra.mxu0 %v260
    %390 = vmatprep.subr.bf16.mxu0 %v263
    %391 = vmatpush1.bf16.msra.mxu0 %v262
    %392 = vmatprep.subr.bf16.mxu0 %v265
    %393 = vmatpush1.bf16.msra.mxu0 %v264
    %394 = vmatprep.subr.bf16.mxu0 %v267
    %395 = vmatpush1.bf16.msra.mxu0 %v266
    %396 = vmatprep.subr.bf16.mxu0 0
    %397 = vmatpush1.bf16.msra.mxu0 0
    %398 = vmatprep.subr.bf16.mxu0 0
    %399 = vmatpush1.bf16.msra.mxu0 0
    %400 = vmatprep.subr.bf16.mxu0 0
    %401 = vmatpush1.bf16.msra.mxu0 0
    %402 = vmatprep.subr.bf16.mxu0 0
    %403 = vmatpush1.bf16.msra.mxu0 0
    %404 = vmatprep.subr.bf16.mxu0 0
    %405 = vmatpush1.bf16.msra.mxu0 0
    %406 = vmatprep.subr.bf16.mxu0 0
    %407 = vmatpush1.bf16.msra.mxu0 0
    %408 = vmatprep.subr.bf16.mxu0 0
    %409 = vmatpush1.bf16.msra.mxu0 0
    %410 = vmatprep.subr.bf16.mxu0 0
    %411 = vmatpush1.bf16.msra.mxu0 0
    %412 = vmatprep.subr.bf16.mxu0 0
    %413 = vmatpush1.bf16.msra.mxu0 0
    %414 = vmatprep.subr.bf16.mxu0 0
    %415 = vmatpush1.bf16.msra.mxu0 0
    %416 = vmatprep.subr.bf16.mxu0 0
    %417 = vmatpush1.bf16.msra.mxu0 0
    %418 = vmatprep.subr.bf16.mxu0 0
    %419 = vmatpush1.bf16.msra.mxu0 0
    %420 = vmatprep.mubr.bf16.mxu0 0
    %421 = vmatmul.mubr.bf16.gmra.mrb[0].mxu0 %v386
    %v422 = vpop.f32.mrb[0].mxu0
    %v423 = vadd.f32 0.0, %v422
    %v424 = vpop.f32.mrb[0].mxu0
    %v425 = vadd.f32 0.0, %v424
    %v426 = vpop.f32.mrb[0].mxu0
    %v427 = vpop.f32.mrb[0].mxu0
    %428 = vdwg.mxu0
    %v429 = vadd.f32 %v379, %v423
    %v430 = vadd.f32 %v380, %v425
    %v431 = vxor.u32 %v429, 2147483648
    %v432 = vxor.u32 %v430, 2147483648
    %v433 = vmul.f32 %v431, 1.442695
    %v434 = vpow.pop %v433
    %v435 = vmul.f32 %v432, 1.442695
    %v436 = vpow.pop %v435
    %v437 = vadd.f32 %v434, 1.0
    %v438 = vadd.f32 %v436, 1.0
    %v439 = vrcp.pop %v437
    %v440 = vmul.f32 1.0, %v439
    %v441 = vrcp.pop %v438
    %v442 = vmul.f32 1.0, %v441
    %v443 = vtanh.pop %v430
    %v444 = vmul.f32 %v440, %v342
    %v445 = vmul.f32 %v440, %v443
    %447 = vrot.lane.b32.xlu0 %v445, 64
    %v448 = vpop.permute.xlu0 %447
    %v450 = vadd.f32 %v444, %v448
    %v451 = vtanh.pop %v450
    %v452 = vmul.f32 %v442, %v451
    %454 = vrot.lane.b32.xlu0 %v452, 64
    %v455 = vpop.permute.xlu0 %454
    %457 = vst.msk [vmem:[#allocation3 + $0x1] sm:$0x1] %vm349, %v455
    %458 = vst.msk [vmem:[#allocation3 + $0x6] sm:$0x1] %vm351, %v455
    %s459 = scalar_lea.vmem [#allocation2], 2
    %v460 = vld [vmem:[%s459] ss:$8 sm:$0x3]
    %s461 = scalar_lea.vmem [#allocation2], 5
    %v462 = vld [vmem:[%s461] ss:$8 sm:$0x3]
    %v464 = vlaneseq
    %v465 = vshrl.u32 %v464, 7
    %v466 = vsub.s32 0, %v465
    %v467 = vrot.slane %v460, %v466
    %v468 = vlaneseq
    %v469 = vshrl.u32 %v468, 7
    %v470 = vsub.s32 1, %v469
    %v471 = vrot.slane %v460, %v470
    %v475 = vlaneseq
    %v476 = vshrl.u32 %v475, 7
    %v477 = vsub.s32 0, %v476
    %v478 = vrot.slane %v462, %v477
    %v479 = vlaneseq
    %v480 = vshrl.u32 %v479, 7
    %v481 = vsub.s32 1, %v480
    %v482 = vrot.slane %v462, %v481
    %v485 = vsel %vm114, %v467, %v478
    %v486 = vsel %vm115, %v471, %v482
    %v487 = vpack.c.bf16 %v452, %v452
    %489 = vrot.lane.b32.xlu0 %v487, 64
    %v490 = vpop.permute.xlu0 %489
    %v492 = vsel %vm276, %v490, 0
    %494 = vmatprep.subr.bf16.mxu0 %v261
    %495 = vmatpush1.bf16.msra.mxu0 %v260
    %496 = vmatprep.subr.bf16.mxu0 %v263
    %497 = vmatpush1.bf16.msra.mxu0 %v262
    %498 = vmatprep.subr.bf16.mxu0 %v265
    %499 = vmatpush1.bf16.msra.mxu0 %v264
    %500 = vmatprep.subr.bf16.mxu0 %v267
    %501 = vmatpush1.bf16.msra.mxu0 %v266
    %502 = vmatprep.subr.bf16.mxu0 0
    %503 = vmatpush1.bf16.msra.mxu0 0
    %504 = vmatprep.subr.bf16.mxu0 0
    %505 = vmatpush1.bf16.msra.mxu0 0
    %506 = vmatprep.subr.bf16.mxu0 0
    %507 = vmatpush1.bf16.msra.mxu0 0
    %508 = vmatprep.subr.bf16.mxu0 0
    %509 = vmatpush1.bf16.msra.mxu0 0
    %510 = vmatprep.subr.bf16.mxu0 0
    %511 = vmatpush1.bf16.msra.mxu0 0
    %512 = vmatprep.subr.bf16.mxu0 0
    %513 = vmatpush1.bf16.msra.mxu0 0
    %514 = vmatprep.subr.bf16.mxu0 0
    %515 = vmatpush1.bf16.msra.mxu0 0
    %516 = vmatprep.subr.bf16.mxu0 0
    %517 = vmatpush1.bf16.msra.mxu0 0
    %518 = vmatprep.subr.bf16.mxu0 0
    %519 = vmatpush1.bf16.msra.mxu0 0
    %520 = vmatprep.subr.bf16.mxu0 0
    %521 = vmatpush1.bf16.msra.mxu0 0
    %522 = vmatprep.subr.bf16.mxu0 0
    %523 = vmatpush1.bf16.msra.mxu0 0
    %524 = vmatprep.subr.bf16.mxu0 0
    %525 = vmatpush1.bf16.msra.mxu0 0
    %526 = vmatprep.mubr.bf16.mxu0 0
    %527 = vmatmul.mubr.bf16.gmra.mrb[0].mxu0 %v492
    %v528 = vpop.f32.mrb[0].mxu0
    %v529 = vadd.f32 0.0, %v528
    %v530 = vpop.f32.mrb[0].mxu0
    %v531 = vadd.f32 0.0, %v530
    %v532 = vpop.f32.mrb[0].mxu0
    %v533 = vpop.f32.mrb[0].mxu0
    %534 = vdwg.mxu0
    %v535 = vadd.f32 %v485, %v529
    %v536 = vadd.f32 %v486, %v531
    %v537 = vxor.u32 %v535, 2147483648
    %v538 = vxor.u32 %v536, 2147483648
    %v539 = vmul.f32 %v537, 1.442695
    %v540 = vpow.pop %v539
    %v541 = vmul.f32 %v538, 1.442695
    %v542 = vpow.pop %v541
    %v543 = vadd.f32 %v540, 1.0
    %v544 = vadd.f32 %v542, 1.0
    %v545 = vrcp.pop %v543
    %v546 = vmul.f32 1.0, %v545
    %v547 = vrcp.pop %v544
    %v548 = vmul.f32 1.0, %v547
    %v549 = vtanh.pop %v536
    %v550 = vmul.f32 %v546, %v450
    %v551 = vmul.f32 %v546, %v549
    %553 = vrot.lane.b32.xlu0 %v551, 64
    %v554 = vpop.permute.xlu0 %553
    %v556 = vadd.f32 %v550, %v554
    %v557 = vtanh.pop %v556
    %v558 = vmul.f32 %v548, %v557
    %560 = vrot.lane.b32.xlu0 %v558, 64
    %v561 = vpop.permute.xlu0 %560
    %563 = vst.msk [vmem:[#allocation3 + $0x2] sm:$0x1] %vm349, %v561
    %564 = vst.msk [vmem:[#allocation3 + $0x5] sm:$0x1] %vm351, %v561
    %s565 = scalar_lea.vmem [#allocation2], 3
    %v566 = vld [vmem:[%s565] ss:$8 sm:$0x3]
    %s567 = scalar_lea.vmem [#allocation2], 4
    %v568 = vld [vmem:[%s567] ss:$8 sm:$0x3]
    %v570 = vlaneseq
    %v571 = vshrl.u32 %v570, 7
    %v572 = vsub.s32 0, %v571
    %v573 = vrot.slane %v566, %v572
    %v574 = vlaneseq
    %v575 = vshrl.u32 %v574, 7
    %v576 = vsub.s32 1, %v575
    %v577 = vrot.slane %v566, %v576
    %v581 = vlaneseq
    %v582 = vshrl.u32 %v581, 7
    %v583 = vsub.s32 0, %v582
    %v584 = vrot.slane %v568, %v583
    %v585 = vlaneseq
    %v586 = vshrl.u32 %v585, 7
    %v587 = vsub.s32 1, %v586
    %v588 = vrot.slane %v568, %v587
    %v591 = vsel %vm114, %v573, %v584
    %v592 = vsel %vm115, %v577, %v588
    %v593 = vpack.c.bf16 %v558, %v558
    %595 = vrot.lane.b32.xlu0 %v593, 64
    %v596 = vpop.permute.xlu0 %595
    %v598 = vsel %vm276, %v596, 0
    %600 = vmatprep.subr.bf16.mxu0 %v261
    %601 = vmatpush1.bf16.msra.mxu0 %v260
    %602 = vmatprep.subr.bf16.mxu0 %v263
    %603 = vmatpush1.bf16.msra.mxu0 %v262
    %604 = vmatprep.subr.bf16.mxu0 %v265
    %605 = vmatpush1.bf16.msra.mxu0 %v264
    %606 = vmatprep.subr.bf16.mxu0 %v267
    %607 = vmatpush1.bf16.msra.mxu0 %v266
    %608 = vmatprep.subr.bf16.mxu0 0
    %609 = vmatpush1.bf16.msra.mxu0 0
    %610 = vmatprep.subr.bf16.mxu0 0
    %611 = vmatpush1.bf16.msra.mxu0 0
    %612 = vmatprep.subr.bf16.mxu0 0
    %613 = vmatpush1.bf16.msra.mxu0 0
    %614 = vmatprep.subr.bf16.mxu0 0
    %615 = vmatpush1.bf16.msra.mxu0 0
    %616 = vmatprep.subr.bf16.mxu0 0
    %617 = vmatpush1.bf16.msra.mxu0 0
    %618 = vmatprep.subr.bf16.mxu0 0
    %619 = vmatpush1.bf16.msra.mxu0 0
    %620 = vmatprep.subr.bf16.mxu0 0
    %621 = vmatpush1.bf16.msra.mxu0 0
    %622 = vmatprep.subr.bf16.mxu0 0
    %623 = vmatpush1.bf16.msra.mxu0 0
    %624 = vmatprep.subr.bf16.mxu0 0
    %625 = vmatpush1.bf16.msra.mxu0 0
    %626 = vmatprep.subr.bf16.mxu0 0
    %627 = vmatpush1.bf16.msra.mxu0 0
    %628 = vmatprep.subr.bf16.mxu0 0
    %629 = vmatpush1.bf16.msra.mxu0 0
    %630 = vmatprep.subr.bf16.mxu0 0
    %631 = vmatpush1.bf16.msra.mxu0 0
    %632 = vmatprep.mubr.bf16.mxu0 0
    %633 = vmatmul.mubr.bf16.gmra.mrb[0].mxu0 %v598
    %v634 = vpop.f32.mrb[0].mxu0
    %v635 = vadd.f32 0.0, %v634
    %v636 = vpop.f32.mrb[0].mxu0
    %v637 = vadd.f32 0.0, %v636
    %v638 = vpop.f32.mrb[0].mxu0
    %v639 = vpop.f32.mrb[0].mxu0
    %640 = vdwg.mxu0
    %v641 = vadd.f32 %v591, %v635
    %v642 = vadd.f32 %v592, %v637
    %v643 = vxor.u32 %v641, 2147483648
    %v644 = vxor.u32 %v642, 2147483648
    %v645 = vmul.f32 %v643, 1.442695
    %v646 = vpow.pop %v645
    %v647 = vmul.f32 %v644, 1.442695
    %v648 = vpow.pop %v647
    %v649 = vadd.f32 %v646, 1.0
    %v650 = vadd.f32 %v648, 1.0
    %v651 = vrcp.pop %v649
    %v652 = vmul.f32 1.0, %v651
    %v653 = vrcp.pop %v650
    %v654 = vmul.f32 1.0, %v653
    %v655 = vtanh.pop %v642
    %v656 = vmul.f32 %v652, %v556
    %v657 = vmul.f32 %v652, %v655
    %659 = vrot.lane.b32.xlu0 %v657, 64
    %v660 = vpop.permute.xlu0 %659
    %v662 = vadd.f32 %v656, %v660
    %v663 = vtanh.pop %v662
    %v664 = vmul.f32 %v654, %v663
    %666 = vrot.lane.b32.xlu0 %v664, 64
    %v667 = vpop.permute.xlu0 %666
    %669 = vst.msk [vmem:[#allocation3 + $0x3] sm:$0x1] %vm349, %v667
    %670 = vst.msk [vmem:[#allocation3 + $0x4] sm:$0x1] %vm351, %v667
    %v671 = vld [vmem:[%s567] ss:$8 sm:$0x3]
    %v672 = vld [vmem:[%s565] ss:$8 sm:$0x3]
    %v674 = vlaneseq
    %v675 = vshrl.u32 %v674, 7
    %v676 = vsub.s32 0, %v675
    %v677 = vrot.slane %v671, %v676
    %v678 = vlaneseq
    %v679 = vshrl.u32 %v678, 7
    %v680 = vsub.s32 1, %v679
    %v681 = vrot.slane %v671, %v680
    %v685 = vlaneseq
    %v686 = vshrl.u32 %v685, 7
    %v687 = vsub.s32 0, %v686
    %v688 = vrot.slane %v672, %v687
    %v689 = vlaneseq
    %v690 = vshrl.u32 %v689, 7
    %v691 = vsub.s32 1, %v690
    %v692 = vrot.slane %v672, %v691
    %v695 = vsel %vm114, %v677, %v688
    %v696 = vsel %vm115, %v681, %v692
    %v697 = vpack.c.bf16 %v664, %v664
    %699 = vrot.lane.b32.xlu0 %v697, 64
    %v700 = vpop.permute.xlu0 %699
    %v702 = vsel %vm276, %v700, 0
    %704 = vmatprep.subr.bf16.mxu0 %v261
    %705 = vmatpush1.bf16.msra.mxu0 %v260
    %706 = vmatprep.subr.bf16.mxu0 %v263
    %707 = vmatpush1.bf16.msra.mxu0 %v262
    %708 = vmatprep.subr.bf16.mxu0 %v265
    %709 = vmatpush1.bf16.msra.mxu0 %v264
    %710 = vmatprep.subr.bf16.mxu0 %v267
    %711 = vmatpush1.bf16.msra.mxu0 %v266
    %712 = vmatprep.subr.bf16.mxu0 0
    %713 = vmatpush1.bf16.msra.mxu0 0
    %714 = vmatprep.subr.bf16.mxu0 0
    %715 = vmatpush1.bf16.msra.mxu0 0
    %716 = vmatprep.subr.bf16.mxu0 0
    %717 = vmatpush1.bf16.msra.mxu0 0
    %718 = vmatprep.subr.bf16.mxu0 0
    %719 = vmatpush1.bf16.msra.mxu0 0
    %720 = vmatprep.subr.bf16.mxu0 0
    %721 = vmatpush1.bf16.msra.mxu0 0
    %722 = vmatprep.subr.bf16.mxu0 0
    %723 = vmatpush1.bf16.msra.mxu0 0
    %724 = vmatprep.subr.bf16.mxu0 0
    %725 = vmatpush1.bf16.msra.mxu0 0
    %726 = vmatprep.subr.bf16.mxu0 0
    %727 = vmatpush1.bf16.msra.mxu0 0
    %728 = vmatprep.subr.bf16.mxu0 0
    %729 = vmatpush1.bf16.msra.mxu0 0
    %730 = vmatprep.subr.bf16.mxu0 0
    %731 = vmatpush1.bf16.msra.mxu0 0
    %732 = vmatprep.subr.bf16.mxu0 0
    %733 = vmatpush1.bf16.msra.mxu0 0
    %734 = vmatprep.subr.bf16.mxu0 0
    %735 = vmatpush1.bf16.msra.mxu0 0
    %736 = vmatprep.mubr.bf16.mxu0 0
    %737 = vmatmul.mubr.bf16.gmra.mrb[0].mxu0 %v702
    %v738 = vpop.f32.mrb[0].mxu0
    %v739 = vadd.f32 0.0, %v738
    %v740 = vpop.f32.mrb[0].mxu0
    %v741 = vadd.f32 0.0, %v740
    %v742 = vpop.f32.mrb[0].mxu0
    %v743 = vpop.f32.mrb[0].mxu0
    %744 = vdwg.mxu0
    %v745 = vadd.f32 %v695, %v739
    %v746 = vadd.f32 %v696, %v741
    %v747 = vxor.u32 %v745, 2147483648
    %v748 = vxor.u32 %v746, 2147483648
    %v749 = vmul.f32 %v747, 1.442695
    %v750 = vpow.pop %v749
    %v751 = vmul.f32 %v748, 1.442695
    %v752 = vpow.pop %v751
    %v753 = vadd.f32 %v750, 1.0
    %v754 = vadd.f32 %v752, 1.0
    %v755 = vrcp.pop %v753
    %v756 = vmul.f32 1.0, %v755
    %v757 = vrcp.pop %v754
    %v758 = vmul.f32 1.0, %v757
    %v759 = vtanh.pop %v746
    %v760 = vmul.f32 %v756, %v662
    %v761 = vmul.f32 %v756, %v759
    %763 = vrot.lane.b32.xlu0 %v761, 64
    %v764 = vpop.permute.xlu0 %763
    %v766 = vadd.f32 %v760, %v764
    %v767 = vtanh.pop %v766
    %v768 = vmul.f32 %v758, %v767
    %770 = vrot.lane.b32.xlu0 %v768, 64
    %v771 = vpop.permute.xlu0 %770
    %773 = vst.msk [vmem:[#allocation3 + $0x4] sm:$0x1] %vm349, %v771
    %774 = vst.msk [vmem:[#allocation3 + $0x3] sm:$0x1] %vm351, %v771
    %v775 = vld [vmem:[%s461] ss:$8 sm:$0x3]
    %v776 = vld [vmem:[%s459] ss:$8 sm:$0x3]
    %v778 = vlaneseq
    %v779 = vshrl.u32 %v778, 7
    %v780 = vsub.s32 0, %v779
    %v781 = vrot.slane %v775, %v780
    %v782 = vlaneseq
    %v783 = vshrl.u32 %v782, 7
    %v784 = vsub.s32 1, %v783
    %v785 = vrot.slane %v775, %v784
    %v789 = vlaneseq
    %v790 = vshrl.u32 %v789, 7
    %v791 = vsub.s32 0, %v790
    %v792 = vrot.slane %v776, %v791
    %v793 = vlaneseq
    %v794 = vshrl.u32 %v793, 7
    %v795 = vsub.s32 1, %v794
    %v796 = vrot.slane %v776, %v795
    %v799 = vsel %vm114, %v781, %v792
    %v800 = vsel %vm115, %v785, %v796
    %v801 = vpack.c.bf16 %v768, %v768
    %803 = vrot.lane.b32.xlu0 %v801, 64
    %v804 = vpop.permute.xlu0 %803
    %v806 = vsel %vm276, %v804, 0
    %808 = vmatprep.subr.bf16.mxu0 %v261
    %809 = vmatpush1.bf16.msra.mxu0 %v260
    %810 = vmatprep.subr.bf16.mxu0 %v263
    %811 = vmatpush1.bf16.msra.mxu0 %v262
    %812 = vmatprep.subr.bf16.mxu0 %v265
    %813 = vmatpush1.bf16.msra.mxu0 %v264
    %814 = vmatprep.subr.bf16.mxu0 %v267
    %815 = vmatpush1.bf16.msra.mxu0 %v266
    %816 = vmatprep.subr.bf16.mxu0 0
    %817 = vmatpush1.bf16.msra.mxu0 0
    %818 = vmatprep.subr.bf16.mxu0 0
    %819 = vmatpush1.bf16.msra.mxu0 0
    %820 = vmatprep.subr.bf16.mxu0 0
    %821 = vmatpush1.bf16.msra.mxu0 0
    %822 = vmatprep.subr.bf16.mxu0 0
    %823 = vmatpush1.bf16.msra.mxu0 0
    %824 = vmatprep.subr.bf16.mxu0 0
    %825 = vmatpush1.bf16.msra.mxu0 0
    %826 = vmatprep.subr.bf16.mxu0 0
    %827 = vmatpush1.bf16.msra.mxu0 0
    %828 = vmatprep.subr.bf16.mxu0 0
    %829 = vmatpush1.bf16.msra.mxu0 0
    %830 = vmatprep.subr.bf16.mxu0 0
    %831 = vmatpush1.bf16.msra.mxu0 0
    %832 = vmatprep.subr.bf16.mxu0 0
    %833 = vmatpush1.bf16.msra.mxu0 0
    %834 = vmatprep.subr.bf16.mxu0 0
    %835 = vmatpush1.bf16.msra.mxu0 0
    %836 = vmatprep.subr.bf16.mxu0 0
    %837 = vmatpush1.bf16.msra.mxu0 0
    %838 = vmatprep.subr.bf16.mxu0 0
    %839 = vmatpush1.bf16.msra.mxu0 0
    %840 = vmatprep.mubr.bf16.mxu0 0
    %841 = vmatmul.mubr.bf16.gmra.mrb[0].mxu0 %v806
    %v842 = vpop.f32.mrb[0].mxu0
    %v843 = vadd.f32 0.0, %v842
    %v844 = vpop.f32.mrb[0].mxu0
    %v845 = vadd.f32 0.0, %v844
    %v846 = vpop.f32.mrb[0].mxu0
    %v847 = vpop.f32.mrb[0].mxu0
    %848 = vdwg.mxu0
    %v849 = vadd.f32 %v799, %v843
    %v850 = vadd.f32 %v800, %v845
    %v851 = vxor.u32 %v849, 2147483648
    %v852 = vxor.u32 %v850, 2147483648
    %v853 = vmul.f32 %v851, 1.442695
    %v854 = vpow.pop %v853
    %v855 = vmul.f32 %v852, 1.442695
    %v856 = vpow.pop %v855
    %v857 = vadd.f32 %v854, 1.0
    %v858 = vadd.f32 %v856, 1.0
    %v859 = vrcp.pop %v857
    %v860 = vmul.f32 1.0, %v859
    %v861 = vrcp.pop %v858
    %v862 = vmul.f32 1.0, %v861
    %v863 = vtanh.pop %v850
    %v864 = vmul.f32 %v860, %v766
    %v865 = vmul.f32 %v860, %v863
    %867 = vrot.lane.b32.xlu0 %v865, 64
    %v868 = vpop.permute.xlu0 %867
    %v870 = vadd.f32 %v864, %v868
    %v871 = vtanh.pop %v870
    %v872 = vmul.f32 %v862, %v871
    %874 = vrot.lane.b32.xlu0 %v872, 64
    %v875 = vpop.permute.xlu0 %874
    %877 = vst.msk [vmem:[#allocation3 + $0x5] sm:$0x1] %vm349, %v875
    %878 = vst.msk [vmem:[#allocation3 + $0x2] sm:$0x1] %vm351, %v875
    %v879 = vld [vmem:[%s355] ss:$8 sm:$0x3]
    %v880 = vld [vmem:[%s353] ss:$8 sm:$0x3]
    %v882 = vlaneseq
    %v883 = vshrl.u32 %v882, 7
    %v884 = vsub.s32 0, %v883
    %v885 = vrot.slane %v879, %v884
    %v886 = vlaneseq
    %v887 = vshrl.u32 %v886, 7
    %v888 = vsub.s32 1, %v887
    %v889 = vrot.slane %v879, %v888
    %v893 = vlaneseq
    %v894 = vshrl.u32 %v893, 7
    %v895 = vsub.s32 0, %v894
    %v896 = vrot.slane %v880, %v895
    %v897 = vlaneseq
    %v898 = vshrl.u32 %v897, 7
    %v899 = vsub.s32 1, %v898
    %v900 = vrot.slane %v880, %v899
    %v903 = vsel %vm114, %v885, %v896
    %v904 = vsel %vm115, %v889, %v900
    %v905 = vpack.c.bf16 %v872, %v872
    %907 = vrot.lane.b32.xlu0 %v905, 64
    %v908 = vpop.permute.xlu0 %907
    %v910 = vsel %vm276, %v908, 0
    %912 = vmatprep.subr.bf16.mxu0 %v261
    %913 = vmatpush1.bf16.msra.mxu0 %v260
    %914 = vmatprep.subr.bf16.mxu0 %v263
    %915 = vmatpush1.bf16.msra.mxu0 %v262
    %916 = vmatprep.subr.bf16.mxu0 %v265
    %917 = vmatpush1.bf16.msra.mxu0 %v264
    %918 = vmatprep.subr.bf16.mxu0 %v267
    %919 = vmatpush1.bf16.msra.mxu0 %v266
    %920 = vmatprep.subr.bf16.mxu0 0
    %921 = vmatpush1.bf16.msra.mxu0 0
    %922 = vmatprep.subr.bf16.mxu0 0
    %923 = vmatpush1.bf16.msra.mxu0 0
    %924 = vmatprep.subr.bf16.mxu0 0
    %925 = vmatpush1.bf16.msra.mxu0 0
    %926 = vmatprep.subr.bf16.mxu0 0
    %927 = vmatpush1.bf16.msra.mxu0 0
    %928 = vmatprep.subr.bf16.mxu0 0
    %929 = vmatpush1.bf16.msra.mxu0 0
    %930 = vmatprep.subr.bf16.mxu0 0
    %931 = vmatpush1.bf16.msra.mxu0 0
    %932 = vmatprep.subr.bf16.mxu0 0
    %933 = vmatpush1.bf16.msra.mxu0 0
    %934 = vmatprep.subr.bf16.mxu0 0
    %935 = vmatpush1.bf16.msra.mxu0 0
    %936 = vmatprep.subr.bf16.mxu0 0
    %937 = vmatpush1.bf16.msra.mxu0 0
    %938 = vmatprep.subr.bf16.mxu0 0
    %939 = vmatpush1.bf16.msra.mxu0 0
    %940 = vmatprep.subr.bf16.mxu0 0
    %941 = vmatpush1.bf16.msra.mxu0 0
    %942 = vmatprep.subr.bf16.mxu0 0
    %943 = vmatpush1.bf16.msra.mxu0 0
    %944 = vmatprep.mubr.bf16.mxu0 0
    %945 = vmatmul.mubr.bf16.gmra.mrb[0].mxu0 %v910
    %v946 = vpop.f32.mrb[0].mxu0
    %v947 = vadd.f32 0.0, %v946
    %v948 = vpop.f32.mrb[0].mxu0
    %v949 = vadd.f32 0.0, %v948
    %v950 = vpop.f32.mrb[0].mxu0
    %v951 = vpop.f32.mrb[0].mxu0
    %952 = vdwg.mxu0
    %v953 = vadd.f32 %v903, %v947
    %v954 = vadd.f32 %v904, %v949
    %v955 = vxor.u32 %v953, 2147483648
    %v956 = vxor.u32 %v954, 2147483648
    %v957 = vmul.f32 %v955, 1.442695
    %v958 = vpow.pop %v957
    %v959 = vmul.f32 %v956, 1.442695
    %v960 = vpow.pop %v959
    %v961 = vadd.f32 %v958, 1.0
    %v962 = vadd.f32 %v960, 1.0
    %v963 = vrcp.pop %v961
    %v964 = vmul.f32 1.0, %v963
    %v965 = vrcp.pop %v962
    %v966 = vmul.f32 1.0, %v965
    %v967 = vtanh.pop %v954
    %v968 = vmul.f32 %v964, %v870
    %v969 = vmul.f32 %v964, %v967
    %971 = vrot.lane.b32.xlu0 %v969, 64
    %v972 = vpop.permute.xlu0 %971
    %v974 = vadd.f32 %v968, %v972
    %v975 = vtanh.pop %v974
    %v976 = vmul.f32 %v966, %v975
    %978 = vrot.lane.b32.xlu0 %v976, 64
    %v979 = vpop.permute.xlu0 %978
    %981 = vst.msk [vmem:[#allocation3 + $0x6] sm:$0x1] %vm349, %v979
    %982 = vst.msk [vmem:[#allocation3 + $0x1] sm:$0x1] %vm351, %v979
    %v983 = vld [vmem:[%s210] ss:$8 sm:$0x3]
    %v984 = vld [vmem:[#allocation2] ss:$8 sm:$0x3]
    %v986 = vlaneseq
    %v987 = vshrl.u32 %v986, 7
    %v988 = vsub.s32 0, %v987
    %v989 = vrot.slane %v983, %v988
    %v990 = vlaneseq
    %v991 = vshrl.u32 %v990, 7
    %v992 = vsub.s32 1, %v991
    %v993 = vrot.slane %v983, %v992
    %v997 = vlaneseq
    %v998 = vshrl.u32 %v997, 7
    %v999 = vsub.s32 0, %v998
    %v1000 = vrot.slane %v984, %v999
    %v1001 = vlaneseq
    %v1002 = vshrl.u32 %v1001, 7
    %v1003 = vsub.s32 1, %v1002
    %v1004 = vrot.slane %v984, %v1003
    %v1007 = vsel %vm114, %v989, %v1000
    %v1008 = vsel %vm115, %v993, %v1004
    %v1009 = vpack.c.bf16 %v976, %v976
    %1011 = vrot.lane.b32.xlu0 %v1009, 64
    %v1012 = vpop.permute.xlu0 %1011
    %v1014 = vsel %vm276, %v1012, 0
    %1016 = vmatprep.subr.bf16.mxu0 %v261
    %1017 = vmatpush1.bf16.msra.mxu0 %v260
    %1018 = vmatprep.subr.bf16.mxu0 %v263
    %1019 = vmatpush1.bf16.msra.mxu0 %v262
    %1020 = vmatprep.subr.bf16.mxu0 %v265
    %1021 = vmatpush1.bf16.msra.mxu0 %v264
    %1022 = vmatprep.subr.bf16.mxu0 %v267
    %1023 = vmatpush1.bf16.msra.mxu0 %v266
    %1024 = vmatprep.subr.bf16.mxu0 0
    %1025 = vmatpush1.bf16.msra.mxu0 0
    %1026 = vmatprep.subr.bf16.mxu0 0
    %1027 = vmatpush1.bf16.msra.mxu0 0
    %1028 = vmatprep.subr.bf16.mxu0 0
    %1029 = vmatpush1.bf16.msra.mxu0 0
    %1030 = vmatprep.subr.bf16.mxu0 0
    %1031 = vmatpush1.bf16.msra.mxu0 0
    %1032 = vmatprep.subr.bf16.mxu0 0
    %1033 = vmatpush1.bf16.msra.mxu0 0
    %1034 = vmatprep.subr.bf16.mxu0 0
    %1035 = vmatpush1.bf16.msra.mxu0 0
    %1036 = vmatprep.subr.bf16.mxu0 0
    %1037 = vmatpush1.bf16.msra.mxu0 0
    %1038 = vmatprep.subr.bf16.mxu0 0
    %1039 = vmatpush1.bf16.msra.mxu0 0
    %1040 = vmatprep.subr.bf16.mxu0 0
    %1041 = vmatpush1.bf16.msra.mxu0 0
    %1042 = vmatprep.subr.bf16.mxu0 0
    %1043 = vmatpush1.bf16.msra.mxu0 0
    %1044 = vmatprep.subr.bf16.mxu0 0
    %1045 = vmatpush1.bf16.msra.mxu0 0
    %1046 = vmatprep.subr.bf16.mxu0 0
    %1047 = vmatpush1.bf16.msra.mxu0 0
    %1048 = vmatprep.mubr.bf16.mxu0 0
    %1049 = vmatmul.mubr.bf16.gmra.mrb[0].mxu0 %v1014
    %v1050 = vpop.f32.mrb[0].mxu0
    %v1051 = vadd.f32 0.0, %v1050
    %v1052 = vpop.f32.mrb[0].mxu0
    %v1053 = vadd.f32 0.0, %v1052
    %v1054 = vpop.f32.mrb[0].mxu0
    %v1055 = vpop.f32.mrb[0].mxu0
    %1056 = vdwg.mxu0
    %v1057 = vadd.f32 %v1007, %v1051
    %v1058 = vadd.f32 %v1008, %v1053
    %v1059 = vxor.u32 %v1057, 2147483648
    %v1060 = vxor.u32 %v1058, 2147483648
    %v1061 = vmul.f32 %v1059, 1.442695
    %v1062 = vpow.pop %v1061
    %v1063 = vmul.f32 %v1060, 1.442695
    %v1064 = vpow.pop %v1063
    %v1065 = vadd.f32 %v1062, 1.0
    %v1066 = vadd.f32 %v1064, 1.0
    %v1067 = vrcp.pop %v1065
    %v1068 = vmul.f32 1.0, %v1067
    %v1069 = vrcp.pop %v1066
    %v1070 = vmul.f32 1.0, %v1069
    %v1071 = vtanh.pop %v1058
    %v1072 = vmul.f32 %v1068, %v974
    %v1073 = vmul.f32 %v1068, %v1071
    %1075 = vrot.lane.b32.xlu0 %v1073, 64
    %v1076 = vpop.permute.xlu0 %1075
    %v1078 = vadd.f32 %v1072, %v1076
    %v1079 = vtanh.pop %v1078
    %v1080 = vmul.f32 %v1070, %v1079
    %1082 = vrot.lane.b32.xlu0 %v1080, 64
    %v1083 = vpop.permute.xlu0 %1082
    %1085 = vst.msk [vmem:[#allocation3 + $0x7] sm:$0x1] %vm349, %v1083
    %1086 = vst.msk [vmem:[#allocation3] sm:$0x1] %vm351, %v1083
    %v1087 = vld [vmem:[#allocation3] sm:$0xff]
    %v1088 = vpack.c.bf16 %v1087, %v1087
    %v1089 = vld [vmem:[#allocation10] sm:$0xff]
    %v1090 = vld [vmem:[#allocation10 + $0x8] sm:$0xff]
    %v1091 = vld [vmem:[#allocation10 + $0x10] sm:$0xff]
    %v1092 = vld [vmem:[#allocation10 + $0x18] sm:$0xff]
    %v1093 = vld [vmem:[#allocation10 + $0x20] sm:$0xff]
    %v1094 = vld [vmem:[#allocation10 + $0x28] sm:$0xff]
    %v1095 = vld [vmem:[#allocation10 + $0x30] sm:$0xff]
    %v1096 = vld [vmem:[#allocation10 + $0x38] sm:$0xff]
    %v1097 = vld [vmem:[%s6] sm:$0x3]
    %v1099 = vlaneseq
    %v1100 = vshrl.u32 %v1099, 7
    %v1101 = vsub.s32 0, %v1100
    %v1102 = vrot.slane %v1097, %v1101
    %v1103 = vlaneseq
    %v1104 = vshrl.u32 %v1103, 7
    %v1105 = vsub.s32 1, %v1104
    %v1106 = vrot.slane %v1097, %v1105
    %v1117 = vunpack.c.l.b16 %v1089
    %v1118 = vunpack.c.h.b16 %v1089
    %v1119 = vunpack.c.l.b16 %v1090
    %v1120 = vunpack.c.h.b16 %v1090
    %v1121 = vunpack.c.l.b16 %v1091
    %v1122 = vunpack.c.h.b16 %v1091
    %v1123 = vunpack.c.l.b16 %v1092
    %v1124 = vunpack.c.h.b16 %v1092
    %v1125 = vunpack.c.l.b16 %v1093
    %v1126 = vunpack.c.h.b16 %v1093
    %v1127 = vunpack.c.l.b16 %v1094
    %v1128 = vunpack.c.h.b16 %v1094
    %v1129 = vunpack.c.l.b16 %v1095
    %v1130 = vunpack.c.h.b16 %v1095
    %v1131 = vunpack.c.l.b16 %v1096
    %v1132 = vunpack.c.h.b16 %v1096
    %v1133 = vpack.c.b16 %v1119, %v1117
    %v1134 = vpack.c.b16 %v1120, %v1118
    %v1135 = vpack.c.b16 %v1123, %v1121
    %v1136 = vpack.c.b16 %v1124, %v1122
    %v1137 = vpack.c.b16 %v1127, %v1125
    %v1138 = vpack.c.b16 %v1128, %v1126
    %v1139 = vpack.c.b16 %v1131, %v1129
    %v1140 = vpack.c.b16 %v1132, %v1130
    %v1150 = vsel %vm276, %v1088, 0
    %1152 = vmatprep.subr.bf16.mxu0 %v1134
    %1153 = vmatpush1.bf16.msra.mxu0 %v1133
    %1154 = vmatprep.subr.bf16.mxu0 %v1136
    %1155 = vmatpush1.bf16.msra.mxu0 %v1135
    %1156 = vmatprep.subr.bf16.mxu0 %v1138
    %1157 = vmatpush1.bf16.msra.mxu0 %v1137
    %1158 = vmatprep.subr.bf16.mxu0 %v1140
    %1159 = vmatpush1.bf16.msra.mxu0 %v1139
    %1160 = vmatprep.subr.bf16.mxu0 0
    %1161 = vmatpush1.bf16.msra.mxu0 0
    %1162 = vmatprep.subr.bf16.mxu0 0
    %1163 = vmatpush1.bf16.msra.mxu0 0
    %1164 = vmatprep.subr.bf16.mxu0 0
    %1165 = vmatpush1.bf16.msra.mxu0 0
    %1166 = vmatprep.subr.bf16.mxu0 0
    %1167 = vmatpush1.bf16.msra.mxu0 0
    %1168 = vmatprep.subr.bf16.mxu0 0
    %1169 = vmatpush1.bf16.msra.mxu0 0
    %1170 = vmatprep.subr.bf16.mxu0 0
    %1171 = vmatpush1.bf16.msra.mxu0 0
    %1172 = vmatprep.subr.bf16.mxu0 0
    %1173 = vmatpush1.bf16.msra.mxu0 0
    %1174 = vmatprep.subr.bf16.mxu0 0
    %1175 = vmatpush1.bf16.msra.mxu0 0
    %1176 = vmatprep.subr.bf16.mxu0 0
    %1177 = vmatpush1.bf16.msra.mxu0 0
    %1178 = vmatprep.subr.bf16.mxu0 0
    %1179 = vmatpush1.bf16.msra.mxu0 0
    %1180 = vmatprep.subr.bf16.mxu0 0
    %1181 = vmatpush1.bf16.msra.mxu0 0
    %1182 = vmatprep.subr.bf16.mxu0 0
    %1183 = vmatpush1.bf16.msra.mxu0 0
    %1184 = vmatprep.mubr.bf16.mxu0 0
    %1185 = vmatmul.mubr.bf16.gmra.mrb[0].mxu0 %v1150
    %v1186 = vpop.f32.mrb[0].mxu0
    %v1187 = vadd.f32 %v1102, %v1186
    %v1188 = vpop.f32.mrb[0].mxu0
    %v1189 = vadd.f32 %v1106, %v1188
    %v1190 = vpop.f32.mrb[0].mxu0
    %v1191 = vpop.f32.mrb[0].mxu0
    %1192 = vdwg.mxu0
    %1193 = vst [vmem:[#allocation2] sm:$0xff] %v1187
    %1194 = vst [vmem:[#allocation2 + $0x8] sm:$0xff] %v1189
    %v1195 = vld [vmem:[%s5] sm:$0xff]
    %v1196 = vld [vmem:[%s5 + $0x8] sm:$0xff]
    %v1197 = vld [vmem:[%s5 + $0x10] sm:$0xff]
    %v1198 = vld [vmem:[%s5 + $0x18] sm:$0xff]
    %v1199 = vld [vmem:[%s5 + $0x20] sm:$0xff]
    %v1200 = vld [vmem:[%s5 + $0x28] sm:$0xff]
    %v1201 = vld [vmem:[%s5 + $0x30] sm:$0xff]
    %v1202 = vld [vmem:[%s5 + $0x38] sm:$0xff]
    %v1203 = vld [vmem:[#allocation2] ss:$8 sm:$0x3]
    %v1204 = vld [vmem:[%s210] ss:$8 sm:$0x3]
    %v1206 = vlaneseq
    %v1207 = vshrl.u32 %v1206, 7
    %v1208 = vsub.s32 0, %v1207
    %v1209 = vrot.slane %v1203, %v1208
    %v1210 = vlaneseq
    %v1211 = vshrl.u32 %v1210, 7
    %v1212 = vsub.s32 1, %v1211
    %v1213 = vrot.slane %v1203, %v1212
    %v1217 = vlaneseq
    %v1218 = vshrl.u32 %v1217, 7
    %v1219 = vsub.s32 0, %v1218
    %v1220 = vrot.slane %v1204, %v1219
    %v1221 = vlaneseq
    %v1222 = vshrl.u32 %v1221, 7
    %v1223 = vsub.s32 1, %v1222
    %v1224 = vrot.slane %v1204, %v1223
    %v1227 = vsel %vm114, %v1209, %v1220
    %v1228 = vsel %vm115, %v1213, %v1224
    %v1237 = vunpack.c.l.b16 %v1195
    %v1238 = vunpack.c.h.b16 %v1195
    %v1239 = vunpack.c.l.b16 %v1196
    %v1240 = vunpack.c.h.b16 %v1196
    %v1241 = vunpack.c.l.b16 %v1197
    %v1242 = vunpack.c.h.b16 %v1197
    %v1243 = vunpack.c.l.b16 %v1198
    %v1244 = vunpack.c.h.b16 %v1198
    %v1245 = vunpack.c.l.b16 %v1199
    %v1246 = vunpack.c.h.b16 %v1199
    %v1247 = vunpack.c.l.b16 %v1200
    %v1248 = vunpack.c.h.b16 %v1200
    %v1249 = vunpack.c.l.b16 %v1201
    %v1250 = vunpack.c.h.b16 %v1201
    %v1251 = vunpack.c.l.b16 %v1202
    %v1252 = vunpack.c.h.b16 %v1202
    %v1253 = vpack.c.b16 %v1239, %v1237
    %v1254 = vpack.c.b16 %v1240, %v1238
    %v1255 = vpack.c.b16 %v1243, %v1241
    %v1256 = vpack.c.b16 %v1244, %v1242
    %v1257 = vpack.c.b16 %v1247, %v1245
    %v1258 = vpack.c.b16 %v1248, %v1246
    %v1259 = vpack.c.b16 %v1251, %v1249
    %v1260 = vpack.c.b16 %v1252, %v1250
    %1269 = vmatprep.subr.bf16.mxu0 %v1254
    %1270 = vmatpush1.bf16.msra.mxu0 %v1253
    %1271 = vmatprep.subr.bf16.mxu0 %v1256
    %1272 = vmatpush1.bf16.msra.mxu0 %v1255
    %1273 = vmatprep.subr.bf16.mxu0 %v1258
    %1274 = vmatpush1.bf16.msra.mxu0 %v1257
    %1275 = vmatprep.subr.bf16.mxu0 %v1260
    %1276 = vmatpush1.bf16.msra.mxu0 %v1259
    %1277 = vmatprep.subr.bf16.mxu0 0
    %1278 = vmatpush1.bf16.msra.mxu0 0
    %1279 = vmatprep.subr.bf16.mxu0 0
    %1280 = vmatpush1.bf16.msra.mxu0 0
    %1281 = vmatprep.subr.bf16.mxu0 0
    %1282 = vmatpush1.bf16.msra.mxu0 0
    %1283 = vmatprep.subr.bf16.mxu0 0
    %1284 = vmatpush1.bf16.msra.mxu0 0
    %1285 = vmatprep.subr.bf16.mxu0 0
    %1286 = vmatpush1.bf16.msra.mxu0 0
    %1287 = vmatprep.subr.bf16.mxu0 0
    %1288 = vmatpush1.bf16.msra.mxu0 0
    %1289 = vmatprep.subr.bf16.mxu0 0
    %1290 = vmatpush1.bf16.msra.mxu0 0
    %1291 = vmatprep.subr.bf16.mxu0 0
    %1292 = vmatpush1.bf16.msra.mxu0 0
    %1293 = vmatprep.subr.bf16.mxu0 0
    %1294 = vmatpush1.bf16.msra.mxu0 0
    %1295 = vmatprep.subr.bf16.mxu0 0
    %1296 = vmatpush1.bf16.msra.mxu0 0
    %1297 = vmatprep.subr.bf16.mxu0 0
    %1298 = vmatpush1.bf16.msra.mxu0 0
    %1299 = vmatprep.subr.bf16.mxu0 0
    %1300 = vmatpush1.bf16.msra.mxu0 0
    %1301 = vmatprep.mubr.bf16.mxu0 0
    %1302 = vmatmul.mubr.bf16.gmra.mrb[0].mxu0 %v278
    %v1303 = vpop.f32.mrb[0].mxu0
    %v1304 = vadd.f32 0.0, %v1303
    %v1305 = vpop.f32.mrb[0].mxu0
    %v1306 = vadd.f32 0.0, %v1305
    %v1307 = vpop.f32.mrb[0].mxu0
    %v1308 = vpop.f32.mrb[0].mxu0
    %1309 = vdwg.mxu0
    %v1310 = vadd.f32 %v1227, %v1304
    %v1311 = vadd.f32 %v1228, %v1306
    %v1312 = vxor.u32 %v1310, 2147483648
    %v1313 = vxor.u32 %v1311, 2147483648
    %v1314 = vmul.f32 %v1312, 1.442695
    %v1315 = vpow.pop %v1314
    %v1316 = vmul.f32 %v1313, 1.442695
    %v1317 = vpow.pop %v1316
    %v1318 = vadd.f32 %v1315, 1.0
    %v1319 = vadd.f32 %v1317, 1.0
    %v1320 = vrcp.pop %v1318
    %v1321 = vmul.f32 1.0, %v1320
    %v1322 = vrcp.pop %v1319
    %v1323 = vmul.f32 1.0, %v1322
    %v1324 = vtanh.pop %v1311
    %v1325 = vmul.f32 %v1321, 0.0
    %v1326 = vmul.f32 %v1321, %v1324
    %1328 = vrot.lane.b32.xlu0 %v1326, 64
    %v1329 = vpop.permute.xlu0 %1328
    %v1331 = vadd.f32 %v1325, %v1329
    %v1332 = vtanh.pop %v1331
    %v1333 = vmul.f32 %v1323, %v1332
    %1335 = vrot.lane.b32.xlu0 %v1333, 64
    %v1336 = vpop.permute.xlu0 %1335
    %1338 = vst.msk [vmem:[#allocation3] sm:$0x1] %vm349, %v1336
    %1339 = vst.msk [vmem:[#allocation3 + $0x7] sm:$0x1] %vm351, %v1336
    %v1340 = vld [vmem:[%s353] ss:$8 sm:$0x3]
    %v1341 = vld [vmem:[%s355] ss:$8 sm:$0x3]
    %v1343 = vlaneseq
    %v1344 = vshrl.u32 %v1343, 7
    %v1345 = vsub.s32 0, %v1344
    %v1346 = vrot.slane %v1340, %v1345
    %v1347 = vlaneseq
    %v1348 = vshrl.u32 %v1347, 7
    %v1349 = vsub.s32 1, %v1348
    %v1350 = vrot.slane %v1340, %v1349
    %v1354 = vlaneseq
    %v1355 = vshrl.u32 %v1354, 7
    %v1356 = vsub.s32 0, %v1355
    %v1357 = vrot.slane %v1341, %v1356
    %v1358 = vlaneseq
    %v1359 = vshrl.u32 %v1358, 7
    %v1360 = vsub.s32 1, %v1359
    %v1361 = vrot.slane %v1341, %v1360
    %v1364 = vsel %vm114, %v1346, %v1357
    %v1365 = vsel %vm115, %v1350, %v1361
    %v1366 = vpack.c.bf16 %v1333, %v1333
    %1368 = vrot.lane.b32.xlu0 %v1366, 64
    %v1369 = vpop.permute.xlu0 %1368
    %v1371 = vsel %vm276, %v1369, 0
    %1373 = vmatprep.subr.bf16.mxu0 %v1254
    %1374 = vmatpush1.bf16.msra.mxu0 %v1253
    %1375 = vmatprep.subr.bf16.mxu0 %v1256
    %1376 = vmatpush1.bf16.msra.mxu0 %v1255
    %1377 = vmatprep.subr.bf16.mxu0 %v1258
    %1378 = vmatpush1.bf16.msra.mxu0 %v1257
    %1379 = vmatprep.subr.bf16.mxu0 %v1260
    %1380 = vmatpush1.bf16.msra.mxu0 %v1259
    %1381 = vmatprep.subr.bf16.mxu0 0
    %1382 = vmatpush1.bf16.msra.mxu0 0
    %1383 = vmatprep.subr.bf16.mxu0 0
    %1384 = vmatpush1.bf16.msra.mxu0 0
    %1385 = vmatprep.subr.bf16.mxu0 0
    %1386 = vmatpush1.bf16.msra.mxu0 0
    %1387 = vmatprep.subr.bf16.mxu0 0
    %1388 = vmatpush1.bf16.msra.mxu0 0
    %1389 = vmatprep.subr.bf16.mxu0 0
    %1390 = vmatpush1.bf16.msra.mxu0 0
    %1391 = vmatprep.subr.bf16.mxu0 0
    %1392 = vmatpush1.bf16.msra.mxu0 0
    %1393 = vmatprep.subr.bf16.mxu0 0
    %1394 = vmatpush1.bf16.msra.mxu0 0
    %1395 = vmatprep.subr.bf16.mxu0 0
    %1396 = vmatpush1.bf16.msra.mxu0 0
    %1397 = vmatprep.subr.bf16.mxu0 0
    %1398 = vmatpush1.bf16.msra.mxu0 0
    %1399 = vmatprep.subr.bf16.mxu0 0
    %1400 = vmatpush1.bf16.msra.mxu0 0
    %1401 = vmatprep.subr.bf16.mxu0 0
    %1402 = vmatpush1.bf16.msra.mxu0 0
    %1403 = vmatprep.subr.bf16.mxu0 0
    %1404 = vmatpush1.bf16.msra.mxu0 0
    %1405 = vmatprep.mubr.bf16.mxu0 0
    %1406 = vmatmul.mubr.bf16.gmra.mrb[0].mxu0 %v1371
    %v1407 = vpop.f32.mrb[0].mxu0
    %v1408 = vadd.f32 0.0, %v1407
    %v1409 = vpop.f32.mrb[0].mxu0
    %v1410 = vadd.f32 0.0, %v1409
    %v1411 = vpop.f32.mrb[0].mxu0
    %v1412 = vpop.f32.mrb[0].mxu0
    %1413 = vdwg.mxu0
    %v1414 = vadd.f32 %v1364, %v1408
    %v1415 = vadd.f32 %v1365, %v1410
    %v1416 = vxor.u32 %v1414, 2147483648
    %v1417 = vxor.u32 %v1415, 2147483648
    %v1418 = vmul.f32 %v1416, 1.442695
    %v1419 = vpow.pop %v1418
    %v1420 = vmul.f32 %v1417, 1.442695
    %v1421 = vpow.pop %v1420
    %v1422 = vadd.f32 %v1419, 1.0
    %v1423 = vadd.f32 %v1421, 1.0
    %v1424 = vrcp.pop %v1422
    %v1425 = vmul.f32 1.0, %v1424
    %v1426 = vrcp.pop %v1423
    %v1427 = vmul.f32 1.0, %v1426
    %v1428 = vtanh.pop %v1415
    %v1429 = vmul.f32 %v1425, %v1331
    %v1430 = vmul.f32 %v1425, %v1428
    %1432 = vrot.lane.b32.xlu0 %v1430, 64
    %v1433 = vpop.permute.xlu0 %1432
    %v1435 = vadd.f32 %v1429, %v1433
    %v1436 = vtanh.pop %v1435
    %v1437 = vmul.f32 %v1427, %v1436
    %1439 = vrot.lane.b32.xlu0 %v1437, 64
    %v1440 = vpop.permute.xlu0 %1439
    %1442 = vst.msk [vmem:[#allocation3 + $0x1] sm:$0x1] %vm349, %v1440
    %1443 = vst.msk [vmem:[#allocation3 + $0x6] sm:$0x1] %vm351, %v1440
    %v1444 = vld [vmem:[%s459] ss:$8 sm:$0x3]
    %v1445 = vld [vmem:[%s461] ss:$8 sm:$0x3]
    %v1447 = vlaneseq
    %v1448 = vshrl.u32 %v1447, 7
    %v1449 = vsub.s32 0, %v1448
    %v1450 = vrot.slane %v1444, %v1449
    %v1451 = vlaneseq
    %v1452 = vshrl.u32 %v1451, 7
    %v1453 = vsub.s32 1, %v1452
    %v1454 = vrot.slane %v1444, %v1453
    %v1458 = vlaneseq
    %v1459 = vshrl.u32 %v1458, 7
    %v1460 = vsub.s32 0, %v1459
    %v1461 = vrot.slane %v1445, %v1460
    %v1462 = vlaneseq
    %v1463 = vshrl.u32 %v1462, 7
    %v1464 = vsub.s32 1, %v1463
    %v1465 = vrot.slane %v1445, %v1464
    %v1468 = vsel %vm114, %v1450, %v1461
    %v1469 = vsel %vm115, %v1454, %v1465
    %v1470 = vpack.c.bf16 %v1437, %v1437
    %1472 = vrot.lane.b32.xlu0 %v1470, 64
    %v1473 = vpop.permute.xlu0 %1472
    %v1475 = vsel %vm276, %v1473, 0
    %1477 = vmatprep.subr.bf16.mxu0 %v1254
    %1478 = vmatpush1.bf16.msra.mxu0 %v1253
    %1479 = vmatprep.subr.bf16.mxu0 %v1256
    %1480 = vmatpush1.bf16.msra.mxu0 %v1255
    %1481 = vmatprep.subr.bf16.mxu0 %v1258
    %1482 = vmatpush1.bf16.msra.mxu0 %v1257
    %1483 = vmatprep.subr.bf16.mxu0 %v1260
    %1484 = vmatpush1.bf16.msra.mxu0 %v1259
    %1485 = vmatprep.subr.bf16.mxu0 0
    %1486 = vmatpush1.bf16.msra.mxu0 0
    %1487 = vmatprep.subr.bf16.mxu0 0
    %1488 = vmatpush1.bf16.msra.mxu0 0
    %1489 = vmatprep.subr.bf16.mxu0 0
    %1490 = vmatpush1.bf16.msra.mxu0 0
    %1491 = vmatprep.subr.bf16.mxu0 0
    %1492 = vmatpush1.bf16.msra.mxu0 0
    %1493 = vmatprep.subr.bf16.mxu0 0
    %1494 = vmatpush1.bf16.msra.mxu0 0
    %1495 = vmatprep.subr.bf16.mxu0 0
    %1496 = vmatpush1.bf16.msra.mxu0 0
    %1497 = vmatprep.subr.bf16.mxu0 0
    %1498 = vmatpush1.bf16.msra.mxu0 0
    %1499 = vmatprep.subr.bf16.mxu0 0
    %1500 = vmatpush1.bf16.msra.mxu0 0
    %1501 = vmatprep.subr.bf16.mxu0 0
    %1502 = vmatpush1.bf16.msra.mxu0 0
    %1503 = vmatprep.subr.bf16.mxu0 0
    %1504 = vmatpush1.bf16.msra.mxu0 0
    %1505 = vmatprep.subr.bf16.mxu0 0
    %1506 = vmatpush1.bf16.msra.mxu0 0
    %1507 = vmatprep.subr.bf16.mxu0 0
    %1508 = vmatpush1.bf16.msra.mxu0 0
    %1509 = vmatprep.mubr.bf16.mxu0 0
    %1510 = vmatmul.mubr.bf16.gmra.mrb[0].mxu0 %v1475
    %v1511 = vpop.f32.mrb[0].mxu0
    %v1512 = vadd.f32 0.0, %v1511
    %v1513 = vpop.f32.mrb[0].mxu0
    %v1514 = vadd.f32 0.0, %v1513
    %v1515 = vpop.f32.mrb[0].mxu0
    %v1516 = vpop.f32.mrb[0].mxu0
    %1517 = vdwg.mxu0
    %v1518 = vadd.f32 %v1468, %v1512
    %v1519 = vadd.f32 %v1469, %v1514
    %v1520 = vxor.u32 %v1518, 2147483648
    %v1521 = vxor.u32 %v1519, 2147483648
    %v1522 = vmul.f32 %v1520, 1.442695
    %v1523 = vpow.pop %v1522
    %v1524 = vmul.f32 %v1521, 1.442695
    %v1525 = vpow.pop %v1524
    %v1526 = vadd.f32 %v1523, 1.0
    %v1527 = vadd.f32 %v1525, 1.0
    %v1528 = vrcp.pop %v1526
    %v1529 = vmul.f32 1.0, %v1528
    %v1530 = vrcp.pop %v1527
    %v1531 = vmul.f32 1.0, %v1530
    %v1532 = vtanh.pop %v1519
    %v1533 = vmul.f32 %v1529, %v1435
    %v1534 = vmul.f32 %v1529, %v1532
    %1536 = vrot.lane.b32.xlu0 %v1534, 64
    %v1537 = vpop.permute.xlu0 %1536
    %v1539 = vadd.f32 %v1533, %v1537
    %v1540 = vtanh.pop %v1539
    %v1541 = vmul.f32 %v1531, %v1540
    %1543 = vrot.lane.b32.xlu0 %v1541, 64
    %v1544 = vpop.permute.xlu0 %1543
    %1546 = vst.msk [vmem:[#allocation3 + $0x2] sm:$0x1] %vm349, %v1544
    %1547 = vst.msk [vmem:[#allocation3 + $0x5] sm:$0x1] %vm351, %v1544
    %v1548 = vld [vmem:[%s565] ss:$8 sm:$0x3]
    %v1549 = vld [vmem:[%s567] ss:$8 sm:$0x3]
    %v1551 = vlaneseq
    %v1552 = vshrl.u32 %v1551, 7
    %v1553 = vsub.s32 0, %v1552
    %v1554 = vrot.slane %v1548, %v1553
    %v1555 = vlaneseq
    %v1556 = vshrl.u32 %v1555, 7
    %v1557 = vsub.s32 1, %v1556
    %v1558 = vrot.slane %v1548, %v1557
    %v1562 = vlaneseq
    %v1563 = vshrl.u32 %v1562, 7
    %v1564 = vsub.s32 0, %v1563
    %v1565 = vrot.slane %v1549, %v1564
    %v1566 = vlaneseq
    %v1567 = vshrl.u32 %v1566, 7
    %v1568 = vsub.s32 1, %v1567
    %v1569 = vrot.slane %v1549, %v1568
    %v1572 = vsel %vm114, %v1554, %v1565
    %v1573 = vsel %vm115, %v1558, %v1569
    %v1574 = vpack.c.bf16 %v1541, %v1541
    %1576 = vrot.lane.b32.xlu0 %v1574, 64
    %v1577 = vpop.permute.xlu0 %1576
    %v1579 = vsel %vm276, %v1577, 0
    %1581 = vmatprep.subr.bf16.mxu0 %v1254
    %1582 = vmatpush1.bf16.msra.mxu0 %v1253
    %1583 = vmatprep.subr.bf16.mxu0 %v1256
    %1584 = vmatpush1.bf16.msra.mxu0 %v1255
    %1585 = vmatprep.subr.bf16.mxu0 %v1258
    %1586 = vmatpush1.bf16.msra.mxu0 %v1257
    %1587 = vmatprep.subr.bf16.mxu0 %v1260
    %1588 = vmatpush1.bf16.msra.mxu0 %v1259
    %1589 = vmatprep.subr.bf16.mxu0 0
    %1590 = vmatpush1.bf16.msra.mxu0 0
    %1591 = vmatprep.subr.bf16.mxu0 0
    %1592 = vmatpush1.bf16.msra.mxu0 0
    %1593 = vmatprep.subr.bf16.mxu0 0
    %1594 = vmatpush1.bf16.msra.mxu0 0
    %1595 = vmatprep.subr.bf16.mxu0 0
    %1596 = vmatpush1.bf16.msra.mxu0 0
    %1597 = vmatprep.subr.bf16.mxu0 0
    %1598 = vmatpush1.bf16.msra.mxu0 0
    %1599 = vmatprep.subr.bf16.mxu0 0
    %1600 = vmatpush1.bf16.msra.mxu0 0
    %1601 = vmatprep.subr.bf16.mxu0 0
    %1602 = vmatpush1.bf16.msra.mxu0 0
    %1603 = vmatprep.subr.bf16.mxu0 0
    %1604 = vmatpush1.bf16.msra.mxu0 0
    %1605 = vmatprep.subr.bf16.mxu0 0
    %1606 = vmatpush1.bf16.msra.mxu0 0
    %1607 = vmatprep.subr.bf16.mxu0 0
    %1608 = vmatpush1.bf16.msra.mxu0 0
    %1609 = vmatprep.subr.bf16.mxu0 0
    %1610 = vmatpush1.bf16.msra.mxu0 0
    %1611 = vmatprep.subr.bf16.mxu0 0
    %1612 = vmatpush1.bf16.msra.mxu0 0
    %1613 = vmatprep.mubr.bf16.mxu0 0
    %1614 = vmatmul.mubr.bf16.gmra.mrb[0].mxu0 %v1579
    %v1615 = vpop.f32.mrb[0].mxu0
    %v1616 = vadd.f32 0.0, %v1615
    %v1617 = vpop.f32.mrb[0].mxu0
    %v1618 = vadd.f32 0.0, %v1617
    %v1619 = vpop.f32.mrb[0].mxu0
    %v1620 = vpop.f32.mrb[0].mxu0
    %1621 = vdwg.mxu0
    %v1622 = vadd.f32 %v1572, %v1616
    %v1623 = vadd.f32 %v1573, %v1618
    %v1624 = vxor.u32 %v1622, 2147483648
    %v1625 = vxor.u32 %v1623, 2147483648
    %v1626 = vmul.f32 %v1624, 1.442695
    %v1627 = vpow.pop %v1626
    %v1628 = vmul.f32 %v1625, 1.442695
    %v1629 = vpow.pop %v1628
    %v1630 = vadd.f32 %v1627, 1.0
    %v1631 = vadd.f32 %v1629, 1.0
    %v1632 = vrcp.pop %v1630
    %v1633 = vmul.f32 1.0, %v1632
    %v1634 = vrcp.pop %v1631
    %v1635 = vmul.f32 1.0, %v1634
    %v1636 = vtanh.pop %v1623
    %v1637 = vmul.f32 %v1633, %v1539
    %v1638 = vmul.f32 %v1633, %v1636
    %1640 = vrot.lane.b32.xlu0 %v1638, 64
    %v1641 = vpop.permute.xlu0 %1640
    %v1643 = vadd.f32 %v1637, %v1641
    %v1644 = vtanh.pop %v1643
    %v1645 = vmul.f32 %v1635, %v1644
    %1647 = vrot.lane.b32.xlu0 %v1645, 64
    %v1648 = vpop.permute.xlu0 %1647
    %1650 = vst.msk [vmem:[#allocation3 + $0x3] sm:$0x1] %vm349, %v1648
    %1651 = vst.msk [vmem:[#allocation3 + $0x4] sm:$0x1] %vm351, %v1648
    %v1652 = vld [vmem:[%s567] ss:$8 sm:$0x3]
    %v1653 = vld [vmem:[%s565] ss:$8 sm:$0x3]
    %v1655 = vlaneseq
    %v1656 = vshrl.u32 %v1655, 7
    %v1657 = vsub.s32 0, %v1656
    %v1658 = vrot.slane %v1652, %v1657
    %v1659 = vlaneseq
    %v1660 = vshrl.u32 %v1659, 7
    %v1661 = vsub.s32 1, %v1660
    %v1662 = vrot.slane %v1652, %v1661
    %v1666 = vlaneseq
    %v1667 = vshrl.u32 %v1666, 7
    %v1668 = vsub.s32 0, %v1667
    %v1669 = vrot.slane %v1653, %v1668
    %v1670 = vlaneseq
    %v1671 = vshrl.u32 %v1670, 7
    %v1672 = vsub.s32 1, %v1671
    %v1673 = vrot.slane %v1653, %v1672
    %v1676 = vsel %vm114, %v1658, %v1669
    %v1677 = vsel %vm115, %v1662, %v1673
    %v1678 = vpack.c.bf16 %v1645, %v1645
    %1680 = vrot.lane.b32.xlu0 %v1678, 64
    %v1681 = vpop.permute.xlu0 %1680
    %v1683 = vsel %vm276, %v1681, 0
    %1685 = vmatprep.subr.bf16.mxu0 %v1254
    %1686 = vmatpush1.bf16.msra.mxu0 %v1253
    %1687 = vmatprep.subr.bf16.mxu0 %v1256
    %1688 = vmatpush1.bf16.msra.mxu0 %v1255
    %1689 = vmatprep.subr.bf16.mxu0 %v1258
    %1690 = vmatpush1.bf16.msra.mxu0 %v1257
    %1691 = vmatprep.subr.bf16.mxu0 %v1260
    %1692 = vmatpush1.bf16.msra.mxu0 %v1259
    %1693 = vmatprep.subr.bf16.mxu0 0
    %1694 = vmatpush1.bf16.msra.mxu0 0
    %1695 = vmatprep.subr.bf16.mxu0 0
    %1696 = vmatpush1.bf16.msra.mxu0 0
    %1697 = vmatprep.subr.bf16.mxu0 0
    %1698 = vmatpush1.bf16.msra.mxu0 0
    %1699 = vmatprep.subr.bf16.mxu0 0
    %1700 = vmatpush1.bf16.msra.mxu0 0
    %1701 = vmatprep.subr.bf16.mxu0 0
    %1702 = vmatpush1.bf16.msra.mxu0 0
    %1703 = vmatprep.subr.bf16.mxu0 0
    %1704 = vmatpush1.bf16.msra.mxu0 0
    %1705 = vmatprep.subr.bf16.mxu0 0
    %1706 = vmatpush1.bf16.msra.mxu0 0
    %1707 = vmatprep.subr.bf16.mxu0 0
    %1708 = vmatpush1.bf16.msra.mxu0 0
    %1709 = vmatprep.subr.bf16.mxu0 0
    %1710 = vmatpush1.bf16.msra.mxu0 0
    %1711 = vmatprep.subr.bf16.mxu0 0
    %1712 = vmatpush1.bf16.msra.mxu0 0
    %1713 = vmatprep.subr.bf16.mxu0 0
    %1714 = vmatpush1.bf16.msra.mxu0 0
    %1715 = vmatprep.subr.bf16.mxu0 0
    %1716 = vmatpush1.bf16.msra.mxu0 0
    %1717 = vmatprep.mubr.bf16.mxu0 0
    %1718 = vmatmul.mubr.bf16.gmra.mrb[0].mxu0 %v1683
    %v1719 = vpop.f32.mrb[0].mxu0
    %v1720 = vadd.f32 0.0, %v1719
    %v1721 = vpop.f32.mrb[0].mxu0
    %v1722 = vadd.f32 0.0, %v1721
    %v1723 = vpop.f32.mrb[0].mxu0
    %v1724 = vpop.f32.mrb[0].mxu0
    %1725 = vdwg.mxu0
    %v1726 = vadd.f32 %v1676, %v1720
    %v1727 = vadd.f32 %v1677, %v1722
    %v1728 = vxor.u32 %v1726, 2147483648
    %v1729 = vxor.u32 %v1727, 2147483648
    %v1730 = vmul.f32 %v1728, 1.442695
    %v1731 = vpow.pop %v1730
    %v1732 = vmul.f32 %v1729, 1.442695
    %v1733 = vpow.pop %v1732
    %v1734 = vadd.f32 %v1731, 1.0
    %v1735 = vadd.f32 %v1733, 1.0
    %v1736 = vrcp.pop %v1734
    %v1737 = vmul.f32 1.0, %v1736
    %v1738 = vrcp.pop %v1735
    %v1739 = vmul.f32 1.0, %v1738
    %v1740 = vtanh.pop %v1727
    %v1741 = vmul.f32 %v1737, %v1643
    %v1742 = vmul.f32 %v1737, %v1740
    %1744 = vrot.lane.b32.xlu0 %v1742, 64
    %v1745 = vpop.permute.xlu0 %1744
    %v1747 = vadd.f32 %v1741, %v1745
    %v1748 = vtanh.pop %v1747
    %v1749 = vmul.f32 %v1739, %v1748
    %1751 = vrot.lane.b32.xlu0 %v1749, 64
    %v1752 = vpop.permute.xlu0 %1751
    %1754 = vst.msk [vmem:[#allocation3 + $0x4] sm:$0x1] %vm349, %v1752
    %1755 = vst.msk [vmem:[#allocation3 + $0x3] sm:$0x1] %vm351, %v1752
    %v1756 = vld [vmem:[%s461] ss:$8 sm:$0x3]
    %v1757 = vld [vmem:[%s459] ss:$8 sm:$0x3]
    %v1759 = vlaneseq
    %v1760 = vshrl.u32 %v1759, 7
    %v1761 = vsub.s32 0, %v1760
    %v1762 = vrot.slane %v1756, %v1761
    %v1763 = vlaneseq
    %v1764 = vshrl.u32 %v1763, 7
    %v1765 = vsub.s32 1, %v1764
    %v1766 = vrot.slane %v1756, %v1765
    %v1770 = vlaneseq
    %v1771 = vshrl.u32 %v1770, 7
    %v1772 = vsub.s32 0, %v1771
    %v1773 = vrot.slane %v1757, %v1772
    %v1774 = vlaneseq
    %v1775 = vshrl.u32 %v1774, 7
    %v1776 = vsub.s32 1, %v1775
    %v1777 = vrot.slane %v1757, %v1776
    %v1780 = vsel %vm114, %v1762, %v1773
    %v1781 = vsel %vm115, %v1766, %v1777
    %v1782 = vpack.c.bf16 %v1749, %v1749
    %1784 = vrot.lane.b32.xlu0 %v1782, 64
    %v1785 = vpop.permute.xlu0 %1784
    %v1787 = vsel %vm276, %v1785, 0
    %1789 = vmatprep.subr.bf16.mxu0 %v1254
    %1790 = vmatpush1.bf16.msra.mxu0 %v1253
    %1791 = vmatprep.subr.bf16.mxu0 %v1256
    %1792 = vmatpush1.bf16.msra.mxu0 %v1255
    %1793 = vmatprep.subr.bf16.mxu0 %v1258
    %1794 = vmatpush1.bf16.msra.mxu0 %v1257
    %1795 = vmatprep.subr.bf16.mxu0 %v1260
    %1796 = vmatpush1.bf16.msra.mxu0 %v1259
    %1797 = vmatprep.subr.bf16.mxu0 0
    %1798 = vmatpush1.bf16.msra.mxu0 0
    %1799 = vmatprep.subr.bf16.mxu0 0
    %1800 = vmatpush1.bf16.msra.mxu0 0
    %1801 = vmatprep.subr.bf16.mxu0 0
    %1802 = vmatpush1.bf16.msra.mxu0 0
    %1803 = vmatprep.subr.bf16.mxu0 0
    %1804 = vmatpush1.bf16.msra.mxu0 0
    %1805 = vmatprep.subr.bf16.mxu0 0
    %1806 = vmatpush1.bf16.msra.mxu0 0
    %1807 = vmatprep.subr.bf16.mxu0 0
    %1808 = vmatpush1.bf16.msra.mxu0 0
    %1809 = vmatprep.subr.bf16.mxu0 0
    %1810 = vmatpush1.bf16.msra.mxu0 0
    %1811 = vmatprep.subr.bf16.mxu0 0
    %1812 = vmatpush1.bf16.msra.mxu0 0
    %1813 = vmatprep.subr.bf16.mxu0 0
    %1814 = vmatpush1.bf16.msra.mxu0 0
    %1815 = vmatprep.subr.bf16.mxu0 0
    %1816 = vmatpush1.bf16.msra.mxu0 0
    %1817 = vmatprep.subr.bf16.mxu0 0
    %1818 = vmatpush1.bf16.msra.mxu0 0
    %1819 = vmatprep.subr.bf16.mxu0 0
    %1820 = vmatpush1.bf16.msra.mxu0 0
    %1821 = vmatprep.mubr.bf16.mxu0 0
    %1822 = vmatmul.mubr.bf16.gmra.mrb[0].mxu0 %v1787
    %v1823 = vpop.f32.mrb[0].mxu0
    %v1824 = vadd.f32 0.0, %v1823
    %v1825 = vpop.f32.mrb[0].mxu0
    %v1826 = vadd.f32 0.0, %v1825
    %v1827 = vpop.f32.mrb[0].mxu0
    %v1828 = vpop.f32.mrb[0].mxu0
    %1829 = vdwg.mxu0
    %v1830 = vadd.f32 %v1780, %v1824
    %v1831 = vadd.f32 %v1781, %v1826
    %v1832 = vxor.u32 %v1830, 2147483648
    %v1833 = vxor.u32 %v1831, 2147483648
    %v1834 = vmul.f32 %v1832, 1.442695
    %v1835 = vpow.pop %v1834
    %v1836 = vmul.f32 %v1833, 1.442695
    %v1837 = vpow.pop %v1836
    %v1838 = vadd.f32 %v1835, 1.0
    %v1839 = vadd.f32 %v1837, 1.0
    %v1840 = vrcp.pop %v1838
    %v1841 = vmul.f32 1.0, %v1840
    %v1842 = vrcp.pop %v1839
    %v1843 = vmul.f32 1.0, %v1842
    %v1844 = vtanh.pop %v1831
    %v1845 = vmul.f32 %v1841, %v1747
    %v1846 = vmul.f32 %v1841, %v1844
    %1848 = vrot.lane.b32.xlu0 %v1846, 64
    %v1849 = vpop.permute.xlu0 %1848
    %v1851 = vadd.f32 %v1845, %v1849
    %v1852 = vtanh.pop %v1851
    %v1853 = vmul.f32 %v1843, %v1852
    %1855 = vrot.lane.b32.xlu0 %v1853, 64
    %v1856 = vpop.permute.xlu0 %1855
    %1858 = vst.msk [vmem:[#allocation3 + $0x5] sm:$0x1] %vm349, %v1856
    %1859 = vst.msk [vmem:[#allocation3 + $0x2] sm:$0x1] %vm351, %v1856
    %v1860 = vld [vmem:[%s355] ss:$8 sm:$0x3]
    %v1861 = vld [vmem:[%s353] ss:$8 sm:$0x3]
    %v1863 = vlaneseq
    %v1864 = vshrl.u32 %v1863, 7
    %v1865 = vsub.s32 0, %v1864
    %v1866 = vrot.slane %v1860, %v1865
    %v1867 = vlaneseq
    %v1868 = vshrl.u32 %v1867, 7
    %v1869 = vsub.s32 1, %v1868
    %v1870 = vrot.slane %v1860, %v1869
    %v1874 = vlaneseq
    %v1875 = vshrl.u32 %v1874, 7
    %v1876 = vsub.s32 0, %v1875
    %v1877 = vrot.slane %v1861, %v1876
    %v1878 = vlaneseq
    %v1879 = vshrl.u32 %v1878, 7
    %v1880 = vsub.s32 1, %v1879
    %v1881 = vrot.slane %v1861, %v1880
    %v1884 = vsel %vm114, %v1866, %v1877
    %v1885 = vsel %vm115, %v1870, %v1881
    %v1886 = vpack.c.bf16 %v1853, %v1853
    %1888 = vrot.lane.b32.xlu0 %v1886, 64
    %v1889 = vpop.permute.xlu0 %1888
    %v1891 = vsel %vm276, %v1889, 0
    %1893 = vmatprep.subr.bf16.mxu0 %v1254
    %1894 = vmatpush1.bf16.msra.mxu0 %v1253
    %1895 = vmatprep.subr.bf16.mxu0 %v1256
    %1896 = vmatpush1.bf16.msra.mxu0 %v1255
    %1897 = vmatprep.subr.bf16.mxu0 %v1258
    %1898 = vmatpush1.bf16.msra.mxu0 %v1257
    %1899 = vmatprep.subr.bf16.mxu0 %v1260
    %1900 = vmatpush1.bf16.msra.mxu0 %v1259
    %1901 = vmatprep.subr.bf16.mxu0 0
    %1902 = vmatpush1.bf16.msra.mxu0 0
    %1903 = vmatprep.subr.bf16.mxu0 0
    %1904 = vmatpush1.bf16.msra.mxu0 0
    %1905 = vmatprep.subr.bf16.mxu0 0
    %1906 = vmatpush1.bf16.msra.mxu0 0
    %1907 = vmatprep.subr.bf16.mxu0 0
    %1908 = vmatpush1.bf16.msra.mxu0 0
    %1909 = vmatprep.subr.bf16.mxu0 0
    %1910 = vmatpush1.bf16.msra.mxu0 0
    %1911 = vmatprep.subr.bf16.mxu0 0
    %1912 = vmatpush1.bf16.msra.mxu0 0
    %1913 = vmatprep.subr.bf16.mxu0 0
    %1914 = vmatpush1.bf16.msra.mxu0 0
    %1915 = vmatprep.subr.bf16.mxu0 0
    %1916 = vmatpush1.bf16.msra.mxu0 0
    %1917 = vmatprep.subr.bf16.mxu0 0
    %1918 = vmatpush1.bf16.msra.mxu0 0
    %1919 = vmatprep.subr.bf16.mxu0 0
    %1920 = vmatpush1.bf16.msra.mxu0 0
    %1921 = vmatprep.subr.bf16.mxu0 0
    %1922 = vmatpush1.bf16.msra.mxu0 0
    %1923 = vmatprep.subr.bf16.mxu0 0
    %1924 = vmatpush1.bf16.msra.mxu0 0
    %1925 = vmatprep.mubr.bf16.mxu0 0
    %1926 = vmatmul.mubr.bf16.gmra.mrb[0].mxu0 %v1891
    %v1927 = vpop.f32.mrb[0].mxu0
    %v1928 = vadd.f32 0.0, %v1927
    %v1929 = vpop.f32.mrb[0].mxu0
    %v1930 = vadd.f32 0.0, %v1929
    %v1931 = vpop.f32.mrb[0].mxu0
    %v1932 = vpop.f32.mrb[0].mxu0
    %1933 = vdwg.mxu0
    %v1934 = vadd.f32 %v1884, %v1928
    %v1935 = vadd.f32 %v1885, %v1930
    %v1936 = vxor.u32 %v1934, 2147483648
    %v1937 = vxor.u32 %v1935, 2147483648
    %v1938 = vmul.f32 %v1936, 1.442695
    %v1939 = vpow.pop %v1938
    %v1940 = vmul.f32 %v1937, 1.442695
    %v1941 = vpow.pop %v1940
    %v1942 = vadd.f32 %v1939, 1.0
    %v1943 = vadd.f32 %v1941, 1.0
    %v1944 = vrcp.pop %v1942
    %v1945 = vmul.f32 1.0, %v1944
    %v1946 = vrcp.pop %v1943
    %v1947 = vmul.f32 1.0, %v1946
    %v1948 = vtanh.pop %v1935
    %v1949 = vmul.f32 %v1945, %v1851
    %v1950 = vmul.f32 %v1945, %v1948
    %1952 = vrot.lane.b32.xlu0 %v1950, 64
    %v1953 = vpop.permute.xlu0 %1952
    %v1955 = vadd.f32 %v1949, %v1953
    %v1956 = vtanh.pop %v1955
    %v1957 = vmul.f32 %v1947, %v1956
    %1959 = vrot.lane.b32.xlu0 %v1957, 64
    %v1960 = vpop.permute.xlu0 %1959
    %1962 = vst.msk [vmem:[#allocation3 + $0x6] sm:$0x1] %vm349, %v1960
    %1963 = vst.msk [vmem:[#allocation3 + $0x1] sm:$0x1] %vm351, %v1960
    %v1964 = vld [vmem:[%s210] ss:$8 sm:$0x3]
    %v1965 = vld [vmem:[#allocation2] ss:$8 sm:$0x3]
    %v1967 = vlaneseq
    %v1968 = vshrl.u32 %v1967, 7
    %v1969 = vsub.s32 0, %v1968
    %v1970 = vrot.slane %v1964, %v1969
    %v1971 = vlaneseq
    %v1972 = vshrl.u32 %v1971, 7
    %v1973 = vsub.s32 1, %v1972
    %v1974 = vrot.slane %v1964, %v1973
    %v1978 = vlaneseq
    %v1979 = vshrl.u32 %v1978, 7
    %v1980 = vsub.s32 0, %v1979
    %v1981 = vrot.slane %v1965, %v1980
    %v1982 = vlaneseq
    %v1983 = vshrl.u32 %v1982, 7
    %v1984 = vsub.s32 1, %v1983
    %v1985 = vrot.slane %v1965, %v1984
    %v1988 = vsel %vm114, %v1970, %v1981
    %v1989 = vsel %vm115, %v1974, %v1985
    %v1990 = vpack.c.bf16 %v1957, %v1957
    %1992 = vrot.lane.b32.xlu0 %v1990, 64
    %v1993 = vpop.permute.xlu0 %1992
    %v1995 = vsel %vm276, %v1993, 0
    %1997 = vmatprep.subr.bf16.mxu0 %v1254
    %1998 = vmatpush1.bf16.msra.mxu0 %v1253
    %1999 = vmatprep.subr.bf16.mxu0 %v1256
    %2000 = vmatpush1.bf16.msra.mxu0 %v1255
    %2001 = vmatprep.subr.bf16.mxu0 %v1258
    %2002 = vmatpush1.bf16.msra.mxu0 %v1257
    %2003 = vmatprep.subr.bf16.mxu0 %v1260
    %2004 = vmatpush1.bf16.msra.mxu0 %v1259
    %2005 = vmatprep.subr.bf16.mxu0 0
    %2006 = vmatpush1.bf16.msra.mxu0 0
    %2007 = vmatprep.subr.bf16.mxu0 0
    %2008 = vmatpush1.bf16.msra.mxu0 0
    %2009 = vmatprep.subr.bf16.mxu0 0
    %2010 = vmatpush1.bf16.msra.mxu0 0
    %2011 = vmatprep.subr.bf16.mxu0 0
    %2012 = vmatpush1.bf16.msra.mxu0 0
    %2013 = vmatprep.subr.bf16.mxu0 0
    %2014 = vmatpush1.bf16.msra.mxu0 0
    %2015 = vmatprep.subr.bf16.mxu0 0
    %2016 = vmatpush1.bf16.msra.mxu0 0
    %2017 = vmatprep.subr.bf16.mxu0 0
    %2018 = vmatpush1.bf16.msra.mxu0 0
    %2019 = vmatprep.subr.bf16.mxu0 0
    %2020 = vmatpush1.bf16.msra.mxu0 0
    %2021 = vmatprep.subr.bf16.mxu0 0
    %2022 = vmatpush1.bf16.msra.mxu0 0
    %2023 = vmatprep.subr.bf16.mxu0 0
    %2024 = vmatpush1.bf16.msra.mxu0 0
    %2025 = vmatprep.subr.bf16.mxu0 0
    %2026 = vmatpush1.bf16.msra.mxu0 0
    %2027 = vmatprep.subr.bf16.mxu0 0
    %2028 = vmatpush1.bf16.msra.mxu0 0
    %2029 = vmatprep.mubr.bf16.mxu0 0
    %2030 = vmatmul.mubr.bf16.gmra.mrb[0].mxu0 %v1995
    %v2031 = vpop.f32.mrb[0].mxu0
    %v2032 = vadd.f32 0.0, %v2031
    %v2033 = vpop.f32.mrb[0].mxu0
    %v2034 = vadd.f32 0.0, %v2033
    %v2035 = vpop.f32.mrb[0].mxu0
    %v2036 = vpop.f32.mrb[0].mxu0
    %2037 = vdwg.mxu0
    %v2038 = vadd.f32 %v1988, %v2032
    %v2039 = vadd.f32 %v1989, %v2034
    %v2040 = vxor.u32 %v2038, 2147483648
    %v2041 = vxor.u32 %v2039, 2147483648
    %v2042 = vmul.f32 %v2040, 1.442695
    %v2043 = vpow.pop %v2042
    %v2044 = vmul.f32 %v2041, 1.442695
    %v2045 = vpow.pop %v2044
    %v2046 = vadd.f32 %v2043, 1.0
    %v2047 = vadd.f32 %v2045, 1.0
    %v2048 = vrcp.pop %v2046
    %v2049 = vmul.f32 1.0, %v2048
    %v2050 = vrcp.pop %v2047
    %v2051 = vmul.f32 1.0, %v2050
    %v2052 = vtanh.pop %v2039
    %v2053 = vmul.f32 %v2049, %v1955
    %v2054 = vmul.f32 %v2049, %v2052
    %2056 = vrot.lane.b32.xlu0 %v2054, 64
    %v2057 = vpop.permute.xlu0 %2056
    %v2059 = vadd.f32 %v2053, %v2057
    %v2060 = vtanh.pop %v2059
    %v2061 = vmul.f32 %v2051, %v2060
    %2063 = vrot.lane.b32.xlu0 %v2061, 64
    %v2064 = vpop.permute.xlu0 %2063
    %2066 = vst.msk [vmem:[#allocation3 + $0x7] sm:$0x1] %vm349, %v2064
    %2067 = vst.msk [vmem:[#allocation3] sm:$0x1] %vm351, %v2064
    %v2068 = vld [vmem:[#allocation3] sm:$0xff]
    %v2069 = vpack.c.bf16 %v2068, %v2068
    %v2070 = vld [vmem:[%s7] sm:$0xf]
    %v2071 = vld [vmem:[%s7 + $0x4] sm:$0xf]
    %v2072 = vld [vmem:[%s7 + $0x8] sm:$0xf]
    %v2073 = vld [vmem:[%s7 + $0xc] sm:$0xf]
    %v2074 = vld [vmem:[%s7 + $0x10] sm:$0xf]
    %v2075 = vld [vmem:[%s7 + $0x14] sm:$0xf]
    %v2076 = vld [vmem:[%s7 + $0x18] sm:$0xf]
    %v2077 = vld [vmem:[%s7 + $0x1c] sm:$0xf]
    %v2078 = vld [vmem:[%s8] sm:$0x1]
    %v2080 = vlaneseq
    %v2081 = vshrl.u32 %v2080, 7
    %v2082 = vsub.s32 0, %v2081
    %v2083 = vrot.slane %v2078, %v2082
    %v2093 = vunpack.c.l.b16 %v2070
    %v2094 = vunpack.c.l.b16 %v2071
    %v2095 = vunpack.c.l.b16 %v2072
    %v2096 = vunpack.c.l.b16 %v2073
    %v2097 = vunpack.c.l.b16 %v2074
    %v2098 = vunpack.c.l.b16 %v2075
    %v2099 = vunpack.c.l.b16 %v2076
    %v2100 = vunpack.c.l.b16 %v2077
    %v2101 = vpack.c.b16 %v2094, %v2093
    %v2102 = vpack.c.b16 %v2096, %v2095
    %v2103 = vpack.c.b16 %v2098, %v2097
    %v2104 = vpack.c.b16 %v2100, %v2099
    %v2110 = vsel %vm276, %v2069, 0
    %2112 = vmatprep.subr.bf16.mxu0 0
    %2113 = vmatpush1.bf16.msra.mxu0 %v2101
    %2114 = vmatprep.subr.bf16.mxu0 0
    %2115 = vmatpush1.bf16.msra.mxu0 %v2102
    %2116 = vmatprep.subr.bf16.mxu0 0
    %2117 = vmatpush1.bf16.msra.mxu0 %v2103
    %2118 = vmatprep.subr.bf16.mxu0 0
    %2119 = vmatpush1.bf16.msra.mxu0 %v2104
    %2120 = vmatprep.subr.bf16.mxu0 0
    %2121 = vmatpush1.bf16.msra.mxu0 0
    %2122 = vmatprep.subr.bf16.mxu0 0
    %2123 = vmatpush1.bf16.msra.mxu0 0
    %2124 = vmatprep.subr.bf16.mxu0 0
    %2125 = vmatpush1.bf16.msra.mxu0 0
    %2126 = vmatprep.subr.bf16.mxu0 0
    %2127 = vmatpush1.bf16.msra.mxu0 0
    %2128 = vmatprep.subr.bf16.mxu0 0
    %2129 = vmatpush1.bf16.msra.mxu0 0
    %2130 = vmatprep.subr.bf16.mxu0 0
    %2131 = vmatpush1.bf16.msra.mxu0 0
    %2132 = vmatprep.subr.bf16.mxu0 0
    %2133 = vmatpush1.bf16.msra.mxu0 0
    %2134 = vmatprep.subr.bf16.mxu0 0
    %2135 = vmatpush1.bf16.msra.mxu0 0
    %2136 = vmatprep.subr.bf16.mxu0 0
    %2137 = vmatpush1.bf16.msra.mxu0 0
    %2138 = vmatprep.subr.bf16.mxu0 0
    %2139 = vmatpush1.bf16.msra.mxu0 0
    %2140 = vmatprep.subr.bf16.mxu0 0
    %2141 = vmatpush1.bf16.msra.mxu0 0
    %2142 = vmatprep.subr.bf16.mxu0 0
    %2143 = vmatpush1.bf16.msra.mxu0 0
    %2144 = vmatprep.mubr.bf16.mxu0 0
    %2145 = vmatmul.mubr.bf16.gmra.mrb[0].mxu0 %v2110
    %v2146 = vpop.f32.mrb[0].mxu0
    %v2147 = vadd.f32 %v2083, %v2146
    %v2148 = vpop.f32.mrb[0].mxu0
    %v2149 = vpop.f32.mrb[0].mxu0
    %v2150 = vpop.f32.mrb[0].mxu0
    %2151 = vdwg.mxu0
    %2152 = vst.msk [vmem:[#allocation12] sm:$0xff] %vm154, %v2147
    // Predicated region
    $region54: #{tpu_custom_call.1} parent=1 // pred_check
      _
    $region55: #{tpu_custom_call.1} parent=1 // pred_check_branch
      %2154 = sbr.rel (0) target = $region57
    $region56: #{tpu_custom_call.1} parent=1 // pred_region
      %s2156 = ssub.s32 128, 128
      %2157 = vsyncadd [#allocation6], %s2156
      %s2159 = sshll.u32 [#allocation12], 4
      %s2160 = int_to_ptr.vmem [resolvable:$true] %s2159
      %2162 = dma.vmem_to_hbm [thread:$0]  %s2160, 128, %s9, [#allocation6]
    $region57: #{tpu_custom_call.1} parent=1 // pred_fallthru
      _
    // Predicated region
    $region58: #{tpu_custom_call.1} parent=1 // pred_check
      _
    $region59: #{tpu_custom_call.1} parent=1 // pred_check_branch
      %2164 = sbr.rel (0) target = $region61
    $region60: #{tpu_custom_call.1} parent=1 // pred_region
      %2165 = dma.done [#allocation6], 128
    $region61: #{tpu_custom_call.1} parent=1 // pred_fallthru
      _
    %2166 = vsyncpa [#allocation5], 1
    %2167 = vsyncpa [#allocation8], 1
    %2168 = vsyncpa [#allocation11], 1
    %2169 = vsyncpa [#allocation6], 1

</llo_original>
